<compile_context>
chip_gen: v6e
topology: v6e:2x2x1
jax: 0.10.0
libtpu: 0.0.40
codegen_flags: <defaults>
</compile_context>

<pallas_src>
import functools

import jax
import jax.numpy as jnp
from jax.experimental import pallas as pl
from jax.experimental.pallas import tpu as pltpu


_SB_BYTES = 4 << 20   # only single-buffer blocks big enough for the VMEM saving to matter


def _round_up(x, m):
    return (x + m - 1) // m * m


def _vmem_capacity_bytes():
    try:
        cap = int(getattr(pltpu.get_tpu_info(), "vmem_capacity_bytes", 0))
        if cap > 0:
            return cap
    except Exception:
        pass
    return 128 << 20


def _pick_row_tile(H, W, per_row_bytes, row_budget_bytes, target_rows=512):
    """Pick TH so the matmul M dim (TH*W) is ~512-1024 rows, bounded by the VMEM budget.
    TH always divides H (exact blocks).  Prime H: prefer TH=H when it fits (no TH=1 cliff)."""
    th_cap = max(1, row_budget_bytes // max(per_row_bytes, 1))
    divisors = [d for d in range(1, H + 1) if H % d == 0]
    feasible = [d for d in divisors if d <= th_cap] or [1]
    want = max(1, -(-target_rows // W))          # ceil(target_rows / W)
    for d in feasible:                           # ascending: smallest TH reaching the target
        if d >= want:
            return d
    return feasible[-1]                          # target unreachable under budget: largest fit


def _block_spec(shape, index_map, single_buffer=False):
    # Buffered(1) reclaims the useless second buffer for blocks whose index is constant
    # across the inner grid axis (matters most under v7x's 64 MiB VMEM).
    if single_buffer and hasattr(pl, "Buffered"):
        return pl.BlockSpec(shape, index_map, pipeline_mode=pl.Buffered(1))
    return pl.BlockSpec(shape, index_map)


# ----------------------------- shared conv body (per-tap MXU accumulation) -----------------------------

def _conv_taps(xs, w_ref, *, TH, KH, KW, W, Cin):
    # xs: (TH+KH-1, Wp, Cin) bf16 halo slab; w_ref: (KH*KW*Cin, Cout_p) bf16.
    # Returns (TH*W, Cout_p) f32.  Each tap is a sublane-offset slice (no lane concat);
    # the KH*KW skinny matmuls land on the otherwise-idle MXU with f32 accumulation.
    acc = None
    for kh in range(KH):
        for kw in range(KW):
            patch = xs[kh:kh + TH, kw:kw + W, :].reshape(TH * W, Cin)
            k = (kh * KW + kw) * Cin
            part = jnp.dot(patch, w_ref[k:k + Cin, :],
                           preferred_element_type=jnp.float32)
            acc = part if acc is None else acc + part
    return acc


# ----------------------------- pass 1: per-block channel statistics only -----------------------------

def _stats_kernel(x_ref, w_ref, stats_ref, *, TH, KH, KW, W, Cin):
    # x_ref:     (1, Hp, Wp, Cin) padded image of batch element n, resident across H-blocks.
    # stats_ref: (1, 1, 2, Cout_p) per-block per-channel [mean, centered M2] (tiny HBM write).
    r0 = pl.multiple_of(pl.program_id(1) * TH, TH)
    xs = x_ref[0, pl.ds(r0, TH + KH - 1), :, :]
    acc = _conv_taps(xs, w_ref, TH=TH, KH=KH, KW=KW, W=W, Cin=Cin)
    inv_cnt = 1.0 / float(TH * W)
    mean_b = jnp.sum(acc, axis=0, keepdims=True) * inv_cnt            # (1, Cout_p)
    m2_b = jnp.sum(jnp.square(acc - mean_b), axis=0, keepdims=True)   # (1, Cout_p)
    # TODO(synk): the two cross-sublane reductions could move to the idle MXU (ones-row
    # matmul / augmented RHS) if the bundle dump shows them on the critical path.
    stats_ref[...] = jnp.concatenate([mean_b, m2_b], axis=0).reshape(stats_ref.shape)


# ----------------------------- pass 2: recompute conv + apply folded BN -----------------------------

def _conv_bn_kernel(x_ref, w_ref, scale_ref, shift_ref, o_ref, *, TH, KH, KW, W, Cin, Cout, Cout_p):
    # o_ref: (1, TH, W, Cout) f32 final output block — unpadded, contiguous in HBM.
    r0 = pl.multiple_of(pl.program_id(1) * TH, TH)
    xs = x_ref[0, pl.ds(r0, TH + KH - 1), :, :]
    acc = _conv_taps(xs, w_ref, TH=TH, KH=KH, KW=KW, W=W, Cin=Cin)
    y = acc * scale_ref[...] + shift_ref[...]                         # lane-dense math in VMEM
    o_ref[...] = y.reshape(1, TH, W, Cout_p)[..., :Cout].astype(o_ref.dtype)


# ----------------------------- wrapper -----------------------------

def conv2d_bn(x_nchw, weight_oihw, gamma, beta, *, eps=1e-5, compute_dtype=jnp.bfloat16):
    """Conv2dBn forward.  x_nchw: (N,Cin,H,W); weight: (Cout,Cin,KH,KW); gamma/beta: (Cout,)."""
    N, Cin, H, W = x_nchw.shape
    Cout, Cin_w, KH, KW = weight_oihw.shape
    assert Cin_w == Cin, "groups != 1 not supported"
    assert KH == KW and KH % 2 == 1, "square odd kernels only (matches getPadding 'same')"
    # TODO(synk): stride/dilation != 1, groups != 1 and padding_mode != 'zeros' not implemented.

    pad = (KH - 1) // 2                          # getPadding(kernel_size, 'same')
    Hp, Wp = H + 2 * pad, W + 2 * pad
    Kc = KH * KW * Cin
    Cout_p = _round_up(Cout, 128)                # lane-dense channel axis, VMEM/MXU only
    dt = jnp.dtype(compute_dtype).itemsize

    # ---- tile selection driven by the per-generation VMEM budget
    cap = _vmem_capacity_bytes()
    budget = int(cap * 0.6)
    bytes_x = Hp * Wp * Cin * dt                 # resident padded image
    bytes_w = Kc * Cout_p * dt
    per_row = (W * Cout_p * 4                    # f32 accumulator row
               + 2 * W * Cout * 4                # double-buffered output block row
               + Wp * Cin * dt                   # halo slab row
               + 2 * W * Cin * dt)               # per-tap patch temporaries
    fixed = 2 * bytes_x + 2 * bytes_w + 4 * Cout_p * 4
    # TODO(synk): if 2*bytes_x alone blows the budget (huge images on v7x's 64 MiB), switch x
    # to halo'd (TH+KH-1)-row blocks instead of per-image residency.
    TH = _pick_row_tile(H, W, per_row, max(budget - fixed, per_row))
    nH = H // TH
    est = fixed + per_row * TH
    vmem_limit = int(min(max(2 * est, 32 << 20), cap * 3 // 4))

    # ---- glue: NCHW -> NHWC + zero pad; im2col-ordered weight matrix (kh,kw,cin) x Cout_p.
    # TODO(synk): fold these (and the final NCHW transpose) into the kernels by writing
    # W-on-lane / Cout-on-sublane blocks; each is one extra XLA pass over real-sized tensors.
    x = jnp.transpose(x_nchw, (0, 2, 3, 1)).astype(compute_dtype)
    x = jnp.pad(x, ((0, 0), (pad, pad), (pad, pad), (0, 0)))
    w = jnp.transpose(weight_oihw, (2, 3, 1, 0)).reshape(Kc, Cout)
    w = jnp.pad(w, ((0, 0), (0, Cout_p - Cout))).astype(compute_dtype)

    x_spec = _block_spec((1, Hp, Wp, Cin), lambda n, h: (n, 0, 0, 0),
                         single_buffer=(nH > 1 and bytes_x >= _SB_BYTES))
    w_spec = _block_spec((Kc, Cout_p), lambda n, h: (0, 0),
                         single_buffer=bytes_w >= _SB_BYTES)

    # ---- pass 1: statistics only (the conv output is never written to HBM)
    stats = pl.pallas_call(
        functools.partial(_stats_kernel, TH=TH, KH=KH, KW=KW, W=W, Cin=Cin),
        grid=(N, nH),
        in_specs=[x_spec, w_spec],
        out_specs=pl.BlockSpec((1, 1, 2, Cout_p), lambda n, h: (n, h, 0, 0)),
        out_shape=jax.ShapeDtypeStruct((N, nH, 2, Cout_p), jnp.float32),
        compiler_params=pltpu.CompilerParams(
            dimension_semantics=("parallel", "parallel"),
            vmem_limit_bytes=vmem_limit),
    )(x, w)

    # ---- fold batch stats + BN affine into per-channel scale/shift (Chan parallel combine)
    cnt = TH * W                                                   # equal count per block
    mean_blk = stats[:, :, 0, :]                                   # (N, nH, Cout_p)
    m2_blk = stats[:, :, 1, :]
    mean = jnp.mean(mean_blk, axis=(0, 1))                         # (Cout_p,)
    m2 = (jnp.sum(m2_blk, axis=(0, 1))
          + cnt * jnp.sum(jnp.square(mean_blk - mean), axis=(0, 1)))
    var = jnp.maximum(m2 / (N * H * W), 0.0)                       # biased batch variance
    gamma_p = jnp.pad(gamma.astype(jnp.float32), (0, Cout_p - Cout))
    beta_p = jnp.pad(beta.astype(jnp.float32), (0, Cout_p - Cout))
    scale = (gamma_p * jax.lax.rsqrt(var + eps)).reshape(1, Cout_p)
    shift = (beta_p - mean * scale[0]).reshape(1, Cout_p)
    # TODO(synk): PyTorch training-mode BN also updates running_mean/running_var (momentum,
    # unbiased variance) as a module side effect; not produced here.

    # ---- pass 2: recompute conv, apply folded BN, write the final unpadded output once
    out_nhwc = pl.pallas_call(
        functools.partial(_conv_bn_kernel, TH=TH, KH=KH, KW=KW, W=W,
                          Cin=Cin, Cout=Cout, Cout_p=Cout_p),
        grid=(N, nH),
        in_specs=[x_spec, w_spec,
                  pl.BlockSpec((1, Cout_p), lambda n, h: (0, 0)),
                  pl.BlockSpec((1, Cout_p), lambda n, h: (0, 0))],
        out_specs=pl.BlockSpec((1, TH, W, Cout), lambda n, h: (n, h, 0, 0)),
        out_shape=jax.ShapeDtypeStruct((N, H, W, Cout), jnp.float32),
        compiler_params=pltpu.CompilerParams(
            dimension_semantics=("parallel", "parallel"),
            vmem_limit_bytes=vmem_limit),
    )(x, w, scale, shift)

    # Glue: back to NCHW (no channel padding to drop anymore).
    return jnp.transpose(out_nhwc, (0, 3, 1, 2))


def _reference(x_nchw, weight_oihw, gamma, beta, eps=1e-5, compute_dtype=jnp.bfloat16):
    """Pure-JAX reference (lax conv + batch-stat BN) with matching bf16 input rounding."""
    xr = x_nchw.astype(compute_dtype).astype(jnp.float32)
    wr = weight_oihw.astype(compute_dtype).astype(jnp.float32)
    y = jax.lax.conv_general_dilated(
        xr, wr, window_strides=(1, 1), padding="SAME",
        dimension_numbers=("NCHW", "OIHW", "NCHW"))
    mean = jnp.mean(y, axis=(0, 2, 3), keepdims=True)
    var = jnp.mean((y - mean) ** 2, axis=(0, 2, 3), keepdims=True)
    g = gamma.reshape(1, -1, 1, 1)
    b = beta.reshape(1, -1, 1, 1)
    return (y - mean) * jax.lax.rsqrt(var + eps) * g + b


if __name__ == "__main__":
    key = jax.random.PRNGKey(0)
    k_x, k_w, k_g, k_b = jax.random.split(key, 4)

    N, Cin, H, W = 2, 4, 16, 16
    Cout, K = 8, 3

    x = jax.random.normal(k_x, (N, Cin, H, W), dtype=jnp.float32)
    # nn.Conv2d weight shape: (out_channels, in_channels, k, k); bias=False
    weight = jax.random.normal(k_w, (Cout, Cin, K, K), dtype=jnp.float32) * 0.1
    # nn.BatchNorm2d affine params: (out_channels,)
    gamma = 1.0 + 0.1 * jax.random.normal(k_g, (Cout,), dtype=jnp.float32)
    beta = 0.1 * jax.random.normal(k_b, (Cout,), dtype=jnp.float32)

    out = jax.jit(conv2d_bn)(x, weight, gamma, beta)
    out = jax.block_until_ready(out)

    ref = _reference(x, weight, gamma, beta)
    assert out.shape == (N, Cout, H, W), out.shape
    max_err = float(jnp.max(jnp.abs(out - ref)))
    assert jnp.allclose(out, ref, atol=3e-3, rtol=3e-3), max_err

    print("KERNEL_OK")
</pallas_src>

<mosaic_0001>
module attributes {stable_mosaic.version = 11 : i64} {
  func.func @_stats_kernel(%arg0: i32, %arg1: i32, %arg2: memref<1x18x18x4xbf16, #tpu.memory_space<vmem>>, %arg3: memref<36x128xbf16, #tpu.memory_space<vmem>>, %arg4: memref<1x1x2x128xf32, #tpu.memory_space<vmem>>) attributes {dimension_semantics = [#tpu.dimension_semantics<parallel>, #tpu.dimension_semantics<parallel>], iteration_bounds = array<i64: 2, 1>, scalar_prefetch = 0 : i64, scratch_operands = 0 : i64, tpu.core_type = #tpu.core_type<tc>, window_params = [{transform_indices = @transform_0, window_bounds = array<i64: 1, 18, 18, 4>}, {pipeline_mode = #tpu.pipeline_mode<synchronous>, transform_indices = @transform_1, window_bounds = array<i64: 36, 128>}, {transform_indices = @transform_2, window_bounds = array<i64: 1, 1, 2, 128>}]} {
    %c16_i32 = arith.constant 16 : i32
    %0 = arith.muli %arg1, %c16_i32 : i32
    %1 = tpu.assume_multiple %0, 16 : i32
    %c0 = arith.constant 0 : index
    %2 = arith.index_cast %1 : i32 to index
    %c0_0 = arith.constant 0 : index
    %c0_1 = arith.constant 0 : index
    %3 = vector.load %arg2[%c0, %2, %c0_0, %c0_1] : memref<1x18x18x4xbf16, #tpu.memory_space<vmem>>, vector<1x18x18x4xbf16>
    %4 = vector.shape_cast %3 : vector<1x18x18x4xbf16> to vector<18x18x4xbf16>
    %5 = vector.extract_strided_slice %4 {offsets = [0, 0, 0], sizes = [16, 16, 4], strides = [1, 1, 1]} : vector<18x18x4xbf16> to vector<16x16x4xbf16>
    %6 = vector.shape_cast %5 : vector<16x16x4xbf16> to vector<256x4xbf16>
    %c0_2 = arith.constant 0 : index
    %c0_3 = arith.constant 0 : index
    %7 = vector.load %arg3[%c0_2, %c0_3] : memref<36x128xbf16, #tpu.memory_space<vmem>>, vector<4x128xbf16>
    %cst = arith.constant dense<0.000000e+00> : vector<256x128xf32>
    %8 = tpu.matmul %6, %7, %cst {dimension_numbers = #tpu.dot_dimension_numbers<[1], [0], [0], [1], [0, 0, 1, 1], [], []>} : vector<256x4xbf16>, vector<4x128xbf16>, vector<256x128xf32> -> vector<256x128xf32>
    %9 = vector.extract_strided_slice %4 {offsets = [0, 1, 0], sizes = [16, 16, 4], strides = [1, 1, 1]} : vector<18x18x4xbf16> to vector<16x16x4xbf16>
    %10 = vector.shape_cast %9 : vector<16x16x4xbf16> to vector<256x4xbf16>
    %c4 = arith.constant 4 : index
    %c0_4 = arith.constant 0 : index
    %11 = vector.load %arg3[%c4, %c0_4] : memref<36x128xbf16, #tpu.memory_space<vmem>>, vector<4x128xbf16>
    %cst_5 = arith.constant dense<0.000000e+00> : vector<256x128xf32>
    %12 = tpu.matmul %10, %11, %cst_5 {dimension_numbers = #tpu.dot_dimension_numbers<[1], [0], [0], [1], [0, 0, 1, 1], [], []>} : vector<256x4xbf16>, vector<4x128xbf16>, vector<256x128xf32> -> vector<256x128xf32>
    %13 = arith.addf %8, %12 : vector<256x128xf32>
    %14 = vector.extract_strided_slice %4 {offsets = [0, 2, 0], sizes = [16, 16, 4], strides = [1, 1, 1]} : vector<18x18x4xbf16> to vector<16x16x4xbf16>
    %15 = vector.shape_cast %14 : vector<16x16x4xbf16> to vector<256x4xbf16>
    %c8 = arith.constant 8 : index
    %c0_6 = arith.constant 0 : index
    %16 = vector.load %arg3[%c8, %c0_6] : memref<36x128xbf16, #tpu.memory_space<vmem>>, vector<4x128xbf16>
    %cst_7 = arith.constant dense<0.000000e+00> : vector<256x128xf32>
    %17 = tpu.matmul %15, %16, %cst_7 {dimension_numbers = #tpu.dot_dimension_numbers<[1], [0], [0], [1], [0, 0, 1, 1], [], []>} : vector<256x4xbf16>, vector<4x128xbf16>, vector<256x128xf32> -> vector<256x128xf32>
    %18 = arith.addf %13, %17 : vector<256x128xf32>
    %19 = vector.extract_strided_slice %4 {offsets = [1, 0, 0], sizes = [16, 16, 4], strides = [1, 1, 1]} : vector<18x18x4xbf16> to vector<16x16x4xbf16>
    %20 = vector.shape_cast %19 : vector<16x16x4xbf16> to vector<256x4xbf16>
    %c12 = arith.constant 12 : index
    %c0_8 = arith.constant 0 : index
    %21 = vector.load %arg3[%c12, %c0_8] : memref<36x128xbf16, #tpu.memory_space<vmem>>, vector<4x128xbf16>
    %cst_9 = arith.constant dense<0.000000e+00> : vector<256x128xf32>
    %22 = tpu.matmul %20, %21, %cst_9 {dimension_numbers = #tpu.dot_dimension_numbers<[1], [0], [0], [1], [0, 0, 1, 1], [], []>} : vector<256x4xbf16>, vector<4x128xbf16>, vector<256x128xf32> -> vector<256x128xf32>
    %23 = arith.addf %18, %22 : vector<256x128xf32>
    %24 = vector.extract_strided_slice %4 {offsets = [1, 1, 0], sizes = [16, 16, 4], strides = [1, 1, 1]} : vector<18x18x4xbf16> to vector<16x16x4xbf16>
    %25 = vector.shape_cast %24 : vector<16x16x4xbf16> to vector<256x4xbf16>
    %c16 = arith.constant 16 : index
    %c0_10 = arith.constant 0 : index
    %26 = vector.load %arg3[%c16, %c0_10] : memref<36x128xbf16, #tpu.memory_space<vmem>>, vector<4x128xbf16>
    %cst_11 = arith.constant dense<0.000000e+00> : vector<256x128xf32>
    %27 = tpu.matmul %25, %26, %cst_11 {dimension_numbers = #tpu.dot_dimension_numbers<[1], [0], [0], [1], [0, 0, 1, 1], [], []>} : vector<256x4xbf16>, vector<4x128xbf16>, vector<256x128xf32> -> vector<256x128xf32>
    %28 = arith.addf %23, %27 : vector<256x128xf32>
    %29 = vector.extract_strided_slice %4 {offsets = [1, 2, 0], sizes = [16, 16, 4], strides = [1, 1, 1]} : vector<18x18x4xbf16> to vector<16x16x4xbf16>
    %30 = vector.shape_cast %29 : vector<16x16x4xbf16> to vector<256x4xbf16>
    %c20 = arith.constant 20 : index
    %c0_12 = arith.constant 0 : index
    %31 = vector.load %arg3[%c20, %c0_12] : memref<36x128xbf16, #tpu.memory_space<vmem>>, vector<4x128xbf16>
    %cst_13 = arith.constant dense<0.000000e+00> : vector<256x128xf32>
    %32 = tpu.matmul %30, %31, %cst_13 {dimension_numbers = #tpu.dot_dimension_numbers<[1], [0], [0], [1], [0, 0, 1, 1], [], []>} : vector<256x4xbf16>, vector<4x128xbf16>, vector<256x128xf32> -> vector<256x128xf32>
    %33 = arith.addf %28, %32 : vector<256x128xf32>
    %34 = vector.extract_strided_slice %4 {offsets = [2, 0, 0], sizes = [16, 16, 4], strides = [1, 1, 1]} : vector<18x18x4xbf16> to vector<16x16x4xbf16>
    %35 = vector.shape_cast %34 : vector<16x16x4xbf16> to vector<256x4xbf16>
    %c24 = arith.constant 24 : index
    %c0_14 = arith.constant 0 : index
    %36 = vector.load %arg3[%c24, %c0_14] : memref<36x128xbf16, #tpu.memory_space<vmem>>, vector<4x128xbf16>
    %cst_15 = arith.constant dense<0.000000e+00> : vector<256x128xf32>
    %37 = tpu.matmul %35, %36, %cst_15 {dimension_numbers = #tpu.dot_dimension_numbers<[1], [0], [0], [1], [0, 0, 1, 1], [], []>} : vector<256x4xbf16>, vector<4x128xbf16>, vector<256x128xf32> -> vector<256x128xf32>
    %38 = arith.addf %33, %37 : vector<256x128xf32>
    %39 = vector.extract_strided_slice %4 {offsets = [2, 1, 0], sizes = [16, 16, 4], strides = [1, 1, 1]} : vector<18x18x4xbf16> to vector<16x16x4xbf16>
    %40 = vector.shape_cast %39 : vector<16x16x4xbf16> to vector<256x4xbf16>
    %c28 = arith.constant 28 : index
    %c0_16 = arith.constant 0 : index
    %41 = vector.load %arg3[%c28, %c0_16] : memref<36x128xbf16, #tpu.memory_space<vmem>>, vector<4x128xbf16>
    %cst_17 = arith.constant dense<0.000000e+00> : vector<256x128xf32>
    %42 = tpu.matmul %40, %41, %cst_17 {dimension_numbers = #tpu.dot_dimension_numbers<[1], [0], [0], [1], [0, 0, 1, 1], [], []>} : vector<256x4xbf16>, vector<4x128xbf16>, vector<256x128xf32> -> vector<256x128xf32>
    %43 = arith.addf %38, %42 : vector<256x128xf32>
    %44 = vector.extract_strided_slice %4 {offsets = [2, 2, 0], sizes = [16, 16, 4], strides = [1, 1, 1]} : vector<18x18x4xbf16> to vector<16x16x4xbf16>
    %45 = vector.shape_cast %44 : vector<16x16x4xbf16> to vector<256x4xbf16>
    %c32 = arith.constant 32 : index
    %c0_18 = arith.constant 0 : index
    %46 = vector.load %arg3[%c32, %c0_18] : memref<36x128xbf16, #tpu.memory_space<vmem>>, vector<4x128xbf16>
    %cst_19 = arith.constant dense<0.000000e+00> : vector<256x128xf32>
    %47 = tpu.matmul %45, %46, %cst_19 {dimension_numbers = #tpu.dot_dimension_numbers<[1], [0], [0], [1], [0, 0, 1, 1], [], []>} : vector<256x4xbf16>, vector<4x128xbf16>, vector<256x128xf32> -> vector<256x128xf32>
    %48 = arith.addf %43, %47 : vector<256x128xf32>
    %cst_20 = arith.constant dense<0.000000e+00> : vector<128xf32>
    %49 = vector.multi_reduction <add>, %48, %cst_20 [0] : vector<256x128xf32> to vector<128xf32>
    %50 = vector.shape_cast %49 : vector<128xf32> to vector<1x128xf32>
    %cst_21 = arith.constant 3.906250e-03 : f32
    %51 = vector.broadcast %cst_21 : f32 to vector<1x128xf32>
    %52 = arith.mulf %50, %51 : vector<1x128xf32>
    %53 = vector.broadcast %52 : vector<1x128xf32> to vector<256x128xf32>
    %54 = arith.subf %48, %53 : vector<256x128xf32>
    %55 = arith.mulf %54, %54 : vector<256x128xf32>
    %cst_22 = arith.constant dense<0.000000e+00> : vector<128xf32>
    %56 = vector.multi_reduction <add>, %55, %cst_22 [0] : vector<256x128xf32> to vector<128xf32>
    %57 = vector.shape_cast %56 : vector<128xf32> to vector<1x128xf32>
    %58 = tpu.concatenate %52, %57 in 0 : vector<1x128xf32>, vector<1x128xf32> -> vector<2x128xf32>
    %59 = vector.shape_cast %58 : vector<2x128xf32> to vector<1x1x2x128xf32>
    %c0_23 = arith.constant 0 : index
    %c0_24 = arith.constant 0 : index
    %c0_25 = arith.constant 0 : index
    %c0_26 = arith.constant 0 : index
    %60 = vector.load %arg4[%c0_23, %c0_24, %c0_25, %c0_26] : memref<1x1x2x128xf32, #tpu.memory_space<vmem>>, vector<1x1x2x128xf32>
    tpu.vector_store %arg4[%c0_23, %c0_24, %c0_25, %c0_26], %59 {strides = array<i32>} : memref<1x1x2x128xf32, #tpu.memory_space<vmem>>, vector<1x1x2x128xf32>,
    return
  }
  func.func @transform_0(%arg0: i32, %arg1: i32) -> (i32, i32, i32, i32) {
    %c0_i32 = arith.constant 0 : i32
    %c0_i32_0 = arith.constant 0 : i32
    %c0_i32_1 = arith.constant 0 : i32
    %c0_i32_2 = arith.constant 0 : i32
    return %arg0, %c0_i32, %c0_i32_0, %c0_i32_1 : i32, i32, i32, i32
  }
  func.func @transform_1(%arg0: i32, %arg1: i32) -> (i32, i32) {
    %c0_i32 = arith.constant 0 : i32
    %c0_i32_0 = arith.constant 0 : i32
    %c0_i32_1 = arith.constant 0 : i32
    return %c0_i32, %c0_i32_0 : i32, i32
  }
  func.func @transform_2(%arg0: i32, %arg1: i32) -> (i32, i32, i32, i32) {
    %c0_i32 = arith.constant 0 : i32
    %c0_i32_0 = arith.constant 0 : i32
    %c0_i32_1 = arith.constant 0 : i32
    return %arg0, %arg1, %c0_i32, %c0_i32_0 : i32, i32, i32, i32
  }
}

module attributes {stable_mosaic.version = 11 : i64} {
  func.func @_conv_bn_kernel(%arg0: i32, %arg1: i32, %arg2: memref<1x18x18x4xbf16, #tpu.memory_space<vmem>>, %arg3: memref<36x128xbf16, #tpu.memory_space<vmem>>, %arg4: memref<1x128xf32, #tpu.memory_space<vmem>>, %arg5: memref<1x128xf32, #tpu.memory_space<vmem>>, %arg6: memref<1x16x16x8xf32, #tpu.memory_space<vmem>>) attributes {dimension_semantics = [#tpu.dimension_semantics<parallel>, #tpu.dimension_semantics<parallel>], iteration_bounds = array<i64: 2, 1>, scalar_prefetch = 0 : i64, scratch_operands = 0 : i64, tpu.core_type = #tpu.core_type<tc>, window_params = [{transform_indices = @transform_0, window_bounds = array<i64: 1, 18, 18, 4>}, {pipeline_mode = #tpu.pipeline_mode<synchronous>, transform_indices = @transform_1, window_bounds = array<i64: 36, 128>}, {pipeline_mode = #tpu.pipeline_mode<synchronous>, transform_indices = @transform_2, window_bounds = array<i64: 1, 128>}, {pipeline_mode = #tpu.pipeline_mode<synchronous>, transform_indices = @transform_3, window_bounds = array<i64: 1, 128>}, {transform_indices = @transform_4, window_bounds = array<i64: 1, 16, 16, 8>}]} {
    %c16_i32 = arith.constant 16 : i32
    %0 = arith.muli %arg1, %c16_i32 : i32
    %1 = tpu.assume_multiple %0, 16 : i32
    %c0 = arith.constant 0 : index
    %2 = arith.index_cast %1 : i32 to index
    %c0_0 = arith.constant 0 : index
    %c0_1 = arith.constant 0 : index
    %3 = vector.load %arg2[%c0, %2, %c0_0, %c0_1] : memref<1x18x18x4xbf16, #tpu.memory_space<vmem>>, vector<1x18x18x4xbf16>
    %4 = vector.shape_cast %3 : vector<1x18x18x4xbf16> to vector<18x18x4xbf16>
    %5 = vector.extract_strided_slice %4 {offsets = [0, 0, 0], sizes = [16, 16, 4], strides = [1, 1, 1]} : vector<18x18x4xbf16> to vector<16x16x4xbf16>
    %6 = vector.shape_cast %5 : vector<16x16x4xbf16> to vector<256x4xbf16>
    %c0_2 = arith.constant 0 : index
    %c0_3 = arith.constant 0 : index
    %7 = vector.load %arg3[%c0_2, %c0_3] : memref<36x128xbf16, #tpu.memory_space<vmem>>, vector<4x128xbf16>
    %cst = arith.constant dense<0.000000e+00> : vector<256x128xf32>
    %8 = tpu.matmul %6, %7, %cst {dimension_numbers = #tpu.dot_dimension_numbers<[1], [0], [0], [1], [0, 0, 1, 1], [], []>} : vector<256x4xbf16>, vector<4x128xbf16>, vector<256x128xf32> -> vector<256x128xf32>
    %9 = vector.extract_strided_slice %4 {offsets = [0, 1, 0], sizes = [16, 16, 4], strides = [1, 1, 1]} : vector<18x18x4xbf16> to vector<16x16x4xbf16>
    %10 = vector.shape_cast %9 : vector<16x16x4xbf16> to vector<256x4xbf16>
    %c4 = arith.constant 4 : index
    %c0_4 = arith.constant 0 : index
    %11 = vector.load %arg3[%c4, %c0_4] : memref<36x128xbf16, #tpu.memory_space<vmem>>, vector<4x128xbf16>
    %cst_5 = arith.constant dense<0.000000e+00> : vector<256x128xf32>
    %12 = tpu.matmul %10, %11, %cst_5 {dimension_numbers = #tpu.dot_dimension_numbers<[1], [0], [0], [1], [0, 0, 1, 1], [], []>} : vector<256x4xbf16>, vector<4x128xbf16>, vector<256x128xf32> -> vector<256x128xf32>
    %13 = arith.addf %8, %12 : vector<256x128xf32>
    %14 = vector.extract_strided_slice %4 {offsets = [0, 2, 0], sizes = [16, 16, 4], strides = [1, 1, 1]} : vector<18x18x4xbf16> to vector<16x16x4xbf16>
    %15 = vector.shape_cast %14 : vector<16x16x4xbf16> to vector<256x4xbf16>
    %c8 = arith.constant 8 : index
    %c0_6 = arith.constant 0 : index
    %16 = vector.load %arg3[%c8, %c0_6] : memref<36x128xbf16, #tpu.memory_space<vmem>>, vector<4x128xbf16>
    %cst_7 = arith.constant dense<0.000000e+00> : vector<256x128xf32>
    %17 = tpu.matmul %15, %16, %cst_7 {dimension_numbers = #tpu.dot_dimension_numbers<[1], [0], [0], [1], [0, 0, 1, 1], [], []>} : vector<256x4xbf16>, vector<4x128xbf16>, vector<256x128xf32> -> vector<256x128xf32>
    %18 = arith.addf %13, %17 : vector<256x128xf32>
    %19 = vector.extract_strided_slice %4 {offsets = [1, 0, 0], sizes = [16, 16, 4], strides = [1, 1, 1]} : vector<18x18x4xbf16> to vector<16x16x4xbf16>
    %20 = vector.shape_cast %19 : vector<16x16x4xbf16> to vector<256x4xbf16>
    %c12 = arith.constant 12 : index
    %c0_8 = arith.constant 0 : index
    %21 = vector.load %arg3[%c12, %c0_8] : memref<36x128xbf16, #tpu.memory_space<vmem>>, vector<4x128xbf16>
    %cst_9 = arith.constant dense<0.000000e+00> : vector<256x128xf32>
    %22 = tpu.matmul %20, %21, %cst_9 {dimension_numbers = #tpu.dot_dimension_numbers<[1], [0], [0], [1], [0, 0, 1, 1], [], []>} : vector<256x4xbf16>, vector<4x128xbf16>, vector<256x128xf32> -> vector<256x128xf32>
    %23 = arith.addf %18, %22 : vector<256x128xf32>
    %24 = vector.extract_strided_slice %4 {offsets = [1, 1, 0], sizes = [16, 16, 4], strides = [1, 1, 1]} : vector<18x18x4xbf16> to vector<16x16x4xbf16>
    %25 = vector.shape_cast %24 : vector<16x16x4xbf16> to vector<256x4xbf16>
    %c16 = arith.constant 16 : index
    %c0_10 = arith.constant 0 : index
    %26 = vector.load %arg3[%c16, %c0_10] : memref<36x128xbf16, #tpu.memory_space<vmem>>, vector<4x128xbf16>
    %cst_11 = arith.constant dense<0.000000e+00> : vector<256x128xf32>
    %27 = tpu.matmul %25, %26, %cst_11 {dimension_numbers = #tpu.dot_dimension_numbers<[1], [0], [0], [1], [0, 0, 1, 1], [], []>} : vector<256x4xbf16>, vector<4x128xbf16>, vector<256x128xf32> -> vector<256x128xf32>
    %28 = arith.addf %23, %27 : vector<256x128xf32>
    %29 = vector.extract_strided_slice %4 {offsets = [1, 2, 0], sizes = [16, 16, 4], strides = [1, 1, 1]} : vector<18x18x4xbf16> to vector<16x16x4xbf16>
    %30 = vector.shape_cast %29 : vector<16x16x4xbf16> to vector<256x4xbf16>
    %c20 = arith.constant 20 : index
    %c0_12 = arith.constant 0 : index
    %31 = vector.load %arg3[%c20, %c0_12] : memref<36x128xbf16, #tpu.memory_space<vmem>>, vector<4x128xbf16>
    %cst_13 = arith.constant dense<0.000000e+00> : vector<256x128xf32>
    %32 = tpu.matmul %30, %31, %cst_13 {dimension_numbers = #tpu.dot_dimension_numbers<[1], [0], [0], [1], [0, 0, 1, 1], [], []>} : vector<256x4xbf16>, vector<4x128xbf16>, vector<256x128xf32> -> vector<256x128xf32>
    %33 = arith.addf %28, %32 : vector<256x128xf32>
    %34 = vector.extract_strided_slice %4 {offsets = [2, 0, 0], sizes = [16, 16, 4], strides = [1, 1, 1]} : vector<18x18x4xbf16> to vector<16x16x4xbf16>
    %35 = vector.shape_cast %34 : vector<16x16x4xbf16> to vector<256x4xbf16>
    %c24 = arith.constant 24 : index
    %c0_14 = arith.constant 0 : index
    %36 = vector.load %arg3[%c24, %c0_14] : memref<36x128xbf16, #tpu.memory_space<vmem>>, vector<4x128xbf16>
    %cst_15 = arith.constant dense<0.000000e+00> : vector<256x128xf32>
    %37 = tpu.matmul %35, %36, %cst_15 {dimension_numbers = #tpu.dot_dimension_numbers<[1], [0], [0], [1], [0, 0, 1, 1], [], []>} : vector<256x4xbf16>, vector<4x128xbf16>, vector<256x128xf32> -> vector<256x128xf32>
    %38 = arith.addf %33, %37 : vector<256x128xf32>
    %39 = vector.extract_strided_slice %4 {offsets = [2, 1, 0], sizes = [16, 16, 4], strides = [1, 1, 1]} : vector<18x18x4xbf16> to vector<16x16x4xbf16>
    %40 = vector.shape_cast %39 : vector<16x16x4xbf16> to vector<256x4xbf16>
    %c28 = arith.constant 28 : index
    %c0_16 = arith.constant 0 : index
    %41 = vector.load %arg3[%c28, %c0_16] : memref<36x128xbf16, #tpu.memory_space<vmem>>, vector<4x128xbf16>
    %cst_17 = arith.constant dense<0.000000e+00> : vector<256x128xf32>
    %42 = tpu.matmul %40, %41, %cst_17 {dimension_numbers = #tpu.dot_dimension_numbers<[1], [0], [0], [1], [0, 0, 1, 1], [], []>} : vector<256x4xbf16>, vector<4x128xbf16>, vector<256x128xf32> -> vector<256x128xf32>
    %43 = arith.addf %38, %42 : vector<256x128xf32>
    %44 = vector.extract_strided_slice %4 {offsets = [2, 2, 0], sizes = [16, 16, 4], strides = [1, 1, 1]} : vector<18x18x4xbf16> to vector<16x16x4xbf16>
    %45 = vector.shape_cast %44 : vector<16x16x4xbf16> to vector<256x4xbf16>
    %c32 = arith.constant 32 : index
    %c0_18 = arith.constant 0 : index
    %46 = vector.load %arg3[%c32, %c0_18] : memref<36x128xbf16, #tpu.memory_space<vmem>>, vector<4x128xbf16>
    %cst_19 = arith.constant dense<0.000000e+00> : vector<256x128xf32>
    %47 = tpu.matmul %45, %46, %cst_19 {dimension_numbers = #tpu.dot_dimension_numbers<[1], [0], [0], [1], [0, 0, 1, 1], [], []>} : vector<256x4xbf16>, vector<4x128xbf16>, vector<256x128xf32> -> vector<256x128xf32>
    %48 = arith.addf %43, %47 : vector<256x128xf32>
    %c0_20 = arith.constant 0 : index
    %c0_21 = arith.constant 0 : index
    %49 = vector.load %arg4[%c0_20, %c0_21] : memref<1x128xf32, #tpu.memory_space<vmem>>, vector<1x128xf32>
    %50 = vector.broadcast %49 : vector<1x128xf32> to vector<256x128xf32>
    %51 = arith.mulf %48, %50 : vector<256x128xf32>
    %c0_22 = arith.constant 0 : index
    %c0_23 = arith.constant 0 : index
    %52 = vector.load %arg5[%c0_22, %c0_23] : memref<1x128xf32, #tpu.memory_space<vmem>>, vector<1x128xf32>
    %53 = vector.broadcast %52 : vector<1x128xf32> to vector<256x128xf32>
    %54 = arith.addf %51, %53 : vector<256x128xf32>
    %55 = vector.shape_cast %54 : vector<256x128xf32> to vector<1x16x16x128xf32>
    %56 = vector.extract_strided_slice %55 {offsets = [0, 0, 0, 0], sizes = [1, 16, 16, 8], strides = [1, 1, 1, 1]} : vector<1x16x16x128xf32> to vector<1x16x16x8xf32>
    %c0_24 = arith.constant 0 : index
    %c0_25 = arith.constant 0 : index
    %c0_26 = arith.constant 0 : index
    %c0_27 = arith.constant 0 : index
    %57 = vector.load %arg6[%c0_24, %c0_25, %c0_26, %c0_27] : memref<1x16x16x8xf32, #tpu.memory_space<vmem>>, vector<1x16x16x8xf32>
    tpu.vector_store %arg6[%c0_24, %c0_25, %c0_26, %c0_27], %56 {strides = array<i32>} : memref<1x16x16x8xf32, #tpu.memory_space<vmem>>, vector<1x16x16x8xf32>,
    return
  }
  func.func @transform_0(%arg0: i32, %arg1: i32) -> (i32, i32, i32, i32) {
    %c0_i32 = arith.constant 0 : i32
    %c0_i32_0 = arith.constant 0 : i32
    %c0_i32_1 = arith.constant 0 : i32
    %c0_i32_2 = arith.constant 0 : i32
    return %arg0, %c0_i32, %c0_i32_0, %c0_i32_1 : i32, i32, i32, i32
  }
  func.func @transform_1(%arg0: i32, %arg1: i32) -> (i32, i32) {
    %c0_i32 = arith.constant 0 : i32
    %c0_i32_0 = arith.constant 0 : i32
    %c0_i32_1 = arith.constant 0 : i32
    return %c0_i32, %c0_i32_0 : i32, i32
  }
  func.func @transform_2(%arg0: i32, %arg1: i32) -> (i32, i32) {
    %c0_i32 = arith.constant 0 : i32
    %c0_i32_0 = arith.constant 0 : i32
    %c0_i32_1 = arith.constant 0 : i32
    return %c0_i32, %c0_i32_0 : i32, i32
  }
  func.func @transform_3(%arg0: i32, %arg1: i32) -> (i32, i32) {
    %c0_i32 = arith.constant 0 : i32
    %c0_i32_0 = arith.constant 0 : i32
    %c0_i32_1 = arith.constant 0 : i32
    return %c0_i32, %c0_i32_0 : i32, i32
  }
  func.func @transform_4(%arg0: i32, %arg1: i32) -> (i32, i32, i32, i32) {
    %c0_i32 = arith.constant 0 : i32
    %c0_i32_0 = arith.constant 0 : i32
    %c0_i32_1 = arith.constant 0 : i32
    return %arg0, %arg1, %c0_i32, %c0_i32_0 : i32, i32, i32, i32
  }
}

</mosaic_0001>

<llo_original>
// kernel: conv2d_bn.2
$region0: #{conv2d_bn.2}
  #allocation0 [shape = 'u32[]', space=smem, size = 0x4, offset = 0x4, fixed_abs, tag = 'smem constant byte address 0x4 - core index']
  #allocation1 [shape = 'u32[144,128]{1,0:T(1,128)}', space=vmem, size = 0x12000, scoped, tag = 'internal scratch']
  %s0 = inlined_call_operand.vmem [shape: bf16[2,18,18,4], index: 0, kind: input, shape index: {}]
  %s1 = inlined_call_operand.vmem [shape: bf16[36,128], index: 1, kind: input, shape index: {}]
  %s2 = inlined_call_operand.vmem [shape: f32[2,1,2,128], index: 2, kind: output, shape index: {}]
  %s3 = sld [smem:[#allocation0]]
  $region41: #{conv2d_bn.2} parent=0
    _
  %s5 = ssub.s32 1, %s3
  %s6 = scalar_select 0, %s5, %s3
  loop: start=0, step=1, limit=4
  $region2: #{conv2d_bn.2} parent=0 // loop_pre_header
    _
  $region3: #{conv2d_bn.2} parent=0 // loop_header
    %s8 = sphi 0, %s12
    %p9 = scmp.ge.s32.totalorder %s8, 4
    %s15 = sphi 0, %s27
    %s16 = sphi 0, %s23
    %s17 = sphi 0, %s15
    %s18 = sphi 0, %s16
    %s19 = sphi 0, %s17
    %s20 = sphi 0, %s18
    %s30 = sphi 0, %s32
    %s33 = sphi 0, %s30
    %s34 = sphi 0, %s33
    %s50 = sphi 0, %s34
    %s54 = sphi 0, %s54
    %s56 = sphi 0, %s54
    %s57 = sphi 0, %s56
    %s71 = sphi 0, %s57
    %s79 = sphi 0, %s81
    %s82 = sphi 0, %s79
    %s83 = sphi 0, %s82
    %s99 = sphi 0, %s83
  $region4: #{conv2d_bn.2} parent=0 // loop_header_branch
    %11 = sbr.rel (%p9) target = $region8
  $region5: #{conv2d_bn.2} parent=0 // loop_body
    %s13 = ssub.s32 %s8, 1
    %s14 = ssub.s32 %s8, 2
    %s21 = sadd.s32 1, %s16
    %p22 = scmp.ge.s32.totalorder %s21, 1
    %s23 = scalar_select %p22, 0, %s21
    %s24 = sadd.s32 1, %s15
    %s25 = scalar_select %p22, %s24, %s15
    %p26 = scmp.ge.s32.totalorder %s25, 2
    %s27 = scalar_select %p26, 0, %s25
    %s28 = ssub.s32 %s15, %s27
    %p29 = scmp.eq.s32.totalorder %s28, 0
    %s31 = sadd.s32 %s30, 1
    %s32 = scalar_select %p29, %s30, %s31
    %p35 = pneg %p29
    %p36 = scmp.eq.s32.totalorder %s8, 1
    %p37 = por %p35, %p36
    %p38 = scmp.ne.s32.totalorder %s30, %s33
    %p39 = scmp.eq.s32.totalorder %s8, 0
    %p40 = por %p38, %p39
    %p41 = scmp.ne.s32.totalorder %s30, %s33
    %p42 = scmp.eq.s32.totalorder %s13, 1
    %p43 = por %p41, %p42
    %p44 = scmp.ne.s32.totalorder %s33, %s34
    %p45 = scmp.eq.s32.totalorder %s13, 0
    %p46 = por %p44, %p45
    %p47 = scmp.ne.s32.totalorder %s33, %s34
    %p48 = scmp.eq.s32.totalorder %s14, 1
    %p49 = por %p47, %p48
    %p51 = scmp.ne.s32.totalorder %s34, %s50
    %p52 = scmp.eq.s32.totalorder %s14, 0
    %p53 = por %p51, %p52
    %s55 = sadd.s32 %s54, 1
    %p58 = scmp.eq.s32.totalorder %s8, 1
    %p59 = scmp.ne.s32.totalorder %s54, %s56
    %p60 = scmp.eq.s32.totalorder %s8, 0
    %p61 = por %p59, %p60
    %p62 = scmp.ne.s32.totalorder %s54, %s56
    %p63 = scmp.eq.s32.totalorder %s13, 1
    %p64 = por %p62, %p63
    %p65 = scmp.ne.s32.totalorder %s56, %s57
    %p66 = scmp.eq.s32.totalorder %s13, 0
    %p67 = por %p65, %p66
    %p68 = scmp.ne.s32.totalorder %s56, %s57
    %p69 = scmp.eq.s32.totalorder %s14, 1
    %p70 = por %p68, %p69
    %p72 = scmp.ne.s32.totalorder %s57, %s71
    %p73 = scmp.eq.s32.totalorder %s14, 0
    %p74 = por %p72, %p73
    %s75 = ssub.s32 %s15, %s27
    %s76 = ssub.s32 %s16, %s23
    %s77 = sor.u32 %s75, %s76
    %p78 = scmp.eq.s32.totalorder %s77, 0
    %s80 = sadd.s32 %s79, 1
    %s81 = scalar_select %p78, %s79, %s80
    %p84 = pneg %p78
    %p85 = scmp.eq.s32.totalorder %s8, 1
    %p86 = por %p84, %p85
    %p87 = scmp.ne.s32.totalorder %s79, %s82
    %p88 = scmp.eq.s32.totalorder %s8, 0
    %p89 = por %p87, %p88
    %p90 = scmp.ne.s32.totalorder %s79, %s82
    %p91 = scmp.eq.s32.totalorder %s13, 1
    %p92 = por %p90, %p91
    %p93 = scmp.ne.s32.totalorder %s82, %s83
    %p94 = scmp.eq.s32.totalorder %s13, 0
    %p95 = por %p93, %p94
    %p96 = scmp.ne.s32.totalorder %s82, %s83
    %p97 = scmp.eq.s32.totalorder %s14, 1
    %p98 = por %p96, %p97
    %p100 = scmp.ne.s32.totalorder %s83, %s99
    %p101 = scmp.eq.s32.totalorder %s14, 0
    %p102 = por %p100, %p101
    %p103 = scmp.le.s32.totalorder 1, %s8
    %p104 = scmp.lt.s32.totalorder %s8, 3
    %p105 = pnand %p103, %p104
    %p106 = pneg %p105
    // Predicated region
    $region9: #{conv2d_bn.2} parent=5 // pred_check
      _
    $region10: #{conv2d_bn.2} parent=5 // pred_check_branch
      %108 = sbr.rel (%p105) target = $region12
    $region11: #{conv2d_bn.2} parent=5 // pred_region
      %s109 = ssub.s32 %s8, 1
      // Predicated region
      $region13: #{conv2d_bn.2} parent=11 // pred_check
        %p110 = pneg %p67
      $region14: #{conv2d_bn.2} parent=11 // pred_check_branch
        %112 = sbr.rel (%p110) target = $region16
      $region15: #{conv2d_bn.2} parent=11 // pred_region
        _
      $region16: #{conv2d_bn.2} parent=11 // pred_fallthru
        _
    $region12: #{conv2d_bn.2} parent=5 // pred_fallthru
      _
    %p113 = scmp.lt.s32.totalorder %s8, 2
    // Predicated region
    $region17: #{conv2d_bn.2} parent=5 // pred_check
      %p114 = pneg %p113
    $region18: #{conv2d_bn.2} parent=5 // pred_check_branch
      %116 = sbr.rel (%p114) target = $region20
    $region19: #{conv2d_bn.2} parent=5 // pred_region
      // Predicated region
      $region21: #{conv2d_bn.2} parent=19 // pred_check
        %p117 = pneg %p40
      $region22: #{conv2d_bn.2} parent=19 // pred_check_branch
        %119 = sbr.rel (%p117) target = $region24
      $region23: #{conv2d_bn.2} parent=19 // pred_region
        %p120 = scmp.lt.s32.totalorder %s15, 1
        %s121 = scalar_select %p120, %s15, 1
        %s122 = smul.addr %s121, 54
        %s123 = smul.addr %s122, 4
        %s124 = scalar_lea.vmem %s0, %s123
      $region24: #{conv2d_bn.2} parent=19 // pred_fallthru
        _
    $region20: #{conv2d_bn.2} parent=5 // pred_fallthru
      _
    %p125 = scmp.le.s32.totalorder 1, %s8
    %p126 = scmp.lt.s32.totalorder %s8, 3
    %p127 = pnand %p125, %p126
    %p128 = pneg %p127
    // Predicated region
    $region25: #{conv2d_bn.2} parent=5 // pred_check
      _
    $region26: #{conv2d_bn.2} parent=5 // pred_check_branch
      %130 = sbr.rel (%p127) target = $region28
    $region27: #{conv2d_bn.2} parent=5 // pred_region
      %s131 = ssub.s32 %s8, 1
      %p132 = scmp.lt.s32.totalorder %s17, 1
      %s133 = scalar_select %p132, %s17, 1
      %s134 = smul.addr %s133, 54
      %s135 = smul.addr %s134, 4
      %s136 = scalar_lea.vmem %s0, %s135
      %p137 = pneg %p46
      %p138 = pneg %p43
      %p139 = pneg %p67
      %p140 = pneg %p64
      %p141 = pneg %p95
      %p142 = pneg %p92
      %p143 = scmp.lt.s32.totalorder %s17, 1
      %s144 = scalar_select %p143, %s17, 1
      %p145 = scmp.lt.s32.totalorder %s18, 0
      %s146 = scalar_select %p145, %s18, 0
      %s147 = sadd.s32 %s146, %s144
      %s148 = smul.addr %s147, 2
      %s149 = scalar_lea.vmem %s2, %s148
      %p150 = scmp.lt.s32.totalorder %s17, 1
      %s151 = scalar_select %p150, %s17, 1
      %s152 = smul.addr %s151, 54
      %s153 = smul.addr %s152, 4
      %s154 = scalar_lea.vmem %s0, %s153
      %p155 = scmp.lt.s32.totalorder %s17, 1
      %s156 = scalar_select %p155, %s17, 1
      %p157 = scmp.lt.s32.totalorder %s18, 0
      %s158 = scalar_select %p157, %s18, 0
      %s159 = sadd.s32 %s158, %s156
      %s160 = smul.addr %s159, 2
      %s161 = scalar_lea.vmem %s2, %s160
      %s163 = smul.u32 %s18, 16
      %s164 = smul.u32 %s163, 3
      %s165 = smul.addr %s164, 4
      %s166 = scalar_lea.vmem %s154, %s165
      %v167 = vld [vmem:[%s166] sm:$0xf]
      %v168 = vld [vmem:[%s166 + $0x4] sm:$0xf]
      %v169 = vld [vmem:[%s166 + $0x8] sm:$0x1]
      %v170 = vld [vmem:[%s166 + $0xc] sm:$0xf]
      %v171 = vld [vmem:[%s166 + $0x10] sm:$0xf]
      %v172 = vld [vmem:[%s166 + $0x14] sm:$0x1]
      %v173 = vld [vmem:[%s166 + $0x18] sm:$0xf]
      %v174 = vld [vmem:[%s166 + $0x1c] sm:$0xf]
      %v175 = vld [vmem:[%s166 + $0x20] sm:$0x1]
      %v176 = vld [vmem:[%s166 + $0x24] sm:$0xf]
      %v177 = vld [vmem:[%s166 + $0x28] sm:$0xf]
      %v178 = vld [vmem:[%s166 + $0x2c] sm:$0x1]
      %v179 = vld [vmem:[%s166 + $0x30] sm:$0xf]
      %v180 = vld [vmem:[%s166 + $0x34] sm:$0xf]
      %v181 = vld [vmem:[%s166 + $0x38] sm:$0x1]
      %v182 = vld [vmem:[%s166 + $0x3c] sm:$0xf]
      %v183 = vld [vmem:[%s166 + $0x40] sm:$0xf]
      %v184 = vld [vmem:[%s166 + $0x44] sm:$0x1]
      %v185 = vld [vmem:[%s166 + $0x48] sm:$0xf]
      %v186 = vld [vmem:[%s166 + $0x4c] sm:$0xf]
      %v187 = vld [vmem:[%s166 + $0x50] sm:$0x1]
      %v188 = vld [vmem:[%s166 + $0x54] sm:$0xf]
      %v189 = vld [vmem:[%s166 + $0x58] sm:$0xf]
      %v190 = vld [vmem:[%s166 + $0x5c] sm:$0x1]
      %v191 = vld [vmem:[%s166 + $0x60] sm:$0xf]
      %v192 = vld [vmem:[%s166 + $0x64] sm:$0xf]
      %v193 = vld [vmem:[%s166 + $0x68] sm:$0x1]
      %v194 = vld [vmem:[%s166 + $0x6c] sm:$0xf]
      %v195 = vld [vmem:[%s166 + $0x70] sm:$0xf]
      %v196 = vld [vmem:[%s166 + $0x74] sm:$0x1]
      %v197 = vld [vmem:[%s166 + $0x78] sm:$0xf]
      %v198 = vld [vmem:[%s166 + $0x7c] sm:$0xf]
      %v199 = vld [vmem:[%s166 + $0x80] sm:$0x1]
      %v200 = vld [vmem:[%s166 + $0x84] sm:$0xf]
      %v201 = vld [vmem:[%s166 + $0x88] sm:$0xf]
      %v202 = vld [vmem:[%s166 + $0x8c] sm:$0x1]
      %v203 = vld [vmem:[%s166 + $0x90] sm:$0xf]
      %v204 = vld [vmem:[%s166 + $0x94] sm:$0xf]
      %v205 = vld [vmem:[%s166 + $0x98] sm:$0x1]
      %v206 = vld [vmem:[%s166 + $0x9c] sm:$0xf]
      %v207 = vld [vmem:[%s166 + $0xa0] sm:$0xf]
      %v208 = vld [vmem:[%s166 + $0xa4] sm:$0x1]
      %v209 = vld [vmem:[%s166 + $0xa8] sm:$0xf]
      %v210 = vld [vmem:[%s166 + $0xac] sm:$0xf]
      %v211 = vld [vmem:[%s166 + $0xb0] sm:$0x1]
      %v212 = vld [vmem:[%s166 + $0xb4] sm:$0xf]
      %v213 = vld [vmem:[%s166 + $0xb8] sm:$0xf]
      %v214 = vld [vmem:[%s166 + $0xbc] sm:$0x1]
      %v215 = vld [vmem:[%s166 + $0xc0] sm:$0xf]
      %v216 = vld [vmem:[%s166 + $0xc4] sm:$0xf]
      %v217 = vld [vmem:[%s166 + $0xc8] sm:$0x1]
      %v218 = vld [vmem:[%s166 + $0xcc] sm:$0xf]
      %v219 = vld [vmem:[%s166 + $0xd0] sm:$0xf]
      %v220 = vld [vmem:[%s166 + $0xd4] sm:$0x1]
      %v221 = vld [vmem:[%s1] sm:$0x3]
      %vm222 = vsmask.f32 3328
      %vm223 = vsmask.f32 7440
      %vm224 = vmor %vm222, %vm223
      %v226 = vshrl.u32 %v167, 16
      %v228 = vrot.slane %v226, 4
      %v229 = vshll.u32 %v167, 16
      %v231 = vrot.slane %v229, 5
      %v232 = vor.u32 %v228, %v231
      %v233 = vrot.slane %v232, 4
      %v235 = vshll.u32 %v168, 16
      %v237 = vrot.slane %v235, 5
      %v238 = vsel %vm224, %v233, %v237
      %v239 = vshrl.u32 %v168, 16
      %v241 = vrot.slane %v239, 4
      %v242 = vor.u32 %v241, %v237
      %v243 = vrot.slane %v242, 4
      %v245 = vshll.u32 %v169, 16
      %v247 = vrot.slane %v245, 5
      %v248 = vsel %vm224, %v243, %v247
      %v250 = vshrl.u32 %v170, 16
      %v252 = vrot.slane %v250, 4
      %v253 = vshll.u32 %v170, 16
      %v255 = vrot.slane %v253, 5
      %v256 = vor.u32 %v252, %v255
      %v257 = vrot.slane %v256, 4
      %v259 = vshll.u32 %v171, 16
      %v261 = vrot.slane %v259, 5
      %v262 = vsel %vm224, %v257, %v261
      %v263 = vshrl.u32 %v171, 16
      %v265 = vrot.slane %v263, 4
      %v266 = vor.u32 %v265, %v261
      %v267 = vrot.slane %v266, 4
      %v269 = vshll.u32 %v172, 16
      %v271 = vrot.slane %v269, 5
      %v272 = vsel %vm224, %v267, %v271
      %v274 = vshrl.u32 %v173, 16
      %v276 = vrot.slane %v274, 4
      %v277 = vshll.u32 %v173, 16
      %v279 = vrot.slane %v277, 5
      %v280 = vor.u32 %v276, %v279
      %v281 = vrot.slane %v280, 4
      %v283 = vshll.u32 %v174, 16
      %v285 = vrot.slane %v283, 5
      %v286 = vsel %vm224, %v281, %v285
      %v287 = vshrl.u32 %v174, 16
      %v289 = vrot.slane %v287, 4
      %v290 = vor.u32 %v289, %v285
      %v291 = vrot.slane %v290, 4
      %v293 = vshll.u32 %v175, 16
      %v295 = vrot.slane %v293, 5
      %v296 = vsel %vm224, %v291, %v295
      %v298 = vshrl.u32 %v176, 16
      %v300 = vrot.slane %v298, 4
      %v301 = vshll.u32 %v176, 16
      %v303 = vrot.slane %v301, 5
      %v304 = vor.u32 %v300, %v303
      %v305 = vrot.slane %v304, 4
      %v307 = vshll.u32 %v177, 16
      %v309 = vrot.slane %v307, 5
      %v310 = vsel %vm224, %v305, %v309
      %v311 = vshrl.u32 %v177, 16
      %v313 = vrot.slane %v311, 4
      %v314 = vor.u32 %v313, %v309
      %v315 = vrot.slane %v314, 4
      %v317 = vshll.u32 %v178, 16
      %v319 = vrot.slane %v317, 5
      %v320 = vsel %vm224, %v315, %v319
      %v322 = vshrl.u32 %v179, 16
      %v324 = vrot.slane %v322, 4
      %v325 = vshll.u32 %v179, 16
      %v327 = vrot.slane %v325, 5
      %v328 = vor.u32 %v324, %v327
      %v329 = vrot.slane %v328, 4
      %v331 = vshll.u32 %v180, 16
      %v333 = vrot.slane %v331, 5
      %v334 = vsel %vm224, %v329, %v333
      %v335 = vshrl.u32 %v180, 16
      %v337 = vrot.slane %v335, 4
      %v338 = vor.u32 %v337, %v333
      %v339 = vrot.slane %v338, 4
      %v341 = vshll.u32 %v181, 16
      %v343 = vrot.slane %v341, 5
      %v344 = vsel %vm224, %v339, %v343
      %v346 = vshrl.u32 %v182, 16
      %v348 = vrot.slane %v346, 4
      %v349 = vshll.u32 %v182, 16
      %v351 = vrot.slane %v349, 5
      %v352 = vor.u32 %v348, %v351
      %v353 = vrot.slane %v352, 4
      %v355 = vshll.u32 %v183, 16
      %v357 = vrot.slane %v355, 5
      %v358 = vsel %vm224, %v353, %v357
      %v359 = vshrl.u32 %v183, 16
      %v361 = vrot.slane %v359, 4
      %v362 = vor.u32 %v361, %v357
      %v363 = vrot.slane %v362, 4
      %v365 = vshll.u32 %v184, 16
      %v367 = vrot.slane %v365, 5
      %v368 = vsel %vm224, %v363, %v367
      %v370 = vshrl.u32 %v185, 16
      %v372 = vrot.slane %v370, 4
      %v373 = vshll.u32 %v185, 16
      %v375 = vrot.slane %v373, 5
      %v376 = vor.u32 %v372, %v375
      %v377 = vrot.slane %v376, 4
      %v379 = vshll.u32 %v186, 16
      %v381 = vrot.slane %v379, 5
      %v382 = vsel %vm224, %v377, %v381
      %v383 = vshrl.u32 %v186, 16
      %v385 = vrot.slane %v383, 4
      %v386 = vor.u32 %v385, %v381
      %v387 = vrot.slane %v386, 4
      %v389 = vshll.u32 %v187, 16
      %v391 = vrot.slane %v389, 5
      %v392 = vsel %vm224, %v387, %v391
      %v394 = vshrl.u32 %v188, 16
      %v396 = vrot.slane %v394, 4
      %v397 = vshll.u32 %v188, 16
      %v399 = vrot.slane %v397, 5
      %v400 = vor.u32 %v396, %v399
      %v401 = vrot.slane %v400, 4
      %v403 = vshll.u32 %v189, 16
      %v405 = vrot.slane %v403, 5
      %v406 = vsel %vm224, %v401, %v405
      %v407 = vshrl.u32 %v189, 16
      %v409 = vrot.slane %v407, 4
      %v410 = vor.u32 %v409, %v405
      %v411 = vrot.slane %v410, 4
      %v413 = vshll.u32 %v190, 16
      %v415 = vrot.slane %v413, 5
      %v416 = vsel %vm224, %v411, %v415
      %v418 = vshrl.u32 %v191, 16
      %v420 = vrot.slane %v418, 4
      %v421 = vshll.u32 %v191, 16
      %v423 = vrot.slane %v421, 5
      %v424 = vor.u32 %v420, %v423
      %v425 = vrot.slane %v424, 4
      %v427 = vshll.u32 %v192, 16
      %v429 = vrot.slane %v427, 5
      %v430 = vsel %vm224, %v425, %v429
      %v431 = vshrl.u32 %v192, 16
      %v433 = vrot.slane %v431, 4
      %v434 = vor.u32 %v433, %v429
      %v435 = vrot.slane %v434, 4
      %v437 = vshll.u32 %v193, 16
      %v439 = vrot.slane %v437, 5
      %v440 = vsel %vm224, %v435, %v439
      %v442 = vshrl.u32 %v194, 16
      %v444 = vrot.slane %v442, 4
      %v445 = vshll.u32 %v194, 16
      %v447 = vrot.slane %v445, 5
      %v448 = vor.u32 %v444, %v447
      %v449 = vrot.slane %v448, 4
      %v451 = vshll.u32 %v195, 16
      %v453 = vrot.slane %v451, 5
      %v454 = vsel %vm224, %v449, %v453
      %v455 = vshrl.u32 %v195, 16
      %v457 = vrot.slane %v455, 4
      %v458 = vor.u32 %v457, %v453
      %v459 = vrot.slane %v458, 4
      %v461 = vshll.u32 %v196, 16
      %v463 = vrot.slane %v461, 5
      %v464 = vsel %vm224, %v459, %v463
      %v466 = vshrl.u32 %v197, 16
      %v468 = vrot.slane %v466, 4
      %v469 = vshll.u32 %v197, 16
      %v471 = vrot.slane %v469, 5
      %v472 = vor.u32 %v468, %v471
      %v473 = vrot.slane %v472, 4
      %v475 = vshll.u32 %v198, 16
      %v477 = vrot.slane %v475, 5
      %v478 = vsel %vm224, %v473, %v477
      %v479 = vshrl.u32 %v198, 16
      %v481 = vrot.slane %v479, 4
      %v482 = vor.u32 %v481, %v477
      %v483 = vrot.slane %v482, 4
      %v485 = vshll.u32 %v199, 16
      %v487 = vrot.slane %v485, 5
      %v488 = vsel %vm224, %v483, %v487
      %v490 = vshrl.u32 %v200, 16
      %v492 = vrot.slane %v490, 4
      %v493 = vshll.u32 %v200, 16
      %v495 = vrot.slane %v493, 5
      %v496 = vor.u32 %v492, %v495
      %v497 = vrot.slane %v496, 4
      %v499 = vshll.u32 %v201, 16
      %v501 = vrot.slane %v499, 5
      %v502 = vsel %vm224, %v497, %v501
      %v503 = vshrl.u32 %v201, 16
      %v505 = vrot.slane %v503, 4
      %v506 = vor.u32 %v505, %v501
      %v507 = vrot.slane %v506, 4
      %v509 = vshll.u32 %v202, 16
      %v511 = vrot.slane %v509, 5
      %v512 = vsel %vm224, %v507, %v511
      %v514 = vshrl.u32 %v203, 16
      %v516 = vrot.slane %v514, 4
      %v517 = vshll.u32 %v203, 16
      %v519 = vrot.slane %v517, 5
      %v520 = vor.u32 %v516, %v519
      %v521 = vrot.slane %v520, 4
      %v523 = vshll.u32 %v204, 16
      %v525 = vrot.slane %v523, 5
      %v526 = vsel %vm224, %v521, %v525
      %v527 = vshrl.u32 %v204, 16
      %v529 = vrot.slane %v527, 4
      %v530 = vor.u32 %v529, %v525
      %v531 = vrot.slane %v530, 4
      %v533 = vshll.u32 %v205, 16
      %v535 = vrot.slane %v533, 5
      %v536 = vsel %vm224, %v531, %v535
      %v538 = vshrl.u32 %v206, 16
      %v540 = vrot.slane %v538, 4
      %v541 = vshll.u32 %v206, 16
      %v543 = vrot.slane %v541, 5
      %v544 = vor.u32 %v540, %v543
      %v545 = vrot.slane %v544, 4
      %v547 = vshll.u32 %v207, 16
      %v549 = vrot.slane %v547, 5
      %v550 = vsel %vm224, %v545, %v549
      %v551 = vshrl.u32 %v207, 16
      %v553 = vrot.slane %v551, 4
      %v554 = vor.u32 %v553, %v549
      %v555 = vrot.slane %v554, 4
      %v557 = vshll.u32 %v208, 16
      %v559 = vrot.slane %v557, 5
      %v560 = vsel %vm224, %v555, %v559
      %v562 = vshrl.u32 %v209, 16
      %v564 = vrot.slane %v562, 4
      %v565 = vshll.u32 %v209, 16
      %v567 = vrot.slane %v565, 5
      %v568 = vor.u32 %v564, %v567
      %v569 = vrot.slane %v568, 4
      %v571 = vshll.u32 %v210, 16
      %v573 = vrot.slane %v571, 5
      %v574 = vsel %vm224, %v569, %v573
      %v575 = vshrl.u32 %v210, 16
      %v577 = vrot.slane %v575, 4
      %v578 = vor.u32 %v577, %v573
      %v579 = vrot.slane %v578, 4
      %v581 = vshll.u32 %v211, 16
      %v583 = vrot.slane %v581, 5
      %v584 = vsel %vm224, %v579, %v583
      %v586 = vshrl.u32 %v212, 16
      %v588 = vrot.slane %v586, 4
      %v589 = vshll.u32 %v212, 16
      %v591 = vrot.slane %v589, 5
      %v592 = vor.u32 %v588, %v591
      %v593 = vrot.slane %v592, 4
      %v595 = vshll.u32 %v213, 16
      %v597 = vrot.slane %v595, 5
      %v598 = vsel %vm224, %v593, %v597
      %v599 = vshrl.u32 %v213, 16
      %v601 = vrot.slane %v599, 4
      %v602 = vor.u32 %v601, %v597
      %v603 = vrot.slane %v602, 4
      %v605 = vshll.u32 %v214, 16
      %v607 = vrot.slane %v605, 5
      %v608 = vsel %vm224, %v603, %v607
      %v609 = vld [vmem:[%s1] sm:$0xc]
      %v610 = vunpack.c.l.b16 %v238
      %v611 = vunpack.c.l.b16 %v248
      %v612 = vunpack.c.l.b16 %v262
      %v613 = vunpack.c.l.b16 %v272
      %v614 = vunpack.c.l.b16 %v286
      %v615 = vunpack.c.l.b16 %v296
      %v616 = vunpack.c.l.b16 %v310
      %v617 = vunpack.c.l.b16 %v320
      %v618 = vunpack.c.l.b16 %v334
      %v619 = vunpack.c.l.b16 %v344
      %v620 = vunpack.c.l.b16 %v358
      %v621 = vunpack.c.l.b16 %v368
      %v622 = vunpack.c.l.b16 %v382
      %v623 = vunpack.c.l.b16 %v392
      %v624 = vunpack.c.l.b16 %v406
      %v625 = vunpack.c.l.b16 %v416
      %v626 = vunpack.c.l.b16 %v430
      %v627 = vunpack.c.l.b16 %v440
      %v628 = vunpack.c.l.b16 %v454
      %v629 = vunpack.c.l.b16 %v464
      %v630 = vunpack.c.l.b16 %v478
      %v631 = vunpack.c.l.b16 %v488
      %v632 = vunpack.c.l.b16 %v502
      %v633 = vunpack.c.l.b16 %v512
      %v634 = vunpack.c.l.b16 %v526
      %v635 = vunpack.c.l.b16 %v536
      %v636 = vunpack.c.l.b16 %v550
      %v637 = vunpack.c.l.b16 %v560
      %v638 = vunpack.c.l.b16 %v574
      %v639 = vunpack.c.l.b16 %v584
      %v640 = vunpack.c.l.b16 %v598
      %v641 = vunpack.c.l.b16 %v608
      %v642 = vpack.c.b16 %v611, %v610
      %v643 = vpack.c.b16 %v613, %v612
      %v644 = vpack.c.b16 %v615, %v614
      %v645 = vpack.c.b16 %v617, %v616
      %v646 = vpack.c.b16 %v619, %v618
      %v647 = vpack.c.b16 %v621, %v620
      %v648 = vpack.c.b16 %v623, %v622
      %v649 = vpack.c.b16 %v625, %v624
      %v650 = vpack.c.b16 %v627, %v626
      %v651 = vpack.c.b16 %v629, %v628
      %v652 = vpack.c.b16 %v631, %v630
      %v653 = vpack.c.b16 %v633, %v632
      %v654 = vpack.c.b16 %v635, %v634
      %v655 = vpack.c.b16 %v637, %v636
      %v656 = vpack.c.b16 %v639, %v638
      %v657 = vpack.c.b16 %v641, %v640
      %v659 = vunpack.c.l.b16 %v609
      %v660 = vpack.c.b16 %v659, %v659
      %v661 = vrot.slane %v660, 2
      %vm662 = vcmask 31744
      %v664 = vsel %vm662, %v642, 0
      %v667 = vsel %vm662, %v643, 0
      %v670 = vsel %vm662, %v644, 0
      %v673 = vsel %vm662, %v645, 0
      %v676 = vsel %vm662, %v646, 0
      %v679 = vsel %vm662, %v647, 0
      %v682 = vsel %vm662, %v648, 0
      %v685 = vsel %vm662, %v649, 0
      %v688 = vsel %vm662, %v650, 0
      %v691 = vsel %vm662, %v651, 0
      %v694 = vsel %vm662, %v652, 0
      %v697 = vsel %vm662, %v653, 0
      %v700 = vsel %vm662, %v654, 0
      %v703 = vsel %vm662, %v655, 0
      %v706 = vsel %vm662, %v656, 0
      %v709 = vsel %vm662, %v657, 0
      %vm711 = vcmask 1041408
      %v713 = vsel %vm711, %v661, 0
      %715 = vmatprep.subr.bf16.mxu0 0
      %716 = vmatpush1.bf16.msra.mxu0 0
      %717 = vmatprep.subr.bf16.mxu0 0
      %718 = vmatpush1.bf16.msra.mxu0 0
      %719 = vmatprep.subr.bf16.mxu0 0
      %720 = vmatpush1.bf16.msra.mxu0 0
      %721 = vmatprep.subr.bf16.mxu0 0
      %722 = vmatpush1.bf16.msra.mxu0 0
      %723 = vmatprep.subr.bf16.mxu0 0
      %724 = vmatpush1.bf16.msra.mxu0 0
      %725 = vmatprep.subr.bf16.mxu0 0
      %726 = vmatpush1.bf16.msra.mxu0 0
      %727 = vmatprep.subr.bf16.mxu0 0
      %728 = vmatpush1.bf16.msra.mxu0 0
      %729 = vmatprep.subr.bf16.mxu0 0
      %730 = vmatpush1.bf16.msra.mxu0 %v713
      %731 = vmatprep.subr.bf16.mxu0 0
      %732 = vmatpush2.bf16.msra.mxu0 0
      %733 = vmatprep.subr.bf16.mxu0 0
      %734 = vmatpush2.bf16.msra.mxu0 0
      %735 = vmatprep.subr.bf16.mxu0 0
      %736 = vmatpush2.bf16.msra.mxu0 0
      %737 = vmatprep.subr.bf16.mxu0 0
      %738 = vmatpush2.bf16.msra.mxu0 0
      %739 = vmatprep.subr.bf16.mxu0 0
      %740 = vmatpush2.bf16.msra.mxu0 0
      %741 = vmatprep.subr.bf16.mxu0 0
      %742 = vmatpush2.bf16.msra.mxu0 0
      %743 = vmatprep.subr.bf16.mxu0 0
      %744 = vmatpush2.bf16.msra.mxu0 0
      %745 = vmatprep.subr.bf16.mxu0 0
      %746 = vmatpush2.bf16.msra.mxu0 0
      %747 = vmatprep.mubr.bf16.mxu0 0
      %748 = vmatmul.mubr.bf16.gmra.mxu0 %v664
      %v749 = vpop.f32.mrf.mxu0
      %v750 = vadd.f32 0.0, %v749
      %v751 = vpop.f32.mrf.mxu0
      %v752 = vpop.f32.mrf.mxu0
      %v753 = vadd.f32 0.0, %v752
      %v754 = vpop.f32.mrf.mxu0
      %755 = vmatprep.mubr.bf16.mxu0 0
      %756 = vmatmul.mubr.bf16.gmra.mxu0 %v667
      %v757 = vpop.f32.mrf.mxu0
      %v758 = vadd.f32 0.0, %v757
      %v759 = vpop.f32.mrf.mxu0
      %v760 = vpop.f32.mrf.mxu0
      %v761 = vadd.f32 0.0, %v760
      %v762 = vpop.f32.mrf.mxu0
      %763 = vmatprep.mubr.bf16.mxu0 0
      %764 = vmatmul.mubr.bf16.gmra.mxu0 %v670
      %v765 = vpop.f32.mrf.mxu0
      %v766 = vadd.f32 0.0, %v765
      %v767 = vpop.f32.mrf.mxu0
      %v768 = vpop.f32.mrf.mxu0
      %v769 = vadd.f32 0.0, %v768
      %v770 = vpop.f32.mrf.mxu0
      %771 = vmatprep.mubr.bf16.mxu0 0
      %772 = vmatmul.mubr.bf16.gmra.mxu0 %v673
      %v773 = vpop.f32.mrf.mxu0
      %v774 = vadd.f32 0.0, %v773
      %v775 = vpop.f32.mrf.mxu0
      %v776 = vpop.f32.mrf.mxu0
      %v777 = vadd.f32 0.0, %v776
      %v778 = vpop.f32.mrf.mxu0
      %779 = vmatprep.mubr.bf16.mxu0 0
      %780 = vmatmul.mubr.bf16.gmra.mxu0 %v676
      %v781 = vpop.f32.mrf.mxu0
      %v782 = vadd.f32 0.0, %v781
      %v783 = vpop.f32.mrf.mxu0
      %v784 = vpop.f32.mrf.mxu0
      %v785 = vadd.f32 0.0, %v784
      %v786 = vpop.f32.mrf.mxu0
      %787 = vmatprep.mubr.bf16.mxu0 0
      %788 = vmatmul.mubr.bf16.gmra.mxu0 %v679
      %v789 = vpop.f32.mrf.mxu0
      %v790 = vadd.f32 0.0, %v789
      %v791 = vpop.f32.mrf.mxu0
      %v792 = vpop.f32.mrf.mxu0
      %v793 = vadd.f32 0.0, %v792
      %v794 = vpop.f32.mrf.mxu0
      %795 = vmatprep.mubr.bf16.mxu0 0
      %796 = vmatmul.mubr.bf16.gmra.mxu0 %v682
      %v797 = vpop.f32.mrf.mxu0
      %v798 = vadd.f32 0.0, %v797
      %v799 = vpop.f32.mrf.mxu0
      %v800 = vpop.f32.mrf.mxu0
      %v801 = vadd.f32 0.0, %v800
      %v802 = vpop.f32.mrf.mxu0
      %803 = vmatprep.mubr.bf16.mxu0 0
      %804 = vmatmul.mubr.bf16.gmra.mxu0 %v685
      %v805 = vpop.f32.mrf.mxu0
      %v806 = vadd.f32 0.0, %v805
      %v807 = vpop.f32.mrf.mxu0
      %v808 = vpop.f32.mrf.mxu0
      %v809 = vadd.f32 0.0, %v808
      %v810 = vpop.f32.mrf.mxu0
      %811 = vmatprep.mubr.bf16.mxu0 0
      %812 = vmatmul.mubr.bf16.gmra.mxu0 %v688
      %v813 = vpop.f32.mrf.mxu0
      %v814 = vadd.f32 0.0, %v813
      %v815 = vpop.f32.mrf.mxu0
      %v816 = vpop.f32.mrf.mxu0
      %v817 = vadd.f32 0.0, %v816
      %v818 = vpop.f32.mrf.mxu0
      %819 = vmatprep.mubr.bf16.mxu0 0
      %820 = vmatmul.mubr.bf16.gmra.mxu0 %v691
      %v821 = vpop.f32.mrf.mxu0
      %v822 = vadd.f32 0.0, %v821
      %v823 = vpop.f32.mrf.mxu0
      %v824 = vpop.f32.mrf.mxu0
      %v825 = vadd.f32 0.0, %v824
      %v826 = vpop.f32.mrf.mxu0
      %827 = vmatprep.mubr.bf16.mxu0 0
      %828 = vmatmul.mubr.bf16.gmra.mxu0 %v694
      %v829 = vpop.f32.mrf.mxu0
      %v830 = vadd.f32 0.0, %v829
      %v831 = vpop.f32.mrf.mxu0
      %v832 = vpop.f32.mrf.mxu0
      %v833 = vadd.f32 0.0, %v832
      %v834 = vpop.f32.mrf.mxu0
      %835 = vmatprep.mubr.bf16.mxu0 0
      %836 = vmatmul.mubr.bf16.gmra.mxu0 %v697
      %v837 = vpop.f32.mrf.mxu0
      %v838 = vadd.f32 0.0, %v837
      %v839 = vpop.f32.mrf.mxu0
      %v840 = vpop.f32.mrf.mxu0
      %v841 = vadd.f32 0.0, %v840
      %v842 = vpop.f32.mrf.mxu0
      %843 = vmatprep.mubr.bf16.mxu0 0
      %844 = vmatmul.mubr.bf16.gmra.mxu0 %v700
      %v845 = vpop.f32.mrf.mxu0
      %v846 = vadd.f32 0.0, %v845
      %v847 = vpop.f32.mrf.mxu0
      %v848 = vpop.f32.mrf.mxu0
      %v849 = vadd.f32 0.0, %v848
      %v850 = vpop.f32.mrf.mxu0
      %851 = vmatprep.mubr.bf16.mxu0 0
      %852 = vmatmul.mubr.bf16.gmra.mxu0 %v703
      %v853 = vpop.f32.mrf.mxu0
      %v854 = vadd.f32 0.0, %v853
      %v855 = vpop.f32.mrf.mxu0
      %v856 = vpop.f32.mrf.mxu0
      %v857 = vadd.f32 0.0, %v856
      %v858 = vpop.f32.mrf.mxu0
      %859 = vmatprep.mubr.bf16.mxu0 0
      %860 = vmatmul.mubr.bf16.gmra.mxu0 %v706
      %v861 = vpop.f32.mrf.mxu0
      %v862 = vadd.f32 0.0, %v861
      %v863 = vpop.f32.mrf.mxu0
      %v864 = vpop.f32.mrf.mxu0
      %v865 = vadd.f32 0.0, %v864
      %v866 = vpop.f32.mrf.mxu0
      %867 = vmatprep.mubr.bf16.mxu0 0
      %868 = vmatmul.mubr.bf16.gmra.mxu0 %v709
      %v869 = vpop.f32.mrf.mxu0
      %v870 = vadd.f32 0.0, %v869
      %v871 = vpop.f32.mrf.mxu0
      %v872 = vpop.f32.mrf.mxu0
      %v873 = vadd.f32 0.0, %v872
      %v874 = vpop.f32.mrf.mxu0
      %875 = vdwg.mxu0
      %v908 = vunpack.c.l.b16 %v167
      %v909 = vunpack.c.l.b16 %v168
      %v910 = vunpack.c.l.b16 %v170
      %v911 = vunpack.c.l.b16 %v171
      %v912 = vunpack.c.l.b16 %v173
      %v913 = vunpack.c.l.b16 %v174
      %v914 = vunpack.c.l.b16 %v176
      %v915 = vunpack.c.l.b16 %v177
      %v916 = vunpack.c.l.b16 %v179
      %v917 = vunpack.c.l.b16 %v180
      %v918 = vunpack.c.l.b16 %v182
      %v919 = vunpack.c.l.b16 %v183
      %v920 = vunpack.c.l.b16 %v185
      %v921 = vunpack.c.l.b16 %v186
      %v922 = vunpack.c.l.b16 %v188
      %v923 = vunpack.c.l.b16 %v189
      %v924 = vunpack.c.l.b16 %v191
      %v925 = vunpack.c.l.b16 %v192
      %v926 = vunpack.c.l.b16 %v194
      %v927 = vunpack.c.l.b16 %v195
      %v928 = vunpack.c.l.b16 %v197
      %v929 = vunpack.c.l.b16 %v198
      %v930 = vunpack.c.l.b16 %v200
      %v931 = vunpack.c.l.b16 %v201
      %v932 = vunpack.c.l.b16 %v203
      %v933 = vunpack.c.l.b16 %v204
      %v934 = vunpack.c.l.b16 %v206
      %v935 = vunpack.c.l.b16 %v207
      %v936 = vunpack.c.l.b16 %v209
      %v937 = vunpack.c.l.b16 %v210
      %v938 = vunpack.c.l.b16 %v212
      %v939 = vunpack.c.l.b16 %v213
      %v940 = vpack.c.b16 %v909, %v908
      %v941 = vpack.c.b16 %v911, %v910
      %v942 = vpack.c.b16 %v913, %v912
      %v943 = vpack.c.b16 %v915, %v914
      %v944 = vpack.c.b16 %v917, %v916
      %v945 = vpack.c.b16 %v919, %v918
      %v946 = vpack.c.b16 %v921, %v920
      %v947 = vpack.c.b16 %v923, %v922
      %v948 = vpack.c.b16 %v925, %v924
      %v949 = vpack.c.b16 %v927, %v926
      %v950 = vpack.c.b16 %v929, %v928
      %v951 = vpack.c.b16 %v931, %v930
      %v952 = vpack.c.b16 %v933, %v932
      %v953 = vpack.c.b16 %v935, %v934
      %v954 = vpack.c.b16 %v937, %v936
      %v955 = vpack.c.b16 %v939, %v938
      %v957 = vsel %vm662, %v940, 0
      %v960 = vsel %vm662, %v941, 0
      %v963 = vsel %vm662, %v942, 0
      %v966 = vsel %vm662, %v943, 0
      %v969 = vsel %vm662, %v944, 0
      %v972 = vsel %vm662, %v945, 0
      %v975 = vsel %vm662, %v946, 0
      %v978 = vsel %vm662, %v947, 0
      %v981 = vsel %vm662, %v948, 0
      %v984 = vsel %vm662, %v949, 0
      %v987 = vsel %vm662, %v950, 0
      %v990 = vsel %vm662, %v951, 0
      %v993 = vsel %vm662, %v952, 0
      %v996 = vsel %vm662, %v953, 0
      %v999 = vsel %vm662, %v954, 0
      %v1002 = vsel %vm662, %v955, 0
      %v1005 = vsel %vm711, %v221, 0
      %1007 = vmatprep.subr.bf16.mxu0 0
      %1008 = vmatpush1.bf16.msra.mxu0 0
      %1009 = vmatprep.subr.bf16.mxu0 0
      %1010 = vmatpush1.bf16.msra.mxu0 0
      %1011 = vmatprep.subr.bf16.mxu0 0
      %1012 = vmatpush1.bf16.msra.mxu0 0
      %1013 = vmatprep.subr.bf16.mxu0 0
      %1014 = vmatpush1.bf16.msra.mxu0 0
      %1015 = vmatprep.subr.bf16.mxu0 0
      %1016 = vmatpush1.bf16.msra.mxu0 0
      %1017 = vmatprep.subr.bf16.mxu0 0
      %1018 = vmatpush1.bf16.msra.mxu0 0
      %1019 = vmatprep.subr.bf16.mxu0 0
      %1020 = vmatpush1.bf16.msra.mxu0 0
      %1021 = vmatprep.subr.bf16.mxu0 0
      %1022 = vmatpush1.bf16.msra.mxu0 %v1005
      %1023 = vmatprep.subr.bf16.mxu0 0
      %1024 = vmatpush2.bf16.msra.mxu0 0
      %1025 = vmatprep.subr.bf16.mxu0 0
      %1026 = vmatpush2.bf16.msra.mxu0 0
      %1027 = vmatprep.subr.bf16.mxu0 0
      %1028 = vmatpush2.bf16.msra.mxu0 0
      %1029 = vmatprep.subr.bf16.mxu0 0
      %1030 = vmatpush2.bf16.msra.mxu0 0
      %1031 = vmatprep.subr.bf16.mxu0 0
      %1032 = vmatpush2.bf16.msra.mxu0 0
      %1033 = vmatprep.subr.bf16.mxu0 0
      %1034 = vmatpush2.bf16.msra.mxu0 0
      %1035 = vmatprep.subr.bf16.mxu0 0
      %1036 = vmatpush2.bf16.msra.mxu0 0
      %1037 = vmatprep.subr.bf16.mxu0 0
      %1038 = vmatpush2.bf16.msra.mxu0 0
      %1039 = vmatprep.mubr.bf16.mxu0 0
      %1040 = vmatmul.mubr.bf16.gmra.mxu0 %v957
      %v1041 = vpop.f32.mrf.mxu0
      %v1042 = vadd.f32 %v750, %v1041
      %v1043 = vpop.f32.mrf.mxu0
      %v1044 = vpop.f32.mrf.mxu0
      %v1045 = vadd.f32 %v753, %v1044
      %v1046 = vpop.f32.mrf.mxu0
      %1047 = vmatprep.mubr.bf16.mxu0 0
      %1048 = vmatmul.mubr.bf16.gmra.mxu0 %v960
      %v1049 = vpop.f32.mrf.mxu0
      %v1050 = vadd.f32 %v758, %v1049
      %v1051 = vpop.f32.mrf.mxu0
      %v1052 = vpop.f32.mrf.mxu0
      %v1053 = vadd.f32 %v761, %v1052
      %v1054 = vpop.f32.mrf.mxu0
      %1055 = vmatprep.mubr.bf16.mxu0 0
      %1056 = vmatmul.mubr.bf16.gmra.mxu0 %v963
      %v1057 = vpop.f32.mrf.mxu0
      %v1058 = vadd.f32 %v766, %v1057
      %v1059 = vpop.f32.mrf.mxu0
      %v1060 = vpop.f32.mrf.mxu0
      %v1061 = vadd.f32 %v769, %v1060
      %v1062 = vpop.f32.mrf.mxu0
      %1063 = vmatprep.mubr.bf16.mxu0 0
      %1064 = vmatmul.mubr.bf16.gmra.mxu0 %v966
      %v1065 = vpop.f32.mrf.mxu0
      %v1066 = vadd.f32 %v774, %v1065
      %v1067 = vpop.f32.mrf.mxu0
      %v1068 = vpop.f32.mrf.mxu0
      %v1069 = vadd.f32 %v777, %v1068
      %v1070 = vpop.f32.mrf.mxu0
      %1071 = vmatprep.mubr.bf16.mxu0 0
      %1072 = vmatmul.mubr.bf16.gmra.mxu0 %v969
      %v1073 = vpop.f32.mrf.mxu0
      %v1074 = vadd.f32 %v782, %v1073
      %v1075 = vpop.f32.mrf.mxu0
      %v1076 = vpop.f32.mrf.mxu0
      %v1077 = vadd.f32 %v785, %v1076
      %v1078 = vpop.f32.mrf.mxu0
      %1079 = vmatprep.mubr.bf16.mxu0 0
      %1080 = vmatmul.mubr.bf16.gmra.mxu0 %v972
      %v1081 = vpop.f32.mrf.mxu0
      %v1082 = vadd.f32 %v790, %v1081
      %v1083 = vpop.f32.mrf.mxu0
      %v1084 = vpop.f32.mrf.mxu0
      %v1085 = vadd.f32 %v793, %v1084
      %v1086 = vpop.f32.mrf.mxu0
      %1087 = vmatprep.mubr.bf16.mxu0 0
      %1088 = vmatmul.mubr.bf16.gmra.mxu0 %v975
      %v1089 = vpop.f32.mrf.mxu0
      %v1090 = vadd.f32 %v798, %v1089
      %v1091 = vpop.f32.mrf.mxu0
      %v1092 = vpop.f32.mrf.mxu0
      %v1093 = vadd.f32 %v801, %v1092
      %v1094 = vpop.f32.mrf.mxu0
      %1095 = vmatprep.mubr.bf16.mxu0 0
      %1096 = vmatmul.mubr.bf16.gmra.mxu0 %v978
      %v1097 = vpop.f32.mrf.mxu0
      %v1098 = vadd.f32 %v806, %v1097
      %v1099 = vpop.f32.mrf.mxu0
      %v1100 = vpop.f32.mrf.mxu0
      %v1101 = vadd.f32 %v809, %v1100
      %v1102 = vpop.f32.mrf.mxu0
      %1103 = vmatprep.mubr.bf16.mxu0 0
      %1104 = vmatmul.mubr.bf16.gmra.mxu0 %v981
      %v1105 = vpop.f32.mrf.mxu0
      %v1106 = vadd.f32 %v814, %v1105
      %v1107 = vpop.f32.mrf.mxu0
      %v1108 = vpop.f32.mrf.mxu0
      %v1109 = vadd.f32 %v817, %v1108
      %v1110 = vpop.f32.mrf.mxu0
      %1111 = vmatprep.mubr.bf16.mxu0 0
      %1112 = vmatmul.mubr.bf16.gmra.mxu0 %v984
      %v1113 = vpop.f32.mrf.mxu0
      %v1114 = vadd.f32 %v822, %v1113
      %v1115 = vpop.f32.mrf.mxu0
      %v1116 = vpop.f32.mrf.mxu0
      %v1117 = vadd.f32 %v825, %v1116
      %v1118 = vpop.f32.mrf.mxu0
      %1119 = vmatprep.mubr.bf16.mxu0 0
      %1120 = vmatmul.mubr.bf16.gmra.mxu0 %v987
      %v1121 = vpop.f32.mrf.mxu0
      %v1122 = vadd.f32 %v830, %v1121
      %v1123 = vpop.f32.mrf.mxu0
      %v1124 = vpop.f32.mrf.mxu0
      %v1125 = vadd.f32 %v833, %v1124
      %v1126 = vpop.f32.mrf.mxu0
      %1127 = vmatprep.mubr.bf16.mxu0 0
      %1128 = vmatmul.mubr.bf16.gmra.mxu0 %v990
      %v1129 = vpop.f32.mrf.mxu0
      %v1130 = vadd.f32 %v838, %v1129
      %v1131 = vpop.f32.mrf.mxu0
      %v1132 = vpop.f32.mrf.mxu0
      %v1133 = vadd.f32 %v841, %v1132
      %v1134 = vpop.f32.mrf.mxu0
      %1135 = vmatprep.mubr.bf16.mxu0 0
      %1136 = vmatmul.mubr.bf16.gmra.mxu0 %v993
      %v1137 = vpop.f32.mrf.mxu0
      %v1138 = vadd.f32 %v846, %v1137
      %v1139 = vpop.f32.mrf.mxu0
      %v1140 = vpop.f32.mrf.mxu0
      %v1141 = vadd.f32 %v849, %v1140
      %v1142 = vpop.f32.mrf.mxu0
      %1143 = vmatprep.mubr.bf16.mxu0 0
      %1144 = vmatmul.mubr.bf16.gmra.mxu0 %v996
      %v1145 = vpop.f32.mrf.mxu0
      %v1146 = vadd.f32 %v854, %v1145
      %v1147 = vpop.f32.mrf.mxu0
      %v1148 = vpop.f32.mrf.mxu0
      %v1149 = vadd.f32 %v857, %v1148
      %v1150 = vpop.f32.mrf.mxu0
      %1151 = vmatprep.mubr.bf16.mxu0 0
      %1152 = vmatmul.mubr.bf16.gmra.mxu0 %v999
      %v1153 = vpop.f32.mrf.mxu0
      %v1154 = vadd.f32 %v862, %v1153
      %v1155 = vpop.f32.mrf.mxu0
      %v1156 = vpop.f32.mrf.mxu0
      %v1157 = vadd.f32 %v865, %v1156
      %v1158 = vpop.f32.mrf.mxu0
      %1159 = vmatprep.mubr.bf16.mxu0 0
      %1160 = vmatmul.mubr.bf16.gmra.mxu0 %v1002
      %v1161 = vpop.f32.mrf.mxu0
      %v1162 = vadd.f32 %v870, %v1161
      %v1163 = vpop.f32.mrf.mxu0
      %v1164 = vpop.f32.mrf.mxu0
      %v1165 = vadd.f32 %v873, %v1164
      %v1166 = vpop.f32.mrf.mxu0
      %1167 = vdwg.mxu0
      %vm1184 = vcmask 1042432
      %vm1185 = vcmask 1046532
      %vm1186 = vmor %vm1184, %vm1185
      %v1187 = vrot.slane %v167, 5
      %v1188 = vrot.slane %v1187, 4
      %v1189 = vrot.slane %v168, 5
      %v1190 = vsel %vm1186, %v1188, %v1189
      %v1191 = vrot.slane %v1189, 4
      %v1192 = vrot.slane %v169, 5
      %v1193 = vsel %vm1186, %v1191, %v1192
      %v1194 = vrot.slane %v170, 5
      %v1195 = vrot.slane %v1194, 4
      %v1196 = vrot.slane %v171, 5
      %v1197 = vsel %vm1186, %v1195, %v1196
      %v1198 = vrot.slane %v1196, 4
      %v1199 = vrot.slane %v172, 5
      %v1200 = vsel %vm1186, %v1198, %v1199
      %v1201 = vrot.slane %v173, 5
      %v1202 = vrot.slane %v1201, 4
      %v1203 = vrot.slane %v174, 5
      %v1204 = vsel %vm1186, %v1202, %v1203
      %v1205 = vrot.slane %v1203, 4
      %v1206 = vrot.slane %v175, 5
      %v1207 = vsel %vm1186, %v1205, %v1206
      %v1208 = vrot.slane %v176, 5
      %v1209 = vrot.slane %v1208, 4
      %v1210 = vrot.slane %v177, 5
      %v1211 = vsel %vm1186, %v1209, %v1210
      %v1212 = vrot.slane %v1210, 4
      %v1213 = vrot.slane %v178, 5
      %v1214 = vsel %vm1186, %v1212, %v1213
      %v1215 = vrot.slane %v179, 5
      %v1216 = vrot.slane %v1215, 4
      %v1217 = vrot.slane %v180, 5
      %v1218 = vsel %vm1186, %v1216, %v1217
      %v1219 = vrot.slane %v1217, 4
      %v1220 = vrot.slane %v181, 5
      %v1221 = vsel %vm1186, %v1219, %v1220
      %v1222 = vrot.slane %v182, 5
      %v1223 = vrot.slane %v1222, 4
      %v1224 = vrot.slane %v183, 5
      %v1225 = vsel %vm1186, %v1223, %v1224
      %v1226 = vrot.slane %v1224, 4
      %v1227 = vrot.slane %v184, 5
      %v1228 = vsel %vm1186, %v1226, %v1227
      %v1229 = vrot.slane %v185, 5
      %v1230 = vrot.slane %v1229, 4
      %v1231 = vrot.slane %v186, 5
      %v1232 = vsel %vm1186, %v1230, %v1231
      %v1233 = vrot.slane %v1231, 4
      %v1234 = vrot.slane %v187, 5
      %v1235 = vsel %vm1186, %v1233, %v1234
      %v1236 = vrot.slane %v188, 5
      %v1237 = vrot.slane %v1236, 4
      %v1238 = vrot.slane %v189, 5
      %v1239 = vsel %vm1186, %v1237, %v1238
      %v1240 = vrot.slane %v1238, 4
      %v1241 = vrot.slane %v190, 5
      %v1242 = vsel %vm1186, %v1240, %v1241
      %v1243 = vrot.slane %v191, 5
      %v1244 = vrot.slane %v1243, 4
      %v1245 = vrot.slane %v192, 5
      %v1246 = vsel %vm1186, %v1244, %v1245
      %v1247 = vrot.slane %v1245, 4
      %v1248 = vrot.slane %v193, 5
      %v1249 = vsel %vm1186, %v1247, %v1248
      %v1250 = vrot.slane %v194, 5
      %v1251 = vrot.slane %v1250, 4
      %v1252 = vrot.slane %v195, 5
      %v1253 = vsel %vm1186, %v1251, %v1252
      %v1254 = vrot.slane %v1252, 4
      %v1255 = vrot.slane %v196, 5
      %v1256 = vsel %vm1186, %v1254, %v1255
      %v1257 = vrot.slane %v197, 5
      %v1258 = vrot.slane %v1257, 4
      %v1259 = vrot.slane %v198, 5
      %v1260 = vsel %vm1186, %v1258, %v1259
      %v1261 = vrot.slane %v1259, 4
      %v1262 = vrot.slane %v199, 5
      %v1263 = vsel %vm1186, %v1261, %v1262
      %v1264 = vrot.slane %v200, 5
      %v1265 = vrot.slane %v1264, 4
      %v1266 = vrot.slane %v201, 5
      %v1267 = vsel %vm1186, %v1265, %v1266
      %v1268 = vrot.slane %v1266, 4
      %v1269 = vrot.slane %v202, 5
      %v1270 = vsel %vm1186, %v1268, %v1269
      %v1271 = vrot.slane %v203, 5
      %v1272 = vrot.slane %v1271, 4
      %v1273 = vrot.slane %v204, 5
      %v1274 = vsel %vm1186, %v1272, %v1273
      %v1275 = vrot.slane %v1273, 4
      %v1276 = vrot.slane %v205, 5
      %v1277 = vsel %vm1186, %v1275, %v1276
      %v1278 = vrot.slane %v206, 5
      %v1279 = vrot.slane %v1278, 4
      %v1280 = vrot.slane %v207, 5
      %v1281 = vsel %vm1186, %v1279, %v1280
      %v1282 = vrot.slane %v1280, 4
      %v1283 = vrot.slane %v208, 5
      %v1284 = vsel %vm1186, %v1282, %v1283
      %v1285 = vrot.slane %v209, 5
      %v1286 = vrot.slane %v1285, 4
      %v1287 = vrot.slane %v210, 5
      %v1288 = vsel %vm1186, %v1286, %v1287
      %v1289 = vrot.slane %v1287, 4
      %v1290 = vrot.slane %v211, 5
      %v1291 = vsel %vm1186, %v1289, %v1290
      %v1292 = vrot.slane %v212, 5
      %v1293 = vrot.slane %v1292, 4
      %v1294 = vrot.slane %v213, 5
      %v1295 = vsel %vm1186, %v1293, %v1294
      %v1296 = vrot.slane %v1294, 4
      %v1297 = vrot.slane %v214, 5
      %v1298 = vsel %vm1186, %v1296, %v1297
      %v1299 = vld [vmem:[%s1 + $0x4] sm:$0x3]
      %v1300 = vunpack.c.l.b16 %v1190
      %v1301 = vunpack.c.l.b16 %v1193
      %v1302 = vunpack.c.l.b16 %v1197
      %v1303 = vunpack.c.l.b16 %v1200
      %v1304 = vunpack.c.l.b16 %v1204
      %v1305 = vunpack.c.l.b16 %v1207
      %v1306 = vunpack.c.l.b16 %v1211
      %v1307 = vunpack.c.l.b16 %v1214
      %v1308 = vunpack.c.l.b16 %v1218
      %v1309 = vunpack.c.l.b16 %v1221
      %v1310 = vunpack.c.l.b16 %v1225
      %v1311 = vunpack.c.l.b16 %v1228
      %v1312 = vunpack.c.l.b16 %v1232
      %v1313 = vunpack.c.l.b16 %v1235
      %v1314 = vunpack.c.l.b16 %v1239
      %v1315 = vunpack.c.l.b16 %v1242
      %v1316 = vunpack.c.l.b16 %v1246
      %v1317 = vunpack.c.l.b16 %v1249
      %v1318 = vunpack.c.l.b16 %v1253
      %v1319 = vunpack.c.l.b16 %v1256
      %v1320 = vunpack.c.l.b16 %v1260
      %v1321 = vunpack.c.l.b16 %v1263
      %v1322 = vunpack.c.l.b16 %v1267
      %v1323 = vunpack.c.l.b16 %v1270
      %v1324 = vunpack.c.l.b16 %v1274
      %v1325 = vunpack.c.l.b16 %v1277
      %v1326 = vunpack.c.l.b16 %v1281
      %v1327 = vunpack.c.l.b16 %v1284
      %v1328 = vunpack.c.l.b16 %v1288
      %v1329 = vunpack.c.l.b16 %v1291
      %v1330 = vunpack.c.l.b16 %v1295
      %v1331 = vunpack.c.l.b16 %v1298
      %v1332 = vpack.c.b16 %v1301, %v1300
      %v1333 = vpack.c.b16 %v1303, %v1302
      %v1334 = vpack.c.b16 %v1305, %v1304
      %v1335 = vpack.c.b16 %v1307, %v1306
      %v1336 = vpack.c.b16 %v1309, %v1308
      %v1337 = vpack.c.b16 %v1311, %v1310
      %v1338 = vpack.c.b16 %v1313, %v1312
      %v1339 = vpack.c.b16 %v1315, %v1314
      %v1340 = vpack.c.b16 %v1317, %v1316
      %v1341 = vpack.c.b16 %v1319, %v1318
      %v1342 = vpack.c.b16 %v1321, %v1320
      %v1343 = vpack.c.b16 %v1323, %v1322
      %v1344 = vpack.c.b16 %v1325, %v1324
      %v1345 = vpack.c.b16 %v1327, %v1326
      %v1346 = vpack.c.b16 %v1329, %v1328
      %v1347 = vpack.c.b16 %v1331, %v1330
      %v1349 = vsel %vm662, %v1332, 0
      %v1352 = vsel %vm662, %v1333, 0
      %v1355 = vsel %vm662, %v1334, 0
      %v1358 = vsel %vm662, %v1335, 0
      %v1361 = vsel %vm662, %v1336, 0
      %v1364 = vsel %vm662, %v1337, 0
      %v1367 = vsel %vm662, %v1338, 0
      %v1370 = vsel %vm662, %v1339, 0
      %v1373 = vsel %vm662, %v1340, 0
      %v1376 = vsel %vm662, %v1341, 0
      %v1379 = vsel %vm662, %v1342, 0
      %v1382 = vsel %vm662, %v1343, 0
      %v1385 = vsel %vm662, %v1344, 0
      %v1388 = vsel %vm662, %v1345, 0
      %v1391 = vsel %vm662, %v1346, 0
      %v1394 = vsel %vm662, %v1347, 0
      %v1397 = vsel %vm711, %v1299, 0
      %1399 = vmatprep.subr.bf16.mxu0 0
      %1400 = vmatpush1.bf16.msra.mxu0 0
      %1401 = vmatprep.subr.bf16.mxu0 0
      %1402 = vmatpush1.bf16.msra.mxu0 0
      %1403 = vmatprep.subr.bf16.mxu0 0
      %1404 = vmatpush1.bf16.msra.mxu0 0
      %1405 = vmatprep.subr.bf16.mxu0 0
      %1406 = vmatpush1.bf16.msra.mxu0 0
      %1407 = vmatprep.subr.bf16.mxu0 0
      %1408 = vmatpush1.bf16.msra.mxu0 0
      %1409 = vmatprep.subr.bf16.mxu0 0
      %1410 = vmatpush1.bf16.msra.mxu0 0
      %1411 = vmatprep.subr.bf16.mxu0 0
      %1412 = vmatpush1.bf16.msra.mxu0 0
      %1413 = vmatprep.subr.bf16.mxu0 0
      %1414 = vmatpush1.bf16.msra.mxu0 %v1397
      %1415 = vmatprep.subr.bf16.mxu0 0
      %1416 = vmatpush2.bf16.msra.mxu0 0
      %1417 = vmatprep.subr.bf16.mxu0 0
      %1418 = vmatpush2.bf16.msra.mxu0 0
      %1419 = vmatprep.subr.bf16.mxu0 0
      %1420 = vmatpush2.bf16.msra.mxu0 0
      %1421 = vmatprep.subr.bf16.mxu0 0
      %1422 = vmatpush2.bf16.msra.mxu0 0
      %1423 = vmatprep.subr.bf16.mxu0 0
      %1424 = vmatpush2.bf16.msra.mxu0 0
      %1425 = vmatprep.subr.bf16.mxu0 0
      %1426 = vmatpush2.bf16.msra.mxu0 0
      %1427 = vmatprep.subr.bf16.mxu0 0
      %1428 = vmatpush2.bf16.msra.mxu0 0
      %1429 = vmatprep.subr.bf16.mxu0 0
      %1430 = vmatpush2.bf16.msra.mxu0 0
      %1431 = vmatprep.mubr.bf16.mxu0 0
      %1432 = vmatmul.mubr.bf16.gmra.mxu0 %v1349
      %v1433 = vpop.f32.mrf.mxu0
      %v1434 = vadd.f32 0.0, %v1433
      %v1435 = vpop.f32.mrf.mxu0
      %v1436 = vpop.f32.mrf.mxu0
      %v1437 = vadd.f32 0.0, %v1436
      %v1438 = vpop.f32.mrf.mxu0
      %1439 = vmatprep.mubr.bf16.mxu0 0
      %1440 = vmatmul.mubr.bf16.gmra.mxu0 %v1352
      %v1441 = vpop.f32.mrf.mxu0
      %v1442 = vadd.f32 0.0, %v1441
      %v1443 = vpop.f32.mrf.mxu0
      %v1444 = vpop.f32.mrf.mxu0
      %v1445 = vadd.f32 0.0, %v1444
      %v1446 = vpop.f32.mrf.mxu0
      %1447 = vmatprep.mubr.bf16.mxu0 0
      %1448 = vmatmul.mubr.bf16.gmra.mxu0 %v1355
      %v1449 = vpop.f32.mrf.mxu0
      %v1450 = vadd.f32 0.0, %v1449
      %v1451 = vpop.f32.mrf.mxu0
      %v1452 = vpop.f32.mrf.mxu0
      %v1453 = vadd.f32 0.0, %v1452
      %v1454 = vpop.f32.mrf.mxu0
      %1455 = vmatprep.mubr.bf16.mxu0 0
      %1456 = vmatmul.mubr.bf16.gmra.mxu0 %v1358
      %v1457 = vpop.f32.mrf.mxu0
      %v1458 = vadd.f32 0.0, %v1457
      %v1459 = vpop.f32.mrf.mxu0
      %v1460 = vpop.f32.mrf.mxu0
      %v1461 = vadd.f32 0.0, %v1460
      %v1462 = vpop.f32.mrf.mxu0
      %1463 = vmatprep.mubr.bf16.mxu0 0
      %1464 = vmatmul.mubr.bf16.gmra.mxu0 %v1361
      %v1465 = vpop.f32.mrf.mxu0
      %v1466 = vadd.f32 0.0, %v1465
      %v1467 = vpop.f32.mrf.mxu0
      %v1468 = vpop.f32.mrf.mxu0
      %v1469 = vadd.f32 0.0, %v1468
      %v1470 = vpop.f32.mrf.mxu0
      %1471 = vmatprep.mubr.bf16.mxu0 0
      %1472 = vmatmul.mubr.bf16.gmra.mxu0 %v1364
      %v1473 = vpop.f32.mrf.mxu0
      %v1474 = vadd.f32 0.0, %v1473
      %v1475 = vpop.f32.mrf.mxu0
      %v1476 = vpop.f32.mrf.mxu0
      %v1477 = vadd.f32 0.0, %v1476
      %v1478 = vpop.f32.mrf.mxu0
      %1479 = vmatprep.mubr.bf16.mxu0 0
      %1480 = vmatmul.mubr.bf16.gmra.mxu0 %v1367
      %v1481 = vpop.f32.mrf.mxu0
      %v1482 = vadd.f32 0.0, %v1481
      %v1483 = vpop.f32.mrf.mxu0
      %v1484 = vpop.f32.mrf.mxu0
      %v1485 = vadd.f32 0.0, %v1484
      %v1486 = vpop.f32.mrf.mxu0
      %1487 = vmatprep.mubr.bf16.mxu0 0
      %1488 = vmatmul.mubr.bf16.gmra.mxu0 %v1370
      %v1489 = vpop.f32.mrf.mxu0
      %v1490 = vadd.f32 0.0, %v1489
      %v1491 = vpop.f32.mrf.mxu0
      %v1492 = vpop.f32.mrf.mxu0
      %v1493 = vadd.f32 0.0, %v1492
      %v1494 = vpop.f32.mrf.mxu0
      %1495 = vmatprep.mubr.bf16.mxu0 0
      %1496 = vmatmul.mubr.bf16.gmra.mxu0 %v1373
      %v1497 = vpop.f32.mrf.mxu0
      %v1498 = vadd.f32 0.0, %v1497
      %v1499 = vpop.f32.mrf.mxu0
      %v1500 = vpop.f32.mrf.mxu0
      %v1501 = vadd.f32 0.0, %v1500
      %v1502 = vpop.f32.mrf.mxu0
      %1503 = vmatprep.mubr.bf16.mxu0 0
      %1504 = vmatmul.mubr.bf16.gmra.mxu0 %v1376
      %v1505 = vpop.f32.mrf.mxu0
      %v1506 = vadd.f32 0.0, %v1505
      %v1507 = vpop.f32.mrf.mxu0
      %v1508 = vpop.f32.mrf.mxu0
      %v1509 = vadd.f32 0.0, %v1508
      %v1510 = vpop.f32.mrf.mxu0
      %1511 = vmatprep.mubr.bf16.mxu0 0
      %1512 = vmatmul.mubr.bf16.gmra.mxu0 %v1379
      %v1513 = vpop.f32.mrf.mxu0
      %v1514 = vadd.f32 0.0, %v1513
      %v1515 = vpop.f32.mrf.mxu0
      %v1516 = vpop.f32.mrf.mxu0
      %v1517 = vadd.f32 0.0, %v1516
      %v1518 = vpop.f32.mrf.mxu0
      %1519 = vmatprep.mubr.bf16.mxu0 0
      %1520 = vmatmul.mubr.bf16.gmra.mxu0 %v1382
      %v1521 = vpop.f32.mrf.mxu0
      %v1522 = vadd.f32 0.0, %v1521
      %v1523 = vpop.f32.mrf.mxu0
      %v1524 = vpop.f32.mrf.mxu0
      %v1525 = vadd.f32 0.0, %v1524
      %v1526 = vpop.f32.mrf.mxu0
      %1527 = vmatprep.mubr.bf16.mxu0 0
      %1528 = vmatmul.mubr.bf16.gmra.mxu0 %v1385
      %v1529 = vpop.f32.mrf.mxu0
      %v1530 = vadd.f32 0.0, %v1529
      %v1531 = vpop.f32.mrf.mxu0
      %v1532 = vpop.f32.mrf.mxu0
      %v1533 = vadd.f32 0.0, %v1532
      %v1534 = vpop.f32.mrf.mxu0
      %1535 = vmatprep.mubr.bf16.mxu0 0
      %1536 = vmatmul.mubr.bf16.gmra.mxu0 %v1388
      %v1537 = vpop.f32.mrf.mxu0
      %v1538 = vadd.f32 0.0, %v1537
      %v1539 = vpop.f32.mrf.mxu0
      %v1540 = vpop.f32.mrf.mxu0
      %v1541 = vadd.f32 0.0, %v1540
      %v1542 = vpop.f32.mrf.mxu0
      %1543 = vmatprep.mubr.bf16.mxu0 0
      %1544 = vmatmul.mubr.bf16.gmra.mxu0 %v1391
      %v1545 = vpop.f32.mrf.mxu0
      %v1546 = vadd.f32 0.0, %v1545
      %v1547 = vpop.f32.mrf.mxu0
      %v1548 = vpop.f32.mrf.mxu0
      %v1549 = vadd.f32 0.0, %v1548
      %v1550 = vpop.f32.mrf.mxu0
      %1551 = vmatprep.mubr.bf16.mxu0 0
      %1552 = vmatmul.mubr.bf16.gmra.mxu0 %v1394
      %v1553 = vpop.f32.mrf.mxu0
      %v1554 = vadd.f32 0.0, %v1553
      %v1555 = vpop.f32.mrf.mxu0
      %v1556 = vpop.f32.mrf.mxu0
      %v1557 = vadd.f32 0.0, %v1556
      %v1558 = vpop.f32.mrf.mxu0
      %1559 = vdwg.mxu0
      %v1560 = vadd.f32 %v1042, %v1434
      %v1561 = vadd.f32 %v1045, %v1437
      %v1562 = vadd.f32 %v1050, %v1442
      %v1563 = vadd.f32 %v1053, %v1445
      %v1564 = vadd.f32 %v1058, %v1450
      %v1565 = vadd.f32 %v1061, %v1453
      %v1566 = vadd.f32 %v1066, %v1458
      %v1567 = vadd.f32 %v1069, %v1461
      %v1568 = vadd.f32 %v1074, %v1466
      %v1569 = vadd.f32 %v1077, %v1469
      %v1570 = vadd.f32 %v1082, %v1474
      %v1571 = vadd.f32 %v1085, %v1477
      %v1572 = vadd.f32 %v1090, %v1482
      %v1573 = vadd.f32 %v1093, %v1485
      %v1574 = vadd.f32 %v1098, %v1490
      %v1575 = vadd.f32 %v1101, %v1493
      %v1576 = vadd.f32 %v1106, %v1498
      %v1577 = vadd.f32 %v1109, %v1501
      %v1578 = vadd.f32 %v1114, %v1506
      %v1579 = vadd.f32 %v1117, %v1509
      %v1580 = vadd.f32 %v1122, %v1514
      %v1581 = vadd.f32 %v1125, %v1517
      %v1582 = vadd.f32 %v1130, %v1522
      %v1583 = vadd.f32 %v1133, %v1525
      %v1584 = vadd.f32 %v1138, %v1530
      %v1585 = vadd.f32 %v1141, %v1533
      %v1586 = vadd.f32 %v1146, %v1538
      %v1587 = vadd.f32 %v1149, %v1541
      %v1588 = vadd.f32 %v1154, %v1546
      %v1589 = vadd.f32 %v1157, %v1549
      %v1590 = vadd.f32 %v1162, %v1554
      %v1591 = vadd.f32 %v1165, %v1557
      %v1592 = vld [vmem:[%s1 + $0x4] sm:$0xc]
      %v1595 = vunpack.c.l.b16 %v215
      %v1596 = vunpack.c.l.b16 %v216
      %v1597 = vpack.c.b16 %v1596, %v1595
      %v1599 = vunpack.c.l.b16 %v1592
      %v1600 = vpack.c.b16 %v1599, %v1599
      %v1601 = vrot.slane %v1600, 2
      %v1603 = vsel %vm662, %v1597, 0
      %v1606 = vsel %vm711, %v1601, 0
      %1608 = vmatprep.subr.bf16.mxu0 0
      %1609 = vmatpush1.bf16.msra.mxu0 0
      %1610 = vmatprep.subr.bf16.mxu0 0
      %1611 = vmatpush1.bf16.msra.mxu0 0
      %1612 = vmatprep.subr.bf16.mxu0 0
      %1613 = vmatpush1.bf16.msra.mxu0 0
      %1614 = vmatprep.subr.bf16.mxu0 0
      %1615 = vmatpush1.bf16.msra.mxu0 0
      %1616 = vmatprep.subr.bf16.mxu0 0
      %1617 = vmatpush1.bf16.msra.mxu0 0
      %1618 = vmatprep.subr.bf16.mxu0 0
      %1619 = vmatpush1.bf16.msra.mxu0 0
      %1620 = vmatprep.subr.bf16.mxu0 0
      %1621 = vmatpush1.bf16.msra.mxu0 0
      %1622 = vmatprep.subr.bf16.mxu0 0
      %1623 = vmatpush1.bf16.msra.mxu0 %v1606
      %1624 = vmatprep.subr.bf16.mxu0 0
      %1625 = vmatpush2.bf16.msra.mxu0 0
      %1626 = vmatprep.subr.bf16.mxu0 0
      %1627 = vmatpush2.bf16.msra.mxu0 0
      %1628 = vmatprep.subr.bf16.mxu0 0
      %1629 = vmatpush2.bf16.msra.mxu0 0
      %1630 = vmatprep.subr.bf16.mxu0 0
      %1631 = vmatpush2.bf16.msra.mxu0 0
      %1632 = vmatprep.subr.bf16.mxu0 0
      %1633 = vmatpush2.bf16.msra.mxu0 0
      %1634 = vmatprep.subr.bf16.mxu0 0
      %1635 = vmatpush2.bf16.msra.mxu0 0
      %1636 = vmatprep.subr.bf16.mxu0 0
      %1637 = vmatpush2.bf16.msra.mxu0 0
      %1638 = vmatprep.subr.bf16.mxu0 0
      %1639 = vmatpush2.bf16.msra.mxu0 0
      %1640 = vmatprep.mubr.bf16.mxu0 0
      %1641 = vmatmul.mubr.bf16.gmra.mxu0 %v960
      %v1642 = vpop.f32.mrf.mxu0
      %v1643 = vadd.f32 0.0, %v1642
      %v1644 = vpop.f32.mrf.mxu0
      %v1645 = vpop.f32.mrf.mxu0
      %v1646 = vadd.f32 0.0, %v1645
      %v1647 = vpop.f32.mrf.mxu0
      %1648 = vmatprep.mubr.bf16.mxu0 0
      %1649 = vmatmul.mubr.bf16.gmra.mxu0 %v963
      %v1650 = vpop.f32.mrf.mxu0
      %v1651 = vadd.f32 0.0, %v1650
      %v1652 = vpop.f32.mrf.mxu0
      %v1653 = vpop.f32.mrf.mxu0
      %v1654 = vadd.f32 0.0, %v1653
      %v1655 = vpop.f32.mrf.mxu0
      %1656 = vmatprep.mubr.bf16.mxu0 0
      %1657 = vmatmul.mubr.bf16.gmra.mxu0 %v966
      %v1658 = vpop.f32.mrf.mxu0
      %v1659 = vadd.f32 0.0, %v1658
      %v1660 = vpop.f32.mrf.mxu0
      %v1661 = vpop.f32.mrf.mxu0
      %v1662 = vadd.f32 0.0, %v1661
      %v1663 = vpop.f32.mrf.mxu0
      %1664 = vmatprep.mubr.bf16.mxu0 0
      %1665 = vmatmul.mubr.bf16.gmra.mxu0 %v969
      %v1666 = vpop.f32.mrf.mxu0
      %v1667 = vadd.f32 0.0, %v1666
      %v1668 = vpop.f32.mrf.mxu0
      %v1669 = vpop.f32.mrf.mxu0
      %v1670 = vadd.f32 0.0, %v1669
      %v1671 = vpop.f32.mrf.mxu0
      %1672 = vmatprep.mubr.bf16.mxu0 0
      %1673 = vmatmul.mubr.bf16.gmra.mxu0 %v972
      %v1674 = vpop.f32.mrf.mxu0
      %v1675 = vadd.f32 0.0, %v1674
      %v1676 = vpop.f32.mrf.mxu0
      %v1677 = vpop.f32.mrf.mxu0
      %v1678 = vadd.f32 0.0, %v1677
      %v1679 = vpop.f32.mrf.mxu0
      %1680 = vmatprep.mubr.bf16.mxu0 0
      %1681 = vmatmul.mubr.bf16.gmra.mxu0 %v975
      %v1682 = vpop.f32.mrf.mxu0
      %v1683 = vadd.f32 0.0, %v1682
      %v1684 = vpop.f32.mrf.mxu0
      %v1685 = vpop.f32.mrf.mxu0
      %v1686 = vadd.f32 0.0, %v1685
      %v1687 = vpop.f32.mrf.mxu0
      %1688 = vmatprep.mubr.bf16.mxu0 0
      %1689 = vmatmul.mubr.bf16.gmra.mxu0 %v978
      %v1690 = vpop.f32.mrf.mxu0
      %v1691 = vadd.f32 0.0, %v1690
      %v1692 = vpop.f32.mrf.mxu0
      %v1693 = vpop.f32.mrf.mxu0
      %v1694 = vadd.f32 0.0, %v1693
      %v1695 = vpop.f32.mrf.mxu0
      %1696 = vmatprep.mubr.bf16.mxu0 0
      %1697 = vmatmul.mubr.bf16.gmra.mxu0 %v981
      %v1698 = vpop.f32.mrf.mxu0
      %v1699 = vadd.f32 0.0, %v1698
      %v1700 = vpop.f32.mrf.mxu0
      %v1701 = vpop.f32.mrf.mxu0
      %v1702 = vadd.f32 0.0, %v1701
      %v1703 = vpop.f32.mrf.mxu0
      %1704 = vmatprep.mubr.bf16.mxu0 0
      %1705 = vmatmul.mubr.bf16.gmra.mxu0 %v984
      %v1706 = vpop.f32.mrf.mxu0
      %v1707 = vadd.f32 0.0, %v1706
      %v1708 = vpop.f32.mrf.mxu0
      %v1709 = vpop.f32.mrf.mxu0
      %v1710 = vadd.f32 0.0, %v1709
      %v1711 = vpop.f32.mrf.mxu0
      %1712 = vmatprep.mubr.bf16.mxu0 0
      %1713 = vmatmul.mubr.bf16.gmra.mxu0 %v987
      %v1714 = vpop.f32.mrf.mxu0
      %v1715 = vadd.f32 0.0, %v1714
      %v1716 = vpop.f32.mrf.mxu0
      %v1717 = vpop.f32.mrf.mxu0
      %v1718 = vadd.f32 0.0, %v1717
      %v1719 = vpop.f32.mrf.mxu0
      %1720 = vmatprep.mubr.bf16.mxu0 0
      %1721 = vmatmul.mubr.bf16.gmra.mxu0 %v990
      %v1722 = vpop.f32.mrf.mxu0
      %v1723 = vadd.f32 0.0, %v1722
      %v1724 = vpop.f32.mrf.mxu0
      %v1725 = vpop.f32.mrf.mxu0
      %v1726 = vadd.f32 0.0, %v1725
      %v1727 = vpop.f32.mrf.mxu0
      %1728 = vmatprep.mubr.bf16.mxu0 0
      %1729 = vmatmul.mubr.bf16.gmra.mxu0 %v993
      %v1730 = vpop.f32.mrf.mxu0
      %v1731 = vadd.f32 0.0, %v1730
      %v1732 = vpop.f32.mrf.mxu0
      %v1733 = vpop.f32.mrf.mxu0
      %v1734 = vadd.f32 0.0, %v1733
      %v1735 = vpop.f32.mrf.mxu0
      %1736 = vmatprep.mubr.bf16.mxu0 0
      %1737 = vmatmul.mubr.bf16.gmra.mxu0 %v996
      %v1738 = vpop.f32.mrf.mxu0
      %v1739 = vadd.f32 0.0, %v1738
      %v1740 = vpop.f32.mrf.mxu0
      %v1741 = vpop.f32.mrf.mxu0
      %v1742 = vadd.f32 0.0, %v1741
      %v1743 = vpop.f32.mrf.mxu0
      %1744 = vmatprep.mubr.bf16.mxu0 0
      %1745 = vmatmul.mubr.bf16.gmra.mxu0 %v999
      %v1746 = vpop.f32.mrf.mxu0
      %v1747 = vadd.f32 0.0, %v1746
      %v1748 = vpop.f32.mrf.mxu0
      %v1749 = vpop.f32.mrf.mxu0
      %v1750 = vadd.f32 0.0, %v1749
      %v1751 = vpop.f32.mrf.mxu0
      %1752 = vmatprep.mubr.bf16.mxu0 0
      %1753 = vmatmul.mubr.bf16.gmra.mxu0 %v1002
      %v1754 = vpop.f32.mrf.mxu0
      %v1755 = vadd.f32 0.0, %v1754
      %v1756 = vpop.f32.mrf.mxu0
      %v1757 = vpop.f32.mrf.mxu0
      %v1758 = vadd.f32 0.0, %v1757
      %v1759 = vpop.f32.mrf.mxu0
      %1760 = vmatprep.mubr.bf16.mxu0 0
      %1761 = vmatmul.mubr.bf16.gmra.mxu0 %v1603
      %v1762 = vpop.f32.mrf.mxu0
      %v1763 = vadd.f32 0.0, %v1762
      %v1764 = vpop.f32.mrf.mxu0
      %v1765 = vpop.f32.mrf.mxu0
      %v1766 = vadd.f32 0.0, %v1765
      %v1767 = vpop.f32.mrf.mxu0
      %1768 = vdwg.mxu0
      %v1769 = vadd.f32 %v1560, %v1643
      %v1770 = vadd.f32 %v1561, %v1646
      %v1771 = vadd.f32 %v1562, %v1651
      %v1772 = vadd.f32 %v1563, %v1654
      %v1773 = vadd.f32 %v1564, %v1659
      %v1774 = vadd.f32 %v1565, %v1662
      %v1775 = vadd.f32 %v1566, %v1667
      %v1776 = vadd.f32 %v1567, %v1670
      %v1777 = vadd.f32 %v1568, %v1675
      %v1778 = vadd.f32 %v1569, %v1678
      %v1779 = vadd.f32 %v1570, %v1683
      %v1780 = vadd.f32 %v1571, %v1686
      %v1781 = vadd.f32 %v1572, %v1691
      %v1782 = vadd.f32 %v1573, %v1694
      %v1783 = vadd.f32 %v1574, %v1699
      %v1784 = vadd.f32 %v1575, %v1702
      %v1785 = vadd.f32 %v1576, %v1707
      %v1786 = vadd.f32 %v1577, %v1710
      %v1787 = vadd.f32 %v1578, %v1715
      %v1788 = vadd.f32 %v1579, %v1718
      %v1789 = vadd.f32 %v1580, %v1723
      %v1790 = vadd.f32 %v1581, %v1726
      %v1791 = vadd.f32 %v1582, %v1731
      %v1792 = vadd.f32 %v1583, %v1734
      %v1793 = vadd.f32 %v1584, %v1739
      %v1794 = vadd.f32 %v1585, %v1742
      %v1795 = vadd.f32 %v1586, %v1747
      %v1796 = vadd.f32 %v1587, %v1750
      %v1797 = vadd.f32 %v1588, %v1755
      %v1798 = vadd.f32 %v1589, %v1758
      %v1799 = vadd.f32 %v1590, %v1763
      %v1800 = vadd.f32 %v1591, %v1766
      %v1802 = vshrl.u32 %v215, 16
      %v1804 = vrot.slane %v1802, 4
      %v1805 = vshll.u32 %v215, 16
      %v1807 = vrot.slane %v1805, 5
      %v1808 = vor.u32 %v1804, %v1807
      %v1809 = vrot.slane %v1808, 4
      %v1811 = vshll.u32 %v216, 16
      %v1813 = vrot.slane %v1811, 5
      %v1814 = vsel %vm224, %v1809, %v1813
      %v1815 = vshrl.u32 %v216, 16
      %v1817 = vrot.slane %v1815, 4
      %v1818 = vor.u32 %v1817, %v1813
      %v1819 = vrot.slane %v1818, 4
      %v1821 = vshll.u32 %v217, 16
      %v1823 = vrot.slane %v1821, 5
      %v1824 = vsel %vm224, %v1819, %v1823
      %v1825 = vld [vmem:[%s1 + $0x8] sm:$0x3]
      %v1826 = vunpack.c.l.b16 %v1814
      %v1827 = vunpack.c.l.b16 %v1824
      %v1828 = vpack.c.b16 %v1827, %v1826
      %v1830 = vsel %vm662, %v1828, 0
      %v1833 = vsel %vm711, %v1825, 0
      %1835 = vmatprep.subr.bf16.mxu0 0
      %1836 = vmatpush1.bf16.msra.mxu0 0
      %1837 = vmatprep.subr.bf16.mxu0 0
      %1838 = vmatpush1.bf16.msra.mxu0 0
      %1839 = vmatprep.subr.bf16.mxu0 0
      %1840 = vmatpush1.bf16.msra.mxu0 0
      %1841 = vmatprep.subr.bf16.mxu0 0
      %1842 = vmatpush1.bf16.msra.mxu0 0
      %1843 = vmatprep.subr.bf16.mxu0 0
      %1844 = vmatpush1.bf16.msra.mxu0 0
      %1845 = vmatprep.subr.bf16.mxu0 0
      %1846 = vmatpush1.bf16.msra.mxu0 0
      %1847 = vmatprep.subr.bf16.mxu0 0
      %1848 = vmatpush1.bf16.msra.mxu0 0
      %1849 = vmatprep.subr.bf16.mxu0 0
      %1850 = vmatpush1.bf16.msra.mxu0 %v1833
      %1851 = vmatprep.subr.bf16.mxu0 0
      %1852 = vmatpush2.bf16.msra.mxu0 0
      %1853 = vmatprep.subr.bf16.mxu0 0
      %1854 = vmatpush2.bf16.msra.mxu0 0
      %1855 = vmatprep.subr.bf16.mxu0 0
      %1856 = vmatpush2.bf16.msra.mxu0 0
      %1857 = vmatprep.subr.bf16.mxu0 0
      %1858 = vmatpush2.bf16.msra.mxu0 0
      %1859 = vmatprep.subr.bf16.mxu0 0
      %1860 = vmatpush2.bf16.msra.mxu0 0
      %1861 = vmatprep.subr.bf16.mxu0 0
      %1862 = vmatpush2.bf16.msra.mxu0 0
      %1863 = vmatprep.subr.bf16.mxu0 0
      %1864 = vmatpush2.bf16.msra.mxu0 0
      %1865 = vmatprep.subr.bf16.mxu0 0
      %1866 = vmatpush2.bf16.msra.mxu0 0
      %1867 = vmatprep.mubr.bf16.mxu0 0
      %1868 = vmatmul.mubr.bf16.gmra.mxu0 %v667
      %v1869 = vpop.f32.mrf.mxu0
      %v1870 = vadd.f32 0.0, %v1869
      %v1871 = vpop.f32.mrf.mxu0
      %v1872 = vpop.f32.mrf.mxu0
      %v1873 = vadd.f32 0.0, %v1872
      %v1874 = vpop.f32.mrf.mxu0
      %1875 = vmatprep.mubr.bf16.mxu0 0
      %1876 = vmatmul.mubr.bf16.gmra.mxu0 %v670
      %v1877 = vpop.f32.mrf.mxu0
      %v1878 = vadd.f32 0.0, %v1877
      %v1879 = vpop.f32.mrf.mxu0
      %v1880 = vpop.f32.mrf.mxu0
      %v1881 = vadd.f32 0.0, %v1880
      %v1882 = vpop.f32.mrf.mxu0
      %1883 = vmatprep.mubr.bf16.mxu0 0
      %1884 = vmatmul.mubr.bf16.gmra.mxu0 %v673
      %v1885 = vpop.f32.mrf.mxu0
      %v1886 = vadd.f32 0.0, %v1885
      %v1887 = vpop.f32.mrf.mxu0
      %v1888 = vpop.f32.mrf.mxu0
      %v1889 = vadd.f32 0.0, %v1888
      %v1890 = vpop.f32.mrf.mxu0
      %1891 = vmatprep.mubr.bf16.mxu0 0
      %1892 = vmatmul.mubr.bf16.gmra.mxu0 %v676
      %v1893 = vpop.f32.mrf.mxu0
      %v1894 = vadd.f32 0.0, %v1893
      %v1895 = vpop.f32.mrf.mxu0
      %v1896 = vpop.f32.mrf.mxu0
      %v1897 = vadd.f32 0.0, %v1896
      %v1898 = vpop.f32.mrf.mxu0
      %1899 = vmatprep.mubr.bf16.mxu0 0
      %1900 = vmatmul.mubr.bf16.gmra.mxu0 %v679
      %v1901 = vpop.f32.mrf.mxu0
      %v1902 = vadd.f32 0.0, %v1901
      %v1903 = vpop.f32.mrf.mxu0
      %v1904 = vpop.f32.mrf.mxu0
      %v1905 = vadd.f32 0.0, %v1904
      %v1906 = vpop.f32.mrf.mxu0
      %1907 = vmatprep.mubr.bf16.mxu0 0
      %1908 = vmatmul.mubr.bf16.gmra.mxu0 %v682
      %v1909 = vpop.f32.mrf.mxu0
      %v1910 = vadd.f32 0.0, %v1909
      %v1911 = vpop.f32.mrf.mxu0
      %v1912 = vpop.f32.mrf.mxu0
      %v1913 = vadd.f32 0.0, %v1912
      %v1914 = vpop.f32.mrf.mxu0
      %1915 = vmatprep.mubr.bf16.mxu0 0
      %1916 = vmatmul.mubr.bf16.gmra.mxu0 %v685
      %v1917 = vpop.f32.mrf.mxu0
      %v1918 = vadd.f32 0.0, %v1917
      %v1919 = vpop.f32.mrf.mxu0
      %v1920 = vpop.f32.mrf.mxu0
      %v1921 = vadd.f32 0.0, %v1920
      %v1922 = vpop.f32.mrf.mxu0
      %1923 = vmatprep.mubr.bf16.mxu0 0
      %1924 = vmatmul.mubr.bf16.gmra.mxu0 %v688
      %v1925 = vpop.f32.mrf.mxu0
      %v1926 = vadd.f32 0.0, %v1925
      %v1927 = vpop.f32.mrf.mxu0
      %v1928 = vpop.f32.mrf.mxu0
      %v1929 = vadd.f32 0.0, %v1928
      %v1930 = vpop.f32.mrf.mxu0
      %1931 = vmatprep.mubr.bf16.mxu0 0
      %1932 = vmatmul.mubr.bf16.gmra.mxu0 %v691
      %v1933 = vpop.f32.mrf.mxu0
      %v1934 = vadd.f32 0.0, %v1933
      %v1935 = vpop.f32.mrf.mxu0
      %v1936 = vpop.f32.mrf.mxu0
      %v1937 = vadd.f32 0.0, %v1936
      %v1938 = vpop.f32.mrf.mxu0
      %1939 = vmatprep.mubr.bf16.mxu0 0
      %1940 = vmatmul.mubr.bf16.gmra.mxu0 %v694
      %v1941 = vpop.f32.mrf.mxu0
      %v1942 = vadd.f32 0.0, %v1941
      %v1943 = vpop.f32.mrf.mxu0
      %v1944 = vpop.f32.mrf.mxu0
      %v1945 = vadd.f32 0.0, %v1944
      %v1946 = vpop.f32.mrf.mxu0
      %1947 = vmatprep.mubr.bf16.mxu0 0
      %1948 = vmatmul.mubr.bf16.gmra.mxu0 %v697
      %v1949 = vpop.f32.mrf.mxu0
      %v1950 = vadd.f32 0.0, %v1949
      %v1951 = vpop.f32.mrf.mxu0
      %v1952 = vpop.f32.mrf.mxu0
      %v1953 = vadd.f32 0.0, %v1952
      %v1954 = vpop.f32.mrf.mxu0
      %1955 = vmatprep.mubr.bf16.mxu0 0
      %1956 = vmatmul.mubr.bf16.gmra.mxu0 %v700
      %v1957 = vpop.f32.mrf.mxu0
      %v1958 = vadd.f32 0.0, %v1957
      %v1959 = vpop.f32.mrf.mxu0
      %v1960 = vpop.f32.mrf.mxu0
      %v1961 = vadd.f32 0.0, %v1960
      %v1962 = vpop.f32.mrf.mxu0
      %1963 = vmatprep.mubr.bf16.mxu0 0
      %1964 = vmatmul.mubr.bf16.gmra.mxu0 %v703
      %v1965 = vpop.f32.mrf.mxu0
      %v1966 = vadd.f32 0.0, %v1965
      %v1967 = vpop.f32.mrf.mxu0
      %v1968 = vpop.f32.mrf.mxu0
      %v1969 = vadd.f32 0.0, %v1968
      %v1970 = vpop.f32.mrf.mxu0
      %1971 = vmatprep.mubr.bf16.mxu0 0
      %1972 = vmatmul.mubr.bf16.gmra.mxu0 %v706
      %v1973 = vpop.f32.mrf.mxu0
      %v1974 = vadd.f32 0.0, %v1973
      %v1975 = vpop.f32.mrf.mxu0
      %v1976 = vpop.f32.mrf.mxu0
      %v1977 = vadd.f32 0.0, %v1976
      %v1978 = vpop.f32.mrf.mxu0
      %1979 = vmatprep.mubr.bf16.mxu0 0
      %1980 = vmatmul.mubr.bf16.gmra.mxu0 %v709
      %v1981 = vpop.f32.mrf.mxu0
      %v1982 = vadd.f32 0.0, %v1981
      %v1983 = vpop.f32.mrf.mxu0
      %v1984 = vpop.f32.mrf.mxu0
      %v1985 = vadd.f32 0.0, %v1984
      %v1986 = vpop.f32.mrf.mxu0
      %1987 = vmatprep.mubr.bf16.mxu0 0
      %1988 = vmatmul.mubr.bf16.gmra.mxu0 %v1830
      %v1989 = vpop.f32.mrf.mxu0
      %v1990 = vadd.f32 0.0, %v1989
      %v1991 = vpop.f32.mrf.mxu0
      %v1992 = vpop.f32.mrf.mxu0
      %v1993 = vadd.f32 0.0, %v1992
      %v1994 = vpop.f32.mrf.mxu0
      %1995 = vdwg.mxu0
      %v1996 = vadd.f32 %v1769, %v1870
      %v1997 = vadd.f32 %v1770, %v1873
      %v1998 = vadd.f32 %v1771, %v1878
      %v1999 = vadd.f32 %v1772, %v1881
      %v2000 = vadd.f32 %v1773, %v1886
      %v2001 = vadd.f32 %v1774, %v1889
      %v2002 = vadd.f32 %v1775, %v1894
      %v2003 = vadd.f32 %v1776, %v1897
      %v2004 = vadd.f32 %v1777, %v1902
      %v2005 = vadd.f32 %v1778, %v1905
      %v2006 = vadd.f32 %v1779, %v1910
      %v2007 = vadd.f32 %v1780, %v1913
      %v2008 = vadd.f32 %v1781, %v1918
      %v2009 = vadd.f32 %v1782, %v1921
      %v2010 = vadd.f32 %v1783, %v1926
      %v2011 = vadd.f32 %v1784, %v1929
      %v2012 = vadd.f32 %v1785, %v1934
      %v2013 = vadd.f32 %v1786, %v1937
      %v2014 = vadd.f32 %v1787, %v1942
      %v2015 = vadd.f32 %v1788, %v1945
      %v2016 = vadd.f32 %v1789, %v1950
      %v2017 = vadd.f32 %v1790, %v1953
      %v2018 = vadd.f32 %v1791, %v1958
      %v2019 = vadd.f32 %v1792, %v1961
      %v2020 = vadd.f32 %v1793, %v1966
      %v2021 = vadd.f32 %v1794, %v1969
      %v2022 = vadd.f32 %v1795, %v1974
      %v2023 = vadd.f32 %v1796, %v1977
      %v2024 = vadd.f32 %v1797, %v1982
      %v2025 = vadd.f32 %v1798, %v1985
      %v2026 = vadd.f32 %v1799, %v1990
      %v2027 = vadd.f32 %v1800, %v1993
      %v2029 = vrot.slane %v215, 5
      %v2030 = vrot.slane %v2029, 4
      %v2031 = vrot.slane %v216, 5
      %v2032 = vsel %vm1186, %v2030, %v2031
      %v2033 = vrot.slane %v2031, 4
      %v2034 = vrot.slane %v217, 5
      %v2035 = vsel %vm1186, %v2033, %v2034
      %v2036 = vld [vmem:[%s1 + $0x8] sm:$0xc]
      %v2037 = vunpack.c.l.b16 %v2032
      %v2038 = vunpack.c.l.b16 %v2035
      %v2039 = vpack.c.b16 %v2038, %v2037
      %v2041 = vunpack.c.l.b16 %v2036
      %v2042 = vpack.c.b16 %v2041, %v2041
      %v2043 = vrot.slane %v2042, 2
      %v2045 = vsel %vm662, %v2039, 0
      %v2048 = vsel %vm711, %v2043, 0
      %2050 = vmatprep.subr.bf16.mxu0 0
      %2051 = vmatpush1.bf16.msra.mxu0 0
      %2052 = vmatprep.subr.bf16.mxu0 0
      %2053 = vmatpush1.bf16.msra.mxu0 0
      %2054 = vmatprep.subr.bf16.mxu0 0
      %2055 = vmatpush1.bf16.msra.mxu0 0
      %2056 = vmatprep.subr.bf16.mxu0 0
      %2057 = vmatpush1.bf16.msra.mxu0 0
      %2058 = vmatprep.subr.bf16.mxu0 0
      %2059 = vmatpush1.bf16.msra.mxu0 0
      %2060 = vmatprep.subr.bf16.mxu0 0
      %2061 = vmatpush1.bf16.msra.mxu0 0
      %2062 = vmatprep.subr.bf16.mxu0 0
      %2063 = vmatpush1.bf16.msra.mxu0 0
      %2064 = vmatprep.subr.bf16.mxu0 0
      %2065 = vmatpush1.bf16.msra.mxu0 %v2048
      %2066 = vmatprep.subr.bf16.mxu0 0
      %2067 = vmatpush2.bf16.msra.mxu0 0
      %2068 = vmatprep.subr.bf16.mxu0 0
      %2069 = vmatpush2.bf16.msra.mxu0 0
      %2070 = vmatprep.subr.bf16.mxu0 0
      %2071 = vmatpush2.bf16.msra.mxu0 0
      %2072 = vmatprep.subr.bf16.mxu0 0
      %2073 = vmatpush2.bf16.msra.mxu0 0
      %2074 = vmatprep.subr.bf16.mxu0 0
      %2075 = vmatpush2.bf16.msra.mxu0 0
      %2076 = vmatprep.subr.bf16.mxu0 0
      %2077 = vmatpush2.bf16.msra.mxu0 0
      %2078 = vmatprep.subr.bf16.mxu0 0
      %2079 = vmatpush2.bf16.msra.mxu0 0
      %2080 = vmatprep.subr.bf16.mxu0 0
      %2081 = vmatpush2.bf16.msra.mxu0 0
      %2082 = vmatprep.mubr.bf16.mxu0 0
      %2083 = vmatmul.mubr.bf16.gmra.mxu0 %v1352
      %v2084 = vpop.f32.mrf.mxu0
      %v2085 = vadd.f32 0.0, %v2084
      %v2086 = vpop.f32.mrf.mxu0
      %v2087 = vpop.f32.mrf.mxu0
      %v2088 = vadd.f32 0.0, %v2087
      %v2089 = vpop.f32.mrf.mxu0
      %2090 = vmatprep.mubr.bf16.mxu0 0
      %2091 = vmatmul.mubr.bf16.gmra.mxu0 %v1355
      %v2092 = vpop.f32.mrf.mxu0
      %v2093 = vadd.f32 0.0, %v2092
      %v2094 = vpop.f32.mrf.mxu0
      %v2095 = vpop.f32.mrf.mxu0
      %v2096 = vadd.f32 0.0, %v2095
      %v2097 = vpop.f32.mrf.mxu0
      %2098 = vmatprep.mubr.bf16.mxu0 0
      %2099 = vmatmul.mubr.bf16.gmra.mxu0 %v1358
      %v2100 = vpop.f32.mrf.mxu0
      %v2101 = vadd.f32 0.0, %v2100
      %v2102 = vpop.f32.mrf.mxu0
      %v2103 = vpop.f32.mrf.mxu0
      %v2104 = vadd.f32 0.0, %v2103
      %v2105 = vpop.f32.mrf.mxu0
      %2106 = vmatprep.mubr.bf16.mxu0 0
      %2107 = vmatmul.mubr.bf16.gmra.mxu0 %v1361
      %v2108 = vpop.f32.mrf.mxu0
      %v2109 = vadd.f32 0.0, %v2108
      %v2110 = vpop.f32.mrf.mxu0
      %v2111 = vpop.f32.mrf.mxu0
      %v2112 = vadd.f32 0.0, %v2111
      %v2113 = vpop.f32.mrf.mxu0
      %2114 = vmatprep.mubr.bf16.mxu0 0
      %2115 = vmatmul.mubr.bf16.gmra.mxu0 %v1364
      %v2116 = vpop.f32.mrf.mxu0
      %v2117 = vadd.f32 0.0, %v2116
      %v2118 = vpop.f32.mrf.mxu0
      %v2119 = vpop.f32.mrf.mxu0
      %v2120 = vadd.f32 0.0, %v2119
      %v2121 = vpop.f32.mrf.mxu0
      %2122 = vmatprep.mubr.bf16.mxu0 0
      %2123 = vmatmul.mubr.bf16.gmra.mxu0 %v1367
      %v2124 = vpop.f32.mrf.mxu0
      %v2125 = vadd.f32 0.0, %v2124
      %v2126 = vpop.f32.mrf.mxu0
      %v2127 = vpop.f32.mrf.mxu0
      %v2128 = vadd.f32 0.0, %v2127
      %v2129 = vpop.f32.mrf.mxu0
      %2130 = vmatprep.mubr.bf16.mxu0 0
      %2131 = vmatmul.mubr.bf16.gmra.mxu0 %v1370
      %v2132 = vpop.f32.mrf.mxu0
      %v2133 = vadd.f32 0.0, %v2132
      %v2134 = vpop.f32.mrf.mxu0
      %v2135 = vpop.f32.mrf.mxu0
      %v2136 = vadd.f32 0.0, %v2135
      %v2137 = vpop.f32.mrf.mxu0
      %2138 = vmatprep.mubr.bf16.mxu0 0
      %2139 = vmatmul.mubr.bf16.gmra.mxu0 %v1373
      %v2140 = vpop.f32.mrf.mxu0
      %v2141 = vadd.f32 0.0, %v2140
      %v2142 = vpop.f32.mrf.mxu0
      %v2143 = vpop.f32.mrf.mxu0
      %v2144 = vadd.f32 0.0, %v2143
      %v2145 = vpop.f32.mrf.mxu0
      %2146 = vmatprep.mubr.bf16.mxu0 0
      %2147 = vmatmul.mubr.bf16.gmra.mxu0 %v1376
      %v2148 = vpop.f32.mrf.mxu0
      %v2149 = vadd.f32 0.0, %v2148
      %v2150 = vpop.f32.mrf.mxu0
      %v2151 = vpop.f32.mrf.mxu0
      %v2152 = vadd.f32 0.0, %v2151
      %v2153 = vpop.f32.mrf.mxu0
      %2154 = vmatprep.mubr.bf16.mxu0 0
      %2155 = vmatmul.mubr.bf16.gmra.mxu0 %v1379
      %v2156 = vpop.f32.mrf.mxu0
      %v2157 = vadd.f32 0.0, %v2156
      %v2158 = vpop.f32.mrf.mxu0
      %v2159 = vpop.f32.mrf.mxu0
      %v2160 = vadd.f32 0.0, %v2159
      %v2161 = vpop.f32.mrf.mxu0
      %2162 = vmatprep.mubr.bf16.mxu0 0
      %2163 = vmatmul.mubr.bf16.gmra.mxu0 %v1382
      %v2164 = vpop.f32.mrf.mxu0
      %v2165 = vadd.f32 0.0, %v2164
      %v2166 = vpop.f32.mrf.mxu0
      %v2167 = vpop.f32.mrf.mxu0
      %v2168 = vadd.f32 0.0, %v2167
      %v2169 = vpop.f32.mrf.mxu0
      %2170 = vmatprep.mubr.bf16.mxu0 0
      %2171 = vmatmul.mubr.bf16.gmra.mxu0 %v1385
      %v2172 = vpop.f32.mrf.mxu0
      %v2173 = vadd.f32 0.0, %v2172
      %v2174 = vpop.f32.mrf.mxu0
      %v2175 = vpop.f32.mrf.mxu0
      %v2176 = vadd.f32 0.0, %v2175
      %v2177 = vpop.f32.mrf.mxu0
      %2178 = vmatprep.mubr.bf16.mxu0 0
      %2179 = vmatmul.mubr.bf16.gmra.mxu0 %v1388
      %v2180 = vpop.f32.mrf.mxu0
      %v2181 = vadd.f32 0.0, %v2180
      %v2182 = vpop.f32.mrf.mxu0
      %v2183 = vpop.f32.mrf.mxu0
      %v2184 = vadd.f32 0.0, %v2183
      %v2185 = vpop.f32.mrf.mxu0
      %2186 = vmatprep.mubr.bf16.mxu0 0
      %2187 = vmatmul.mubr.bf16.gmra.mxu0 %v1391
      %v2188 = vpop.f32.mrf.mxu0
      %v2189 = vadd.f32 0.0, %v2188
      %v2190 = vpop.f32.mrf.mxu0
      %v2191 = vpop.f32.mrf.mxu0
      %v2192 = vadd.f32 0.0, %v2191
      %v2193 = vpop.f32.mrf.mxu0
      %2194 = vmatprep.mubr.bf16.mxu0 0
      %2195 = vmatmul.mubr.bf16.gmra.mxu0 %v1394
      %v2196 = vpop.f32.mrf.mxu0
      %v2197 = vadd.f32 0.0, %v2196
      %v2198 = vpop.f32.mrf.mxu0
      %v2199 = vpop.f32.mrf.mxu0
      %v2200 = vadd.f32 0.0, %v2199
      %v2201 = vpop.f32.mrf.mxu0
      %2202 = vmatprep.mubr.bf16.mxu0 0
      %2203 = vmatmul.mubr.bf16.gmra.mxu0 %v2045
      %v2204 = vpop.f32.mrf.mxu0
      %v2205 = vadd.f32 0.0, %v2204
      %v2206 = vpop.f32.mrf.mxu0
      %v2207 = vpop.f32.mrf.mxu0
      %v2208 = vadd.f32 0.0, %v2207
      %v2209 = vpop.f32.mrf.mxu0
      %2210 = vdwg.mxu0
      %v2211 = vadd.f32 %v1996, %v2085
      %v2212 = vadd.f32 %v1997, %v2088
      %v2213 = vadd.f32 %v1998, %v2093
      %v2214 = vadd.f32 %v1999, %v2096
      %v2215 = vadd.f32 %v2000, %v2101
      %v2216 = vadd.f32 %v2001, %v2104
      %v2217 = vadd.f32 %v2002, %v2109
      %v2218 = vadd.f32 %v2003, %v2112
      %v2219 = vadd.f32 %v2004, %v2117
      %v2220 = vadd.f32 %v2005, %v2120
      %v2221 = vadd.f32 %v2006, %v2125
      %v2222 = vadd.f32 %v2007, %v2128
      %v2223 = vadd.f32 %v2008, %v2133
      %v2224 = vadd.f32 %v2009, %v2136
      %v2225 = vadd.f32 %v2010, %v2141
      %v2226 = vadd.f32 %v2011, %v2144
      %v2227 = vadd.f32 %v2012, %v2149
      %v2228 = vadd.f32 %v2013, %v2152
      %v2229 = vadd.f32 %v2014, %v2157
      %v2230 = vadd.f32 %v2015, %v2160
      %v2231 = vadd.f32 %v2016, %v2165
      %v2232 = vadd.f32 %v2017, %v2168
      %v2233 = vadd.f32 %v2018, %v2173
      %v2234 = vadd.f32 %v2019, %v2176
      %v2235 = vadd.f32 %v2020, %v2181
      %v2236 = vadd.f32 %v2021, %v2184
      %v2237 = vadd.f32 %v2022, %v2189
      %v2238 = vadd.f32 %v2023, %v2192
      %v2239 = vadd.f32 %v2024, %v2197
      %v2240 = vadd.f32 %v2025, %v2200
      %v2241 = vadd.f32 %v2026, %v2205
      %v2242 = vadd.f32 %v2027, %v2208
      %v2243 = vld [vmem:[%s1 + $0xc] sm:$0x3]
      %v2246 = vunpack.c.l.b16 %v218
      %v2247 = vunpack.c.l.b16 %v219
      %v2248 = vpack.c.b16 %v2247, %v2246
      %v2250 = vsel %vm662, %v2248, 0
      %v2253 = vsel %vm711, %v2243, 0
      %2255 = vmatprep.subr.bf16.mxu0 0
      %2256 = vmatpush1.bf16.msra.mxu0 0
      %2257 = vmatprep.subr.bf16.mxu0 0
      %2258 = vmatpush1.bf16.msra.mxu0 0
      %2259 = vmatprep.subr.bf16.mxu0 0
      %2260 = vmatpush1.bf16.msra.mxu0 0
      %2261 = vmatprep.subr.bf16.mxu0 0
      %2262 = vmatpush1.bf16.msra.mxu0 0
      %2263 = vmatprep.subr.bf16.mxu0 0
      %2264 = vmatpush1.bf16.msra.mxu0 0
      %2265 = vmatprep.subr.bf16.mxu0 0
      %2266 = vmatpush1.bf16.msra.mxu0 0
      %2267 = vmatprep.subr.bf16.mxu0 0
      %2268 = vmatpush1.bf16.msra.mxu0 0
      %2269 = vmatprep.subr.bf16.mxu0 0
      %2270 = vmatpush1.bf16.msra.mxu0 %v2253
      %2271 = vmatprep.subr.bf16.mxu0 0
      %2272 = vmatpush2.bf16.msra.mxu0 0
      %2273 = vmatprep.subr.bf16.mxu0 0
      %2274 = vmatpush2.bf16.msra.mxu0 0
      %2275 = vmatprep.subr.bf16.mxu0 0
      %2276 = vmatpush2.bf16.msra.mxu0 0
      %2277 = vmatprep.subr.bf16.mxu0 0
      %2278 = vmatpush2.bf16.msra.mxu0 0
      %2279 = vmatprep.subr.bf16.mxu0 0
      %2280 = vmatpush2.bf16.msra.mxu0 0
      %2281 = vmatprep.subr.bf16.mxu0 0
      %2282 = vmatpush2.bf16.msra.mxu0 0
      %2283 = vmatprep.subr.bf16.mxu0 0
      %2284 = vmatpush2.bf16.msra.mxu0 0
      %2285 = vmatprep.subr.bf16.mxu0 0
      %2286 = vmatpush2.bf16.msra.mxu0 0
      %2287 = vmatprep.mubr.bf16.mxu0 0
      %2288 = vmatmul.mubr.bf16.gmra.mxu0 %v963
      %v2289 = vpop.f32.mrf.mxu0
      %v2290 = vadd.f32 0.0, %v2289
      %v2291 = vpop.f32.mrf.mxu0
      %v2292 = vpop.f32.mrf.mxu0
      %v2293 = vadd.f32 0.0, %v2292
      %v2294 = vpop.f32.mrf.mxu0
      %2295 = vmatprep.mubr.bf16.mxu0 0
      %2296 = vmatmul.mubr.bf16.gmra.mxu0 %v966
      %v2297 = vpop.f32.mrf.mxu0
      %v2298 = vadd.f32 0.0, %v2297
      %v2299 = vpop.f32.mrf.mxu0
      %v2300 = vpop.f32.mrf.mxu0
      %v2301 = vadd.f32 0.0, %v2300
      %v2302 = vpop.f32.mrf.mxu0
      %2303 = vmatprep.mubr.bf16.mxu0 0
      %2304 = vmatmul.mubr.bf16.gmra.mxu0 %v969
      %v2305 = vpop.f32.mrf.mxu0
      %v2306 = vadd.f32 0.0, %v2305
      %v2307 = vpop.f32.mrf.mxu0
      %v2308 = vpop.f32.mrf.mxu0
      %v2309 = vadd.f32 0.0, %v2308
      %v2310 = vpop.f32.mrf.mxu0
      %2311 = vmatprep.mubr.bf16.mxu0 0
      %2312 = vmatmul.mubr.bf16.gmra.mxu0 %v972
      %v2313 = vpop.f32.mrf.mxu0
      %v2314 = vadd.f32 0.0, %v2313
      %v2315 = vpop.f32.mrf.mxu0
      %v2316 = vpop.f32.mrf.mxu0
      %v2317 = vadd.f32 0.0, %v2316
      %v2318 = vpop.f32.mrf.mxu0
      %2319 = vmatprep.mubr.bf16.mxu0 0
      %2320 = vmatmul.mubr.bf16.gmra.mxu0 %v975
      %v2321 = vpop.f32.mrf.mxu0
      %v2322 = vadd.f32 0.0, %v2321
      %v2323 = vpop.f32.mrf.mxu0
      %v2324 = vpop.f32.mrf.mxu0
      %v2325 = vadd.f32 0.0, %v2324
      %v2326 = vpop.f32.mrf.mxu0
      %2327 = vmatprep.mubr.bf16.mxu0 0
      %2328 = vmatmul.mubr.bf16.gmra.mxu0 %v978
      %v2329 = vpop.f32.mrf.mxu0
      %v2330 = vadd.f32 0.0, %v2329
      %v2331 = vpop.f32.mrf.mxu0
      %v2332 = vpop.f32.mrf.mxu0
      %v2333 = vadd.f32 0.0, %v2332
      %v2334 = vpop.f32.mrf.mxu0
      %2335 = vmatprep.mubr.bf16.mxu0 0
      %2336 = vmatmul.mubr.bf16.gmra.mxu0 %v981
      %v2337 = vpop.f32.mrf.mxu0
      %v2338 = vadd.f32 0.0, %v2337
      %v2339 = vpop.f32.mrf.mxu0
      %v2340 = vpop.f32.mrf.mxu0
      %v2341 = vadd.f32 0.0, %v2340
      %v2342 = vpop.f32.mrf.mxu0
      %2343 = vmatprep.mubr.bf16.mxu0 0
      %2344 = vmatmul.mubr.bf16.gmra.mxu0 %v984
      %v2345 = vpop.f32.mrf.mxu0
      %v2346 = vadd.f32 0.0, %v2345
      %v2347 = vpop.f32.mrf.mxu0
      %v2348 = vpop.f32.mrf.mxu0
      %v2349 = vadd.f32 0.0, %v2348
      %v2350 = vpop.f32.mrf.mxu0
      %2351 = vmatprep.mubr.bf16.mxu0 0
      %2352 = vmatmul.mubr.bf16.gmra.mxu0 %v987
      %v2353 = vpop.f32.mrf.mxu0
      %v2354 = vadd.f32 0.0, %v2353
      %v2355 = vpop.f32.mrf.mxu0
      %v2356 = vpop.f32.mrf.mxu0
      %v2357 = vadd.f32 0.0, %v2356
      %v2358 = vpop.f32.mrf.mxu0
      %2359 = vmatprep.mubr.bf16.mxu0 0
      %2360 = vmatmul.mubr.bf16.gmra.mxu0 %v990
      %v2361 = vpop.f32.mrf.mxu0
      %v2362 = vadd.f32 0.0, %v2361
      %v2363 = vpop.f32.mrf.mxu0
      %v2364 = vpop.f32.mrf.mxu0
      %v2365 = vadd.f32 0.0, %v2364
      %v2366 = vpop.f32.mrf.mxu0
      %2367 = vmatprep.mubr.bf16.mxu0 0
      %2368 = vmatmul.mubr.bf16.gmra.mxu0 %v993
      %v2369 = vpop.f32.mrf.mxu0
      %v2370 = vadd.f32 0.0, %v2369
      %v2371 = vpop.f32.mrf.mxu0
      %v2372 = vpop.f32.mrf.mxu0
      %v2373 = vadd.f32 0.0, %v2372
      %v2374 = vpop.f32.mrf.mxu0
      %2375 = vmatprep.mubr.bf16.mxu0 0
      %2376 = vmatmul.mubr.bf16.gmra.mxu0 %v996
      %v2377 = vpop.f32.mrf.mxu0
      %v2378 = vadd.f32 0.0, %v2377
      %v2379 = vpop.f32.mrf.mxu0
      %v2380 = vpop.f32.mrf.mxu0
      %v2381 = vadd.f32 0.0, %v2380
      %v2382 = vpop.f32.mrf.mxu0
      %2383 = vmatprep.mubr.bf16.mxu0 0
      %2384 = vmatmul.mubr.bf16.gmra.mxu0 %v999
      %v2385 = vpop.f32.mrf.mxu0
      %v2386 = vadd.f32 0.0, %v2385
      %v2387 = vpop.f32.mrf.mxu0
      %v2388 = vpop.f32.mrf.mxu0
      %v2389 = vadd.f32 0.0, %v2388
      %v2390 = vpop.f32.mrf.mxu0
      %2391 = vmatprep.mubr.bf16.mxu0 0
      %2392 = vmatmul.mubr.bf16.gmra.mxu0 %v1002
      %v2393 = vpop.f32.mrf.mxu0
      %v2394 = vadd.f32 0.0, %v2393
      %v2395 = vpop.f32.mrf.mxu0
      %v2396 = vpop.f32.mrf.mxu0
      %v2397 = vadd.f32 0.0, %v2396
      %v2398 = vpop.f32.mrf.mxu0
      %2399 = vmatprep.mubr.bf16.mxu0 0
      %2400 = vmatmul.mubr.bf16.gmra.mxu0 %v1603
      %v2401 = vpop.f32.mrf.mxu0
      %v2402 = vadd.f32 0.0, %v2401
      %v2403 = vpop.f32.mrf.mxu0
      %v2404 = vpop.f32.mrf.mxu0
      %v2405 = vadd.f32 0.0, %v2404
      %v2406 = vpop.f32.mrf.mxu0
      %2407 = vmatprep.mubr.bf16.mxu0 0
      %2408 = vmatmul.mubr.bf16.gmra.mxu0 %v2250
      %v2409 = vpop.f32.mrf.mxu0
      %v2410 = vadd.f32 0.0, %v2409
      %v2411 = vpop.f32.mrf.mxu0
      %v2412 = vpop.f32.mrf.mxu0
      %v2413 = vadd.f32 0.0, %v2412
      %v2414 = vpop.f32.mrf.mxu0
      %2415 = vdwg.mxu0
      %v2416 = vadd.f32 %v2211, %v2290
      %v2417 = vadd.f32 %v2212, %v2293
      %v2418 = vadd.f32 %v2213, %v2298
      %v2419 = vadd.f32 %v2214, %v2301
      %v2420 = vadd.f32 %v2215, %v2306
      %v2421 = vadd.f32 %v2216, %v2309
      %v2422 = vadd.f32 %v2217, %v2314
      %v2423 = vadd.f32 %v2218, %v2317
      %v2424 = vadd.f32 %v2219, %v2322
      %v2425 = vadd.f32 %v2220, %v2325
      %v2426 = vadd.f32 %v2221, %v2330
      %v2427 = vadd.f32 %v2222, %v2333
      %v2428 = vadd.f32 %v2223, %v2338
      %v2429 = vadd.f32 %v2224, %v2341
      %v2430 = vadd.f32 %v2225, %v2346
      %v2431 = vadd.f32 %v2226, %v2349
      %v2432 = vadd.f32 %v2227, %v2354
      %v2433 = vadd.f32 %v2228, %v2357
      %v2434 = vadd.f32 %v2229, %v2362
      %v2435 = vadd.f32 %v2230, %v2365
      %v2436 = vadd.f32 %v2231, %v2370
      %v2437 = vadd.f32 %v2232, %v2373
      %v2438 = vadd.f32 %v2233, %v2378
      %v2439 = vadd.f32 %v2234, %v2381
      %v2440 = vadd.f32 %v2235, %v2386
      %v2441 = vadd.f32 %v2236, %v2389
      %v2442 = vadd.f32 %v2237, %v2394
      %v2443 = vadd.f32 %v2238, %v2397
      %v2444 = vadd.f32 %v2239, %v2402
      %v2445 = vadd.f32 %v2240, %v2405
      %v2446 = vadd.f32 %v2241, %v2410
      %v2447 = vadd.f32 %v2242, %v2413
      %v2449 = vshrl.u32 %v218, 16
      %v2451 = vrot.slane %v2449, 4
      %v2452 = vshll.u32 %v218, 16
      %v2454 = vrot.slane %v2452, 5
      %v2455 = vor.u32 %v2451, %v2454
      %v2456 = vrot.slane %v2455, 4
      %v2458 = vshll.u32 %v219, 16
      %v2460 = vrot.slane %v2458, 5
      %v2461 = vsel %vm224, %v2456, %v2460
      %v2462 = vshrl.u32 %v219, 16
      %v2464 = vrot.slane %v2462, 4
      %v2465 = vor.u32 %v2464, %v2460
      %v2466 = vrot.slane %v2465, 4
      %v2468 = vshll.u32 %v220, 16
      %v2470 = vrot.slane %v2468, 5
      %v2471 = vsel %vm224, %v2466, %v2470
      %v2472 = vld [vmem:[%s1 + $0xc] sm:$0xc]
      %v2473 = vunpack.c.l.b16 %v2461
      %v2474 = vunpack.c.l.b16 %v2471
      %v2475 = vpack.c.b16 %v2474, %v2473
      %v2477 = vunpack.c.l.b16 %v2472
      %v2478 = vpack.c.b16 %v2477, %v2477
      %v2479 = vrot.slane %v2478, 2
      %v2481 = vsel %vm662, %v2475, 0
      %v2484 = vsel %vm711, %v2479, 0
      %2486 = vmatprep.subr.bf16.mxu0 0
      %2487 = vmatpush1.bf16.msra.mxu0 0
      %2488 = vmatprep.subr.bf16.mxu0 0
      %2489 = vmatpush1.bf16.msra.mxu0 0
      %2490 = vmatprep.subr.bf16.mxu0 0
      %2491 = vmatpush1.bf16.msra.mxu0 0
      %2492 = vmatprep.subr.bf16.mxu0 0
      %2493 = vmatpush1.bf16.msra.mxu0 0
      %2494 = vmatprep.subr.bf16.mxu0 0
      %2495 = vmatpush1.bf16.msra.mxu0 0
      %2496 = vmatprep.subr.bf16.mxu0 0
      %2497 = vmatpush1.bf16.msra.mxu0 0
      %2498 = vmatprep.subr.bf16.mxu0 0
      %2499 = vmatpush1.bf16.msra.mxu0 0
      %2500 = vmatprep.subr.bf16.mxu0 0
      %2501 = vmatpush1.bf16.msra.mxu0 %v2484
      %2502 = vmatprep.subr.bf16.mxu0 0
      %2503 = vmatpush2.bf16.msra.mxu0 0
      %2504 = vmatprep.subr.bf16.mxu0 0
      %2505 = vmatpush2.bf16.msra.mxu0 0
      %2506 = vmatprep.subr.bf16.mxu0 0
      %2507 = vmatpush2.bf16.msra.mxu0 0
      %2508 = vmatprep.subr.bf16.mxu0 0
      %2509 = vmatpush2.bf16.msra.mxu0 0
      %2510 = vmatprep.subr.bf16.mxu0 0
      %2511 = vmatpush2.bf16.msra.mxu0 0
      %2512 = vmatprep.subr.bf16.mxu0 0
      %2513 = vmatpush2.bf16.msra.mxu0 0
      %2514 = vmatprep.subr.bf16.mxu0 0
      %2515 = vmatpush2.bf16.msra.mxu0 0
      %2516 = vmatprep.subr.bf16.mxu0 0
      %2517 = vmatpush2.bf16.msra.mxu0 0
      %2518 = vmatprep.mubr.bf16.mxu0 0
      %2519 = vmatmul.mubr.bf16.gmra.mxu0 %v670
      %v2520 = vpop.f32.mrf.mxu0
      %v2521 = vadd.f32 0.0, %v2520
      %v2522 = vpop.f32.mrf.mxu0
      %v2523 = vpop.f32.mrf.mxu0
      %v2524 = vadd.f32 0.0, %v2523
      %v2525 = vpop.f32.mrf.mxu0
      %2526 = vmatprep.mubr.bf16.mxu0 0
      %2527 = vmatmul.mubr.bf16.gmra.mxu0 %v673
      %v2528 = vpop.f32.mrf.mxu0
      %v2529 = vadd.f32 0.0, %v2528
      %v2530 = vpop.f32.mrf.mxu0
      %v2531 = vpop.f32.mrf.mxu0
      %v2532 = vadd.f32 0.0, %v2531
      %v2533 = vpop.f32.mrf.mxu0
      %2534 = vmatprep.mubr.bf16.mxu0 0
      %2535 = vmatmul.mubr.bf16.gmra.mxu0 %v676
      %v2536 = vpop.f32.mrf.mxu0
      %v2537 = vadd.f32 0.0, %v2536
      %v2538 = vpop.f32.mrf.mxu0
      %v2539 = vpop.f32.mrf.mxu0
      %v2540 = vadd.f32 0.0, %v2539
      %v2541 = vpop.f32.mrf.mxu0
      %2542 = vmatprep.mubr.bf16.mxu0 0
      %2543 = vmatmul.mubr.bf16.gmra.mxu0 %v679
      %v2544 = vpop.f32.mrf.mxu0
      %v2545 = vadd.f32 0.0, %v2544
      %v2546 = vpop.f32.mrf.mxu0
      %v2547 = vpop.f32.mrf.mxu0
      %v2548 = vadd.f32 0.0, %v2547
      %v2549 = vpop.f32.mrf.mxu0
      %2550 = vmatprep.mubr.bf16.mxu0 0
      %2551 = vmatmul.mubr.bf16.gmra.mxu0 %v682
      %v2552 = vpop.f32.mrf.mxu0
      %v2553 = vadd.f32 0.0, %v2552
      %v2554 = vpop.f32.mrf.mxu0
      %v2555 = vpop.f32.mrf.mxu0
      %v2556 = vadd.f32 0.0, %v2555
      %v2557 = vpop.f32.mrf.mxu0
      %2558 = vmatprep.mubr.bf16.mxu0 0
      %2559 = vmatmul.mubr.bf16.gmra.mxu0 %v685
      %v2560 = vpop.f32.mrf.mxu0
      %v2561 = vadd.f32 0.0, %v2560
      %v2562 = vpop.f32.mrf.mxu0
      %v2563 = vpop.f32.mrf.mxu0
      %v2564 = vadd.f32 0.0, %v2563
      %v2565 = vpop.f32.mrf.mxu0
      %2566 = vmatprep.mubr.bf16.mxu0 0
      %2567 = vmatmul.mubr.bf16.gmra.mxu0 %v688
      %v2568 = vpop.f32.mrf.mxu0
      %v2569 = vadd.f32 0.0, %v2568
      %v2570 = vpop.f32.mrf.mxu0
      %v2571 = vpop.f32.mrf.mxu0
      %v2572 = vadd.f32 0.0, %v2571
      %v2573 = vpop.f32.mrf.mxu0
      %2574 = vmatprep.mubr.bf16.mxu0 0
      %2575 = vmatmul.mubr.bf16.gmra.mxu0 %v691
      %v2576 = vpop.f32.mrf.mxu0
      %v2577 = vadd.f32 0.0, %v2576
      %v2578 = vpop.f32.mrf.mxu0
      %v2579 = vpop.f32.mrf.mxu0
      %v2580 = vadd.f32 0.0, %v2579
      %v2581 = vpop.f32.mrf.mxu0
      %2582 = vmatprep.mubr.bf16.mxu0 0
      %2583 = vmatmul.mubr.bf16.gmra.mxu0 %v694
      %v2584 = vpop.f32.mrf.mxu0
      %v2585 = vadd.f32 0.0, %v2584
      %v2586 = vpop.f32.mrf.mxu0
      %v2587 = vpop.f32.mrf.mxu0
      %v2588 = vadd.f32 0.0, %v2587
      %v2589 = vpop.f32.mrf.mxu0
      %2590 = vmatprep.mubr.bf16.mxu0 0
      %2591 = vmatmul.mubr.bf16.gmra.mxu0 %v697
      %v2592 = vpop.f32.mrf.mxu0
      %v2593 = vadd.f32 0.0, %v2592
      %v2594 = vpop.f32.mrf.mxu0
      %v2595 = vpop.f32.mrf.mxu0
      %v2596 = vadd.f32 0.0, %v2595
      %v2597 = vpop.f32.mrf.mxu0
      %2598 = vmatprep.mubr.bf16.mxu0 0
      %2599 = vmatmul.mubr.bf16.gmra.mxu0 %v700
      %v2600 = vpop.f32.mrf.mxu0
      %v2601 = vadd.f32 0.0, %v2600
      %v2602 = vpop.f32.mrf.mxu0
      %v2603 = vpop.f32.mrf.mxu0
      %v2604 = vadd.f32 0.0, %v2603
      %v2605 = vpop.f32.mrf.mxu0
      %2606 = vmatprep.mubr.bf16.mxu0 0
      %2607 = vmatmul.mubr.bf16.gmra.mxu0 %v703
      %v2608 = vpop.f32.mrf.mxu0
      %v2609 = vadd.f32 0.0, %v2608
      %v2610 = vpop.f32.mrf.mxu0
      %v2611 = vpop.f32.mrf.mxu0
      %v2612 = vadd.f32 0.0, %v2611
      %v2613 = vpop.f32.mrf.mxu0
      %2614 = vmatprep.mubr.bf16.mxu0 0
      %2615 = vmatmul.mubr.bf16.gmra.mxu0 %v706
      %v2616 = vpop.f32.mrf.mxu0
      %v2617 = vadd.f32 0.0, %v2616
      %v2618 = vpop.f32.mrf.mxu0
      %v2619 = vpop.f32.mrf.mxu0
      %v2620 = vadd.f32 0.0, %v2619
      %v2621 = vpop.f32.mrf.mxu0
      %2622 = vmatprep.mubr.bf16.mxu0 0
      %2623 = vmatmul.mubr.bf16.gmra.mxu0 %v709
      %v2624 = vpop.f32.mrf.mxu0
      %v2625 = vadd.f32 0.0, %v2624
      %v2626 = vpop.f32.mrf.mxu0
      %v2627 = vpop.f32.mrf.mxu0
      %v2628 = vadd.f32 0.0, %v2627
      %v2629 = vpop.f32.mrf.mxu0
      %2630 = vmatprep.mubr.bf16.mxu0 0
      %2631 = vmatmul.mubr.bf16.gmra.mxu0 %v1830
      %v2632 = vpop.f32.mrf.mxu0
      %v2633 = vadd.f32 0.0, %v2632
      %v2634 = vpop.f32.mrf.mxu0
      %v2635 = vpop.f32.mrf.mxu0
      %v2636 = vadd.f32 0.0, %v2635
      %v2637 = vpop.f32.mrf.mxu0
      %2638 = vmatprep.mubr.bf16.mxu0 0
      %2639 = vmatmul.mubr.bf16.gmra.mxu0 %v2481
      %v2640 = vpop.f32.mrf.mxu0
      %v2641 = vadd.f32 0.0, %v2640
      %v2642 = vpop.f32.mrf.mxu0
      %v2643 = vpop.f32.mrf.mxu0
      %v2644 = vadd.f32 0.0, %v2643
      %v2645 = vpop.f32.mrf.mxu0
      %2646 = vdwg.mxu0
      %v2647 = vadd.f32 %v2416, %v2521
      %v2648 = vadd.f32 %v2417, %v2524
      %v2649 = vadd.f32 %v2418, %v2529
      %v2650 = vadd.f32 %v2419, %v2532
      %v2651 = vadd.f32 %v2420, %v2537
      %v2652 = vadd.f32 %v2421, %v2540
      %v2653 = vadd.f32 %v2422, %v2545
      %v2654 = vadd.f32 %v2423, %v2548
      %v2655 = vadd.f32 %v2424, %v2553
      %v2656 = vadd.f32 %v2425, %v2556
      %v2657 = vadd.f32 %v2426, %v2561
      %v2658 = vadd.f32 %v2427, %v2564
      %v2659 = vadd.f32 %v2428, %v2569
      %v2660 = vadd.f32 %v2429, %v2572
      %v2661 = vadd.f32 %v2430, %v2577
      %v2662 = vadd.f32 %v2431, %v2580
      %v2663 = vadd.f32 %v2432, %v2585
      %v2664 = vadd.f32 %v2433, %v2588
      %v2665 = vadd.f32 %v2434, %v2593
      %v2666 = vadd.f32 %v2435, %v2596
      %v2667 = vadd.f32 %v2436, %v2601
      %v2668 = vadd.f32 %v2437, %v2604
      %v2669 = vadd.f32 %v2438, %v2609
      %v2670 = vadd.f32 %v2439, %v2612
      %v2671 = vadd.f32 %v2440, %v2617
      %v2672 = vadd.f32 %v2441, %v2620
      %v2673 = vadd.f32 %v2442, %v2625
      %v2674 = vadd.f32 %v2443, %v2628
      %v2675 = vadd.f32 %v2444, %v2633
      %v2676 = vadd.f32 %v2445, %v2636
      %v2677 = vadd.f32 %v2446, %v2641
      %v2678 = vadd.f32 %v2447, %v2644
      %v2680 = vrot.slane %v218, 5
      %v2681 = vrot.slane %v2680, 4
      %v2682 = vrot.slane %v219, 5
      %v2683 = vsel %vm1186, %v2681, %v2682
      %v2684 = vrot.slane %v2682, 4
      %v2685 = vrot.slane %v220, 5
      %v2686 = vsel %vm1186, %v2684, %v2685
      %v2687 = vld [vmem:[%s1 + $0x10] sm:$0x3]
      %v2688 = vunpack.c.l.b16 %v2683
      %v2689 = vunpack.c.l.b16 %v2686
      %v2690 = vpack.c.b16 %v2689, %v2688
      %v2692 = vsel %vm662, %v2690, 0
      %v2695 = vsel %vm711, %v2687, 0
      %2697 = vmatprep.subr.bf16.mxu0 0
      %2698 = vmatpush1.bf16.msra.mxu0 0
      %2699 = vmatprep.subr.bf16.mxu0 0
      %2700 = vmatpush1.bf16.msra.mxu0 0
      %2701 = vmatprep.subr.bf16.mxu0 0
      %2702 = vmatpush1.bf16.msra.mxu0 0
      %2703 = vmatprep.subr.bf16.mxu0 0
      %2704 = vmatpush1.bf16.msra.mxu0 0
      %2705 = vmatprep.subr.bf16.mxu0 0
      %2706 = vmatpush1.bf16.msra.mxu0 0
      %2707 = vmatprep.subr.bf16.mxu0 0
      %2708 = vmatpush1.bf16.msra.mxu0 0
      %2709 = vmatprep.subr.bf16.mxu0 0
      %2710 = vmatpush1.bf16.msra.mxu0 0
      %2711 = vmatprep.subr.bf16.mxu0 0
      %2712 = vmatpush1.bf16.msra.mxu0 %v2695
      %2713 = vmatprep.subr.bf16.mxu0 0
      %2714 = vmatpush2.bf16.msra.mxu0 0
      %2715 = vmatprep.subr.bf16.mxu0 0
      %2716 = vmatpush2.bf16.msra.mxu0 0
      %2717 = vmatprep.subr.bf16.mxu0 0
      %2718 = vmatpush2.bf16.msra.mxu0 0
      %2719 = vmatprep.subr.bf16.mxu0 0
      %2720 = vmatpush2.bf16.msra.mxu0 0
      %2721 = vmatprep.subr.bf16.mxu0 0
      %2722 = vmatpush2.bf16.msra.mxu0 0
      %2723 = vmatprep.subr.bf16.mxu0 0
      %2724 = vmatpush2.bf16.msra.mxu0 0
      %2725 = vmatprep.subr.bf16.mxu0 0
      %2726 = vmatpush2.bf16.msra.mxu0 0
      %2727 = vmatprep.subr.bf16.mxu0 0
      %2728 = vmatpush2.bf16.msra.mxu0 0
      %2729 = vmatprep.mubr.bf16.mxu0 0
      %2730 = vmatmul.mubr.bf16.gmra.mxu0 %v1355
      %v2731 = vpop.f32.mrf.mxu0
      %v2732 = vadd.f32 0.0, %v2731
      %v2733 = vpop.f32.mrf.mxu0
      %v2734 = vpop.f32.mrf.mxu0
      %v2735 = vadd.f32 0.0, %v2734
      %v2736 = vpop.f32.mrf.mxu0
      %2737 = vmatprep.mubr.bf16.mxu0 0
      %2738 = vmatmul.mubr.bf16.gmra.mxu0 %v1358
      %v2739 = vpop.f32.mrf.mxu0
      %v2740 = vadd.f32 0.0, %v2739
      %v2741 = vpop.f32.mrf.mxu0
      %v2742 = vpop.f32.mrf.mxu0
      %v2743 = vadd.f32 0.0, %v2742
      %v2744 = vpop.f32.mrf.mxu0
      %2745 = vmatprep.mubr.bf16.mxu0 0
      %2746 = vmatmul.mubr.bf16.gmra.mxu0 %v1361
      %v2747 = vpop.f32.mrf.mxu0
      %v2748 = vadd.f32 0.0, %v2747
      %v2749 = vpop.f32.mrf.mxu0
      %v2750 = vpop.f32.mrf.mxu0
      %v2751 = vadd.f32 0.0, %v2750
      %v2752 = vpop.f32.mrf.mxu0
      %2753 = vmatprep.mubr.bf16.mxu0 0
      %2754 = vmatmul.mubr.bf16.gmra.mxu0 %v1364
      %v2755 = vpop.f32.mrf.mxu0
      %v2756 = vadd.f32 0.0, %v2755
      %v2757 = vpop.f32.mrf.mxu0
      %v2758 = vpop.f32.mrf.mxu0
      %v2759 = vadd.f32 0.0, %v2758
      %v2760 = vpop.f32.mrf.mxu0
      %2761 = vmatprep.mubr.bf16.mxu0 0
      %2762 = vmatmul.mubr.bf16.gmra.mxu0 %v1367
      %v2763 = vpop.f32.mrf.mxu0
      %v2764 = vadd.f32 0.0, %v2763
      %v2765 = vpop.f32.mrf.mxu0
      %v2766 = vpop.f32.mrf.mxu0
      %v2767 = vadd.f32 0.0, %v2766
      %v2768 = vpop.f32.mrf.mxu0
      %2769 = vmatprep.mubr.bf16.mxu0 0
      %2770 = vmatmul.mubr.bf16.gmra.mxu0 %v1370
      %v2771 = vpop.f32.mrf.mxu0
      %v2772 = vadd.f32 0.0, %v2771
      %v2773 = vpop.f32.mrf.mxu0
      %v2774 = vpop.f32.mrf.mxu0
      %v2775 = vadd.f32 0.0, %v2774
      %v2776 = vpop.f32.mrf.mxu0
      %2777 = vmatprep.mubr.bf16.mxu0 0
      %2778 = vmatmul.mubr.bf16.gmra.mxu0 %v1373
      %v2779 = vpop.f32.mrf.mxu0
      %v2780 = vadd.f32 0.0, %v2779
      %v2781 = vpop.f32.mrf.mxu0
      %v2782 = vpop.f32.mrf.mxu0
      %v2783 = vadd.f32 0.0, %v2782
      %v2784 = vpop.f32.mrf.mxu0
      %2785 = vmatprep.mubr.bf16.mxu0 0
      %2786 = vmatmul.mubr.bf16.gmra.mxu0 %v1376
      %v2787 = vpop.f32.mrf.mxu0
      %v2788 = vadd.f32 0.0, %v2787
      %v2789 = vpop.f32.mrf.mxu0
      %v2790 = vpop.f32.mrf.mxu0
      %v2791 = vadd.f32 0.0, %v2790
      %v2792 = vpop.f32.mrf.mxu0
      %2793 = vmatprep.mubr.bf16.mxu0 0
      %2794 = vmatmul.mubr.bf16.gmra.mxu0 %v1379
      %v2795 = vpop.f32.mrf.mxu0
      %v2796 = vadd.f32 0.0, %v2795
      %v2797 = vpop.f32.mrf.mxu0
      %v2798 = vpop.f32.mrf.mxu0
      %v2799 = vadd.f32 0.0, %v2798
      %v2800 = vpop.f32.mrf.mxu0
      %2801 = vmatprep.mubr.bf16.mxu0 0
      %2802 = vmatmul.mubr.bf16.gmra.mxu0 %v1382
      %v2803 = vpop.f32.mrf.mxu0
      %v2804 = vadd.f32 0.0, %v2803
      %v2805 = vpop.f32.mrf.mxu0
      %v2806 = vpop.f32.mrf.mxu0
      %v2807 = vadd.f32 0.0, %v2806
      %v2808 = vpop.f32.mrf.mxu0
      %2809 = vmatprep.mubr.bf16.mxu0 0
      %2810 = vmatmul.mubr.bf16.gmra.mxu0 %v1385
      %v2811 = vpop.f32.mrf.mxu0
      %v2812 = vadd.f32 0.0, %v2811
      %v2813 = vpop.f32.mrf.mxu0
      %v2814 = vpop.f32.mrf.mxu0
      %v2815 = vadd.f32 0.0, %v2814
      %v2816 = vpop.f32.mrf.mxu0
      %2817 = vmatprep.mubr.bf16.mxu0 0
      %2818 = vmatmul.mubr.bf16.gmra.mxu0 %v1388
      %v2819 = vpop.f32.mrf.mxu0
      %v2820 = vadd.f32 0.0, %v2819
      %v2821 = vpop.f32.mrf.mxu0
      %v2822 = vpop.f32.mrf.mxu0
      %v2823 = vadd.f32 0.0, %v2822
      %v2824 = vpop.f32.mrf.mxu0
      %2825 = vmatprep.mubr.bf16.mxu0 0
      %2826 = vmatmul.mubr.bf16.gmra.mxu0 %v1391
      %v2827 = vpop.f32.mrf.mxu0
      %v2828 = vadd.f32 0.0, %v2827
      %v2829 = vpop.f32.mrf.mxu0
      %v2830 = vpop.f32.mrf.mxu0
      %v2831 = vadd.f32 0.0, %v2830
      %v2832 = vpop.f32.mrf.mxu0
      %2833 = vmatprep.mubr.bf16.mxu0 0
      %2834 = vmatmul.mubr.bf16.gmra.mxu0 %v1394
      %v2835 = vpop.f32.mrf.mxu0
      %v2836 = vadd.f32 0.0, %v2835
      %v2837 = vpop.f32.mrf.mxu0
      %v2838 = vpop.f32.mrf.mxu0
      %v2839 = vadd.f32 0.0, %v2838
      %v2840 = vpop.f32.mrf.mxu0
      %2841 = vmatprep.mubr.bf16.mxu0 0
      %2842 = vmatmul.mubr.bf16.gmra.mxu0 %v2045
      %v2843 = vpop.f32.mrf.mxu0
      %v2844 = vadd.f32 0.0, %v2843
      %v2845 = vpop.f32.mrf.mxu0
      %v2846 = vpop.f32.mrf.mxu0
      %v2847 = vadd.f32 0.0, %v2846
      %v2848 = vpop.f32.mrf.mxu0
      %2849 = vmatprep.mubr.bf16.mxu0 0
      %2850 = vmatmul.mubr.bf16.gmra.mxu0 %v2692
      %v2851 = vpop.f32.mrf.mxu0
      %v2852 = vadd.f32 0.0, %v2851
      %v2853 = vpop.f32.mrf.mxu0
      %v2854 = vpop.f32.mrf.mxu0
      %v2855 = vadd.f32 0.0, %v2854
      %v2856 = vpop.f32.mrf.mxu0
      %2857 = vdwg.mxu0
      %v2858 = vadd.f32 %v2647, %v2732
      %v2859 = vadd.f32 %v2648, %v2735
      %v2860 = vadd.f32 %v2649, %v2740
      %v2861 = vadd.f32 %v2650, %v2743
      %v2862 = vadd.f32 %v2651, %v2748
      %v2863 = vadd.f32 %v2652, %v2751
      %v2864 = vadd.f32 %v2653, %v2756
      %v2865 = vadd.f32 %v2654, %v2759
      %v2866 = vadd.f32 %v2655, %v2764
      %v2867 = vadd.f32 %v2656, %v2767
      %v2868 = vadd.f32 %v2657, %v2772
      %v2869 = vadd.f32 %v2658, %v2775
      %v2870 = vadd.f32 %v2659, %v2780
      %v2871 = vadd.f32 %v2660, %v2783
      %v2872 = vadd.f32 %v2661, %v2788
      %v2873 = vadd.f32 %v2662, %v2791
      %v2874 = vadd.f32 %v2663, %v2796
      %v2875 = vadd.f32 %v2664, %v2799
      %v2876 = vadd.f32 %v2665, %v2804
      %v2877 = vadd.f32 %v2666, %v2807
      %v2878 = vadd.f32 %v2667, %v2812
      %v2879 = vadd.f32 %v2668, %v2815
      %v2880 = vadd.f32 %v2669, %v2820
      %v2881 = vadd.f32 %v2670, %v2823
      %v2882 = vadd.f32 %v2671, %v2828
      %v2883 = vadd.f32 %v2672, %v2831
      %v2884 = vadd.f32 %v2673, %v2836
      %v2885 = vadd.f32 %v2674, %v2839
      %v2886 = vadd.f32 %v2675, %v2844
      %v2887 = vadd.f32 %v2676, %v2847
      %v2888 = vadd.f32 %v2677, %v2852
      %v2889 = vadd.f32 %v2678, %v2855
      %v2890 = vadd.f32 %v2858, %v2859
      %v2891 = vadd.f32 %v2890, %v2860
      %v2892 = vadd.f32 %v2891, %v2861
      %v2893 = vadd.f32 %v2892, %v2862
      %v2894 = vadd.f32 %v2893, %v2863
      %v2895 = vadd.f32 %v2894, %v2864
      %v2896 = vadd.f32 %v2895, %v2865
      %v2897 = vadd.f32 %v2896, %v2866
      %v2898 = vadd.f32 %v2897, %v2867
      %v2899 = vadd.f32 %v2898, %v2868
      %v2900 = vadd.f32 %v2899, %v2869
      %v2901 = vadd.f32 %v2900, %v2870
      %v2902 = vadd.f32 %v2901, %v2871
      %v2903 = vadd.f32 %v2902, %v2872
      %v2904 = vadd.f32 %v2903, %v2873
      %v2905 = vadd.f32 %v2904, %v2874
      %v2906 = vadd.f32 %v2905, %v2875
      %v2907 = vadd.f32 %v2906, %v2876
      %v2908 = vadd.f32 %v2907, %v2877
      %v2909 = vadd.f32 %v2908, %v2878
      %v2910 = vadd.f32 %v2909, %v2879
      %v2911 = vadd.f32 %v2910, %v2880
      %v2912 = vadd.f32 %v2911, %v2881
      %v2913 = vadd.f32 %v2912, %v2882
      %v2914 = vadd.f32 %v2913, %v2883
      %v2915 = vadd.f32 %v2914, %v2884
      %v2916 = vadd.f32 %v2915, %v2885
      %v2917 = vadd.f32 %v2916, %v2886
      %v2918 = vadd.f32 %v2917, %v2887
      %v2919 = vadd.f32 %v2918, %v2888
      %v2920 = vadd.f32 %v2919, %v2889
      %v2921 = vrot.slane %v2920, 4
      %v2922 = vadd.f32 %v2920, %v2921
      %v2923 = vrot.slane %v2922, 2
      %v2924 = vadd.f32 %v2922, %v2923
      %v2925 = vrot.slane %v2924, 1
      %v2926 = vadd.f32 %v2924, %v2925
      %v2927 = vmul.f32 %v2926, 0.00390625
      %v2928 = vsub.f32 %v2858, %v2927
      %v2929 = vsub.f32 %v2859, %v2927
      %v2930 = vsub.f32 %v2860, %v2927
      %v2931 = vsub.f32 %v2861, %v2927
      %v2932 = vsub.f32 %v2862, %v2927
      %v2933 = vsub.f32 %v2863, %v2927
      %v2934 = vsub.f32 %v2864, %v2927
      %v2935 = vsub.f32 %v2865, %v2927
      %v2936 = vsub.f32 %v2866, %v2927
      %v2937 = vsub.f32 %v2867, %v2927
      %v2938 = vsub.f32 %v2868, %v2927
      %v2939 = vsub.f32 %v2869, %v2927
      %v2940 = vsub.f32 %v2870, %v2927
      %v2941 = vsub.f32 %v2871, %v2927
      %v2942 = vsub.f32 %v2872, %v2927
      %v2943 = vsub.f32 %v2873, %v2927
      %v2944 = vsub.f32 %v2874, %v2927
      %v2945 = vsub.f32 %v2875, %v2927
      %v2946 = vsub.f32 %v2876, %v2927
      %v2947 = vsub.f32 %v2877, %v2927
      %v2948 = vsub.f32 %v2878, %v2927
      %v2949 = vsub.f32 %v2879, %v2927
      %v2950 = vsub.f32 %v2880, %v2927
      %v2951 = vsub.f32 %v2881, %v2927
      %v2952 = vsub.f32 %v2882, %v2927
      %v2953 = vsub.f32 %v2883, %v2927
      %v2954 = vsub.f32 %v2884, %v2927
      %v2955 = vsub.f32 %v2885, %v2927
      %v2956 = vsub.f32 %v2886, %v2927
      %v2957 = vsub.f32 %v2887, %v2927
      %v2958 = vsub.f32 %v2888, %v2927
      %v2959 = vsub.f32 %v2889, %v2927
      %v2960 = vmul.f32 %v2928, %v2928
      %v2961 = vmul.f32 %v2929, %v2929
      %v2962 = vmul.f32 %v2930, %v2930
      %v2963 = vmul.f32 %v2931, %v2931
      %v2964 = vmul.f32 %v2932, %v2932
      %v2965 = vmul.f32 %v2933, %v2933
      %v2966 = vmul.f32 %v2934, %v2934
      %v2967 = vmul.f32 %v2935, %v2935
      %v2968 = vmul.f32 %v2936, %v2936
      %v2969 = vmul.f32 %v2937, %v2937
      %v2970 = vmul.f32 %v2938, %v2938
      %v2971 = vmul.f32 %v2939, %v2939
      %v2972 = vmul.f32 %v2940, %v2940
      %v2973 = vmul.f32 %v2941, %v2941
      %v2974 = vmul.f32 %v2942, %v2942
      %v2975 = vmul.f32 %v2943, %v2943
      %v2976 = vmul.f32 %v2944, %v2944
      %v2977 = vmul.f32 %v2945, %v2945
      %v2978 = vmul.f32 %v2946, %v2946
      %v2979 = vmul.f32 %v2947, %v2947
      %v2980 = vmul.f32 %v2948, %v2948
      %v2981 = vmul.f32 %v2949, %v2949
      %v2982 = vmul.f32 %v2950, %v2950
      %v2983 = vmul.f32 %v2951, %v2951
      %v2984 = vmul.f32 %v2952, %v2952
      %v2985 = vmul.f32 %v2953, %v2953
      %v2986 = vmul.f32 %v2954, %v2954
      %v2987 = vmul.f32 %v2955, %v2955
      %v2988 = vmul.f32 %v2956, %v2956
      %v2989 = vmul.f32 %v2957, %v2957
      %v2990 = vmul.f32 %v2958, %v2958
      %v2991 = vmul.f32 %v2959, %v2959
      %v2992 = vadd.f32 %v2960, %v2961
      %v2993 = vadd.f32 %v2992, %v2962
      %v2994 = vadd.f32 %v2993, %v2963
      %v2995 = vadd.f32 %v2994, %v2964
      %v2996 = vadd.f32 %v2995, %v2965
      %v2997 = vadd.f32 %v2996, %v2966
      %v2998 = vadd.f32 %v2997, %v2967
      %v2999 = vadd.f32 %v2998, %v2968
      %v3000 = vadd.f32 %v2999, %v2969
      %v3001 = vadd.f32 %v3000, %v2970
      %v3002 = vadd.f32 %v3001, %v2971
      %v3003 = vadd.f32 %v3002, %v2972
      %v3004 = vadd.f32 %v3003, %v2973
      %v3005 = vadd.f32 %v3004, %v2974
      %v3006 = vadd.f32 %v3005, %v2975
      %v3007 = vadd.f32 %v3006, %v2976
      %v3008 = vadd.f32 %v3007, %v2977
      %v3009 = vadd.f32 %v3008, %v2978
      %v3010 = vadd.f32 %v3009, %v2979
      %v3011 = vadd.f32 %v3010, %v2980
      %v3012 = vadd.f32 %v3011, %v2981
      %v3013 = vadd.f32 %v3012, %v2982
      %v3014 = vadd.f32 %v3013, %v2983
      %v3015 = vadd.f32 %v3014, %v2984
      %v3016 = vadd.f32 %v3015, %v2985
      %v3017 = vadd.f32 %v3016, %v2986
      %v3018 = vadd.f32 %v3017, %v2987
      %v3019 = vadd.f32 %v3018, %v2988
      %v3020 = vadd.f32 %v3019, %v2989
      %v3021 = vadd.f32 %v3020, %v2990
      %v3022 = vadd.f32 %v3021, %v2991
      %v3023 = vrot.slane %v3022, 4
      %v3024 = vadd.f32 %v3022, %v3023
      %v3025 = vrot.slane %v3024, 2
      %v3026 = vadd.f32 %v3024, %v3025
      %v3027 = vrot.slane %v3026, 1
      %v3028 = vadd.f32 %v3026, %v3027
      %vm3029 = vcmask 1040384
      %v3030 = vsel %vm3029, %v2927, %v3028
      %3031 = vst [vmem:[%s161] sm:$0x3] %v3030
      %p3032 = scmp.lt.s32.totalorder %s17, 1
      %s3033 = scalar_select %p3032, %s17, 1
      %p3034 = scmp.lt.s32.totalorder %s18, 0
      %s3035 = scalar_select %p3034, %s18, 0
      %s3036 = sadd.s32 %s3035, %s3033
      %s3037 = smul.addr %s3036, 2
      %s3038 = scalar_lea.vmem %s2, %s3037
      // Predicated region
      $region29: #{conv2d_bn.2} parent=27 // pred_check
        %p3039 = pneg %p92
      $region30: #{conv2d_bn.2} parent=27 // pred_check_branch
        %3041 = sbr.rel (%p3039) target = $region32
      $region31: #{conv2d_bn.2} parent=27 // pred_region
        _
      $region32: #{conv2d_bn.2} parent=27 // pred_fallthru
        _
    $region28: #{conv2d_bn.2} parent=5 // pred_fallthru
      _
    %p3042 = scmp.le.s32.totalorder 2, %s8
    // Predicated region
    $region33: #{conv2d_bn.2} parent=5 // pred_check
      %p3043 = pneg %p3042
    $region34: #{conv2d_bn.2} parent=5 // pred_check_branch
      %3045 = sbr.rel (%p3043) target = $region36
    $region35: #{conv2d_bn.2} parent=5 // pred_region
      %s3046 = ssub.s32 %s8, 2
      // Predicated region
      $region37: #{conv2d_bn.2} parent=35 // pred_check
        %p3047 = pneg %p98
      $region38: #{conv2d_bn.2} parent=35 // pred_check_branch
        %3049 = sbr.rel (%p3047) target = $region40
      $region39: #{conv2d_bn.2} parent=35 // pred_region
        %p3050 = scmp.lt.s32.totalorder %s19, 1
        %s3051 = scalar_select %p3050, %s19, 1
        %p3052 = scmp.lt.s32.totalorder %s20, 0
        %s3053 = scalar_select %p3052, %s20, 0
        %s3054 = sadd.s32 %s3053, %s3051
        %s3055 = smul.addr %s3054, 2
        %s3056 = scalar_lea.vmem %s2, %s3055
      $region40: #{conv2d_bn.2} parent=35 // pred_fallthru
        _
    $region36: #{conv2d_bn.2} parent=5 // pred_fallthru
      _
  $region6: #{conv2d_bn.2} parent=0 // loop_footer
    %s12 = sadd.s32 1, %s8
  $region7: #{conv2d_bn.2} parent=0 // loop_footer_branch
    %7 = sbr.rel target = $region3
  $region8: #{conv2d_bn.2} parent=0 // loop_exit
    _

// kernel: conv2d_bn.3
$region0: #{conv2d_bn.3}
  #allocation0 [shape = 'u32[]', space=smem, size = 0x4, offset = 0x4, fixed_abs, tag = 'smem constant byte address 0x4 - core index']
  #allocation1 [shape = 'u32[144,128]{1,0:T(1,128)}', space=vmem, size = 0x12000, scoped, tag = 'internal scratch']
  %s0 = inlined_call_operand.vmem [shape: bf16[2,18,18,4], index: 0, kind: input, shape index: {}]
  %s1 = inlined_call_operand.vmem [shape: bf16[36,128], index: 1, kind: input, shape index: {}]
  %s2 = inlined_call_operand.vmem [shape: f32[1,128], index: 2, kind: input, shape index: {}]
  %s3 = inlined_call_operand.vmem [shape: f32[1,128], index: 3, kind: input, shape index: {}]
  %s4 = inlined_call_operand.vmem [shape: f32[2,16,16,8], index: 4, kind: output, shape index: {}]
  %s5 = sld [smem:[#allocation0]]
  $region49: #{conv2d_bn.3} parent=0
    _
  %s7 = ssub.s32 1, %s5
  %s8 = scalar_select 0, %s7, %s5
  loop: start=0, step=1, limit=4
  $region2: #{conv2d_bn.3} parent=0 // loop_pre_header
    _
  $region3: #{conv2d_bn.3} parent=0 // loop_header
    %s10 = sphi 0, %s14
    %p11 = scmp.ge.s32.totalorder %s10, 4
    %s17 = sphi 0, %s29
    %s18 = sphi 0, %s25
    %s19 = sphi 0, %s17
    %s20 = sphi 0, %s18
    %s21 = sphi 0, %s19
    %s22 = sphi 0, %s20
    %s32 = sphi 0, %s34
    %s35 = sphi 0, %s32
    %s36 = sphi 0, %s35
    %s52 = sphi 0, %s36
    %s56 = sphi 0, %s56
    %s58 = sphi 0, %s56
    %s59 = sphi 0, %s58
    %s73 = sphi 0, %s59
    %s77 = sphi 0, %s77
    %s79 = sphi 0, %s77
    %s80 = sphi 0, %s79
    %s94 = sphi 0, %s80
    %s98 = sphi 0, %s98
    %s100 = sphi 0, %s98
    %s101 = sphi 0, %s100
    %s115 = sphi 0, %s101
    %s123 = sphi 0, %s125
    %s126 = sphi 0, %s123
    %s127 = sphi 0, %s126
    %s143 = sphi 0, %s127
  $region4: #{conv2d_bn.3} parent=0 // loop_header_branch
    %13 = sbr.rel (%p11) target = $region8
  $region5: #{conv2d_bn.3} parent=0 // loop_body
    %s15 = ssub.s32 %s10, 1
    %s16 = ssub.s32 %s10, 2
    %s23 = sadd.s32 1, %s18
    %p24 = scmp.ge.s32.totalorder %s23, 1
    %s25 = scalar_select %p24, 0, %s23
    %s26 = sadd.s32 1, %s17
    %s27 = scalar_select %p24, %s26, %s17
    %p28 = scmp.ge.s32.totalorder %s27, 2
    %s29 = scalar_select %p28, 0, %s27
    %s30 = ssub.s32 %s17, %s29
    %p31 = scmp.eq.s32.totalorder %s30, 0
    %s33 = sadd.s32 %s32, 1
    %s34 = scalar_select %p31, %s32, %s33
    %p37 = pneg %p31
    %p38 = scmp.eq.s32.totalorder %s10, 1
    %p39 = por %p37, %p38
    %p40 = scmp.ne.s32.totalorder %s32, %s35
    %p41 = scmp.eq.s32.totalorder %s10, 0
    %p42 = por %p40, %p41
    %p43 = scmp.ne.s32.totalorder %s32, %s35
    %p44 = scmp.eq.s32.totalorder %s15, 1
    %p45 = por %p43, %p44
    %p46 = scmp.ne.s32.totalorder %s35, %s36
    %p47 = scmp.eq.s32.totalorder %s15, 0
    %p48 = por %p46, %p47
    %p49 = scmp.ne.s32.totalorder %s35, %s36
    %p50 = scmp.eq.s32.totalorder %s16, 1
    %p51 = por %p49, %p50
    %p53 = scmp.ne.s32.totalorder %s36, %s52
    %p54 = scmp.eq.s32.totalorder %s16, 0
    %p55 = por %p53, %p54
    %s57 = sadd.s32 %s56, 1
    %p60 = scmp.eq.s32.totalorder %s10, 1
    %p61 = scmp.ne.s32.totalorder %s56, %s58
    %p62 = scmp.eq.s32.totalorder %s10, 0
    %p63 = por %p61, %p62
    %p64 = scmp.ne.s32.totalorder %s56, %s58
    %p65 = scmp.eq.s32.totalorder %s15, 1
    %p66 = por %p64, %p65
    %p67 = scmp.ne.s32.totalorder %s58, %s59
    %p68 = scmp.eq.s32.totalorder %s15, 0
    %p69 = por %p67, %p68
    %p70 = scmp.ne.s32.totalorder %s58, %s59
    %p71 = scmp.eq.s32.totalorder %s16, 1
    %p72 = por %p70, %p71
    %p74 = scmp.ne.s32.totalorder %s59, %s73
    %p75 = scmp.eq.s32.totalorder %s16, 0
    %p76 = por %p74, %p75
    %s78 = sadd.s32 %s77, 1
    %p81 = scmp.eq.s32.totalorder %s10, 1
    %p82 = scmp.ne.s32.totalorder %s77, %s79
    %p83 = scmp.eq.s32.totalorder %s10, 0
    %p84 = por %p82, %p83
    %p85 = scmp.ne.s32.totalorder %s77, %s79
    %p86 = scmp.eq.s32.totalorder %s15, 1
    %p87 = por %p85, %p86
    %p88 = scmp.ne.s32.totalorder %s79, %s80
    %p89 = scmp.eq.s32.totalorder %s15, 0
    %p90 = por %p88, %p89
    %p91 = scmp.ne.s32.totalorder %s79, %s80
    %p92 = scmp.eq.s32.totalorder %s16, 1
    %p93 = por %p91, %p92
    %p95 = scmp.ne.s32.totalorder %s80, %s94
    %p96 = scmp.eq.s32.totalorder %s16, 0
    %p97 = por %p95, %p96
    %s99 = sadd.s32 %s98, 1
    %p102 = scmp.eq.s32.totalorder %s10, 1
    %p103 = scmp.ne.s32.totalorder %s98, %s100
    %p104 = scmp.eq.s32.totalorder %s10, 0
    %p105 = por %p103, %p104
    %p106 = scmp.ne.s32.totalorder %s98, %s100
    %p107 = scmp.eq.s32.totalorder %s15, 1
    %p108 = por %p106, %p107
    %p109 = scmp.ne.s32.totalorder %s100, %s101
    %p110 = scmp.eq.s32.totalorder %s15, 0
    %p111 = por %p109, %p110
    %p112 = scmp.ne.s32.totalorder %s100, %s101
    %p113 = scmp.eq.s32.totalorder %s16, 1
    %p114 = por %p112, %p113
    %p116 = scmp.ne.s32.totalorder %s101, %s115
    %p117 = scmp.eq.s32.totalorder %s16, 0
    %p118 = por %p116, %p117
    %s119 = ssub.s32 %s17, %s29
    %s120 = ssub.s32 %s18, %s25
    %s121 = sor.u32 %s119, %s120
    %p122 = scmp.eq.s32.totalorder %s121, 0
    %s124 = sadd.s32 %s123, 1
    %s125 = scalar_select %p122, %s123, %s124
    %p128 = pneg %p122
    %p129 = scmp.eq.s32.totalorder %s10, 1
    %p130 = por %p128, %p129
    %p131 = scmp.ne.s32.totalorder %s123, %s126
    %p132 = scmp.eq.s32.totalorder %s10, 0
    %p133 = por %p131, %p132
    %p134 = scmp.ne.s32.totalorder %s123, %s126
    %p135 = scmp.eq.s32.totalorder %s15, 1
    %p136 = por %p134, %p135
    %p137 = scmp.ne.s32.totalorder %s126, %s127
    %p138 = scmp.eq.s32.totalorder %s15, 0
    %p139 = por %p137, %p138
    %p140 = scmp.ne.s32.totalorder %s126, %s127
    %p141 = scmp.eq.s32.totalorder %s16, 1
    %p142 = por %p140, %p141
    %p144 = scmp.ne.s32.totalorder %s127, %s143
    %p145 = scmp.eq.s32.totalorder %s16, 0
    %p146 = por %p144, %p145
    %p147 = scmp.le.s32.totalorder 1, %s10
    %p148 = scmp.lt.s32.totalorder %s10, 3
    %p149 = pnand %p147, %p148
    %p150 = pneg %p149
    // Predicated region
    $region9: #{conv2d_bn.3} parent=5 // pred_check
      _
    $region10: #{conv2d_bn.3} parent=5 // pred_check_branch
      %152 = sbr.rel (%p149) target = $region12
    $region11: #{conv2d_bn.3} parent=5 // pred_region
      %s153 = ssub.s32 %s10, 1
      // Predicated region
      $region13: #{conv2d_bn.3} parent=11 // pred_check
        %p154 = pneg %p69
      $region14: #{conv2d_bn.3} parent=11 // pred_check_branch
        %156 = sbr.rel (%p154) target = $region16
      $region15: #{conv2d_bn.3} parent=11 // pred_region
        _
      $region16: #{conv2d_bn.3} parent=11 // pred_fallthru
        _
      // Predicated region
      $region17: #{conv2d_bn.3} parent=11 // pred_check
        %p157 = pneg %p90
      $region18: #{conv2d_bn.3} parent=11 // pred_check_branch
        %159 = sbr.rel (%p157) target = $region20
      $region19: #{conv2d_bn.3} parent=11 // pred_region
        _
      $region20: #{conv2d_bn.3} parent=11 // pred_fallthru
        _
      // Predicated region
      $region21: #{conv2d_bn.3} parent=11 // pred_check
        %p160 = pneg %p111
      $region22: #{conv2d_bn.3} parent=11 // pred_check_branch
        %162 = sbr.rel (%p160) target = $region24
      $region23: #{conv2d_bn.3} parent=11 // pred_region
        _
      $region24: #{conv2d_bn.3} parent=11 // pred_fallthru
        _
    $region12: #{conv2d_bn.3} parent=5 // pred_fallthru
      _
    %p163 = scmp.lt.s32.totalorder %s10, 2
    // Predicated region
    $region25: #{conv2d_bn.3} parent=5 // pred_check
      %p164 = pneg %p163
    $region26: #{conv2d_bn.3} parent=5 // pred_check_branch
      %166 = sbr.rel (%p164) target = $region28
    $region27: #{conv2d_bn.3} parent=5 // pred_region
      // Predicated region
      $region29: #{conv2d_bn.3} parent=27 // pred_check
        %p167 = pneg %p42
      $region30: #{conv2d_bn.3} parent=27 // pred_check_branch
        %169 = sbr.rel (%p167) target = $region32
      $region31: #{conv2d_bn.3} parent=27 // pred_region
        %p170 = scmp.lt.s32.totalorder %s17, 1
        %s171 = scalar_select %p170, %s17, 1
        %s172 = smul.addr %s171, 54
        %s173 = smul.addr %s172, 4
        %s174 = scalar_lea.vmem %s0, %s173
      $region32: #{conv2d_bn.3} parent=27 // pred_fallthru
        _
    $region28: #{conv2d_bn.3} parent=5 // pred_fallthru
      _
    %p175 = scmp.le.s32.totalorder 1, %s10
    %p176 = scmp.lt.s32.totalorder %s10, 3
    %p177 = pnand %p175, %p176
    %p178 = pneg %p177
    // Predicated region
    $region33: #{conv2d_bn.3} parent=5 // pred_check
      _
    $region34: #{conv2d_bn.3} parent=5 // pred_check_branch
      %180 = sbr.rel (%p177) target = $region36
    $region35: #{conv2d_bn.3} parent=5 // pred_region
      %s181 = ssub.s32 %s10, 1
      %p182 = scmp.lt.s32.totalorder %s19, 1
      %s183 = scalar_select %p182, %s19, 1
      %s184 = smul.addr %s183, 54
      %s185 = smul.addr %s184, 4
      %s186 = scalar_lea.vmem %s0, %s185
      %p187 = pneg %p48
      %p188 = pneg %p45
      %p189 = pneg %p69
      %p190 = pneg %p66
      %p191 = pneg %p90
      %p192 = pneg %p87
      %p193 = pneg %p111
      %p194 = pneg %p108
      %p195 = pneg %p139
      %p196 = pneg %p136
      %s197 = smul.u32 16, %s20
      %p198 = scmp.lt.s32.totalorder %s19, 1
      %s199 = scalar_select %p198, %s19, 1
      %p200 = scmp.lt.s32.totalorder %s197, 15
      %s201 = scalar_select %p200, %s197, 15
      %s202 = smul.addr %s201, 2
      %s203 = smul.addr %s199, 32
      %s204 = sadd.s32 %s202, %s203
      %s205 = smul.addr %s204, 8
      %s206 = scalar_lea.vmem %s4, %s205
      %p207 = scmp.lt.s32.totalorder %s19, 1
      %s208 = scalar_select %p207, %s19, 1
      %s209 = smul.addr %s208, 54
      %s210 = smul.addr %s209, 4
      %s211 = scalar_lea.vmem %s0, %s210
      %s212 = smul.u32 16, %s20
      %p213 = scmp.lt.s32.totalorder %s19, 1
      %s214 = scalar_select %p213, %s19, 1
      %p215 = scmp.lt.s32.totalorder %s212, 15
      %s216 = scalar_select %p215, %s212, 15
      %s217 = smul.addr %s216, 2
      %s218 = smul.addr %s214, 32
      %s219 = sadd.s32 %s217, %s218
      %s220 = smul.addr %s219, 8
      %s221 = scalar_lea.vmem %s4, %s220
      %s222 = smul.u32 16, %s20
      %s224 = smul.u32 %s20, 16
      %s225 = smul.u32 %s224, 3
      %s226 = smul.addr %s225, 4
      %s227 = scalar_lea.vmem %s211, %s226
      %v228 = vld [vmem:[%s227] sm:$0xf]
      %v229 = vld [vmem:[%s227 + $0x4] sm:$0xf]
      %v230 = vld [vmem:[%s227 + $0x8] sm:$0x1]
      %v231 = vld [vmem:[%s227 + $0xc] sm:$0xf]
      %v232 = vld [vmem:[%s227 + $0x10] sm:$0xf]
      %v233 = vld [vmem:[%s227 + $0x14] sm:$0x1]
      %v234 = vld [vmem:[%s227 + $0x18] sm:$0xf]
      %v235 = vld [vmem:[%s227 + $0x1c] sm:$0xf]
      %v236 = vld [vmem:[%s227 + $0x20] sm:$0x1]
      %v237 = vld [vmem:[%s227 + $0x24] sm:$0xf]
      %v238 = vld [vmem:[%s227 + $0x28] sm:$0xf]
      %v239 = vld [vmem:[%s227 + $0x2c] sm:$0x1]
      %v240 = vld [vmem:[%s227 + $0x30] sm:$0xf]
      %v241 = vld [vmem:[%s227 + $0x34] sm:$0xf]
      %v242 = vld [vmem:[%s227 + $0x38] sm:$0x1]
      %v243 = vld [vmem:[%s227 + $0x3c] sm:$0xf]
      %v244 = vld [vmem:[%s227 + $0x40] sm:$0xf]
      %v245 = vld [vmem:[%s227 + $0x44] sm:$0x1]
      %v246 = vld [vmem:[%s227 + $0x48] sm:$0xf]
      %v247 = vld [vmem:[%s227 + $0x4c] sm:$0xf]
      %v248 = vld [vmem:[%s227 + $0x50] sm:$0x1]
      %v249 = vld [vmem:[%s227 + $0x54] sm:$0xf]
      %v250 = vld [vmem:[%s227 + $0x58] sm:$0xf]
      %v251 = vld [vmem:[%s227 + $0x5c] sm:$0x1]
      %v252 = vld [vmem:[%s227 + $0x60] sm:$0xf]
      %v253 = vld [vmem:[%s227 + $0x64] sm:$0xf]
      %v254 = vld [vmem:[%s227 + $0x68] sm:$0x1]
      %v255 = vld [vmem:[%s227 + $0x6c] sm:$0xf]
      %v256 = vld [vmem:[%s227 + $0x70] sm:$0xf]
      %v257 = vld [vmem:[%s227 + $0x74] sm:$0x1]
      %v258 = vld [vmem:[%s227 + $0x78] sm:$0xf]
      %v259 = vld [vmem:[%s227 + $0x7c] sm:$0xf]
      %v260 = vld [vmem:[%s227 + $0x80] sm:$0x1]
      %v261 = vld [vmem:[%s227 + $0x84] sm:$0xf]
      %v262 = vld [vmem:[%s227 + $0x88] sm:$0xf]
      %v263 = vld [vmem:[%s227 + $0x8c] sm:$0x1]
      %v264 = vld [vmem:[%s227 + $0x90] sm:$0xf]
      %v265 = vld [vmem:[%s227 + $0x94] sm:$0xf]
      %v266 = vld [vmem:[%s227 + $0x98] sm:$0x1]
      %v267 = vld [vmem:[%s227 + $0x9c] sm:$0xf]
      %v268 = vld [vmem:[%s227 + $0xa0] sm:$0xf]
      %v269 = vld [vmem:[%s227 + $0xa4] sm:$0x1]
      %v270 = vld [vmem:[%s227 + $0xa8] sm:$0xf]
      %v271 = vld [vmem:[%s227 + $0xac] sm:$0xf]
      %v272 = vld [vmem:[%s227 + $0xb0] sm:$0x1]
      %v273 = vld [vmem:[%s227 + $0xb4] sm:$0xf]
      %v274 = vld [vmem:[%s227 + $0xb8] sm:$0xf]
      %v275 = vld [vmem:[%s227 + $0xbc] sm:$0x1]
      %v276 = vld [vmem:[%s227 + $0xc0] sm:$0xf]
      %v277 = vld [vmem:[%s227 + $0xc4] sm:$0xf]
      %v278 = vld [vmem:[%s227 + $0xc8] sm:$0x1]
      %v279 = vld [vmem:[%s227 + $0xcc] sm:$0xf]
      %v280 = vld [vmem:[%s227 + $0xd0] sm:$0xf]
      %v281 = vld [vmem:[%s227 + $0xd4] sm:$0x1]
      %v282 = vld [vmem:[%s1] sm:$0x3]
      %vm283 = vsmask.f32 3328
      %vm284 = vsmask.f32 7440
      %vm285 = vmor %vm283, %vm284
      %v287 = vshrl.u32 %v228, 16
      %v289 = vrot.slane %v287, 4
      %v290 = vshll.u32 %v228, 16
      %v292 = vrot.slane %v290, 5
      %v293 = vor.u32 %v289, %v292
      %v294 = vrot.slane %v293, 4
      %v296 = vshll.u32 %v229, 16
      %v298 = vrot.slane %v296, 5
      %v299 = vsel %vm285, %v294, %v298
      %v300 = vshrl.u32 %v229, 16
      %v302 = vrot.slane %v300, 4
      %v303 = vor.u32 %v302, %v298
      %v304 = vrot.slane %v303, 4
      %v306 = vshll.u32 %v230, 16
      %v308 = vrot.slane %v306, 5
      %v309 = vsel %vm285, %v304, %v308
      %v311 = vshrl.u32 %v231, 16
      %v313 = vrot.slane %v311, 4
      %v314 = vshll.u32 %v231, 16
      %v316 = vrot.slane %v314, 5
      %v317 = vor.u32 %v313, %v316
      %v318 = vrot.slane %v317, 4
      %v320 = vshll.u32 %v232, 16
      %v322 = vrot.slane %v320, 5
      %v323 = vsel %vm285, %v318, %v322
      %v324 = vshrl.u32 %v232, 16
      %v326 = vrot.slane %v324, 4
      %v327 = vor.u32 %v326, %v322
      %v328 = vrot.slane %v327, 4
      %v330 = vshll.u32 %v233, 16
      %v332 = vrot.slane %v330, 5
      %v333 = vsel %vm285, %v328, %v332
      %v335 = vshrl.u32 %v234, 16
      %v337 = vrot.slane %v335, 4
      %v338 = vshll.u32 %v234, 16
      %v340 = vrot.slane %v338, 5
      %v341 = vor.u32 %v337, %v340
      %v342 = vrot.slane %v341, 4
      %v344 = vshll.u32 %v235, 16
      %v346 = vrot.slane %v344, 5
      %v347 = vsel %vm285, %v342, %v346
      %v348 = vshrl.u32 %v235, 16
      %v350 = vrot.slane %v348, 4
      %v351 = vor.u32 %v350, %v346
      %v352 = vrot.slane %v351, 4
      %v354 = vshll.u32 %v236, 16
      %v356 = vrot.slane %v354, 5
      %v357 = vsel %vm285, %v352, %v356
      %v359 = vshrl.u32 %v237, 16
      %v361 = vrot.slane %v359, 4
      %v362 = vshll.u32 %v237, 16
      %v364 = vrot.slane %v362, 5
      %v365 = vor.u32 %v361, %v364
      %v366 = vrot.slane %v365, 4
      %v368 = vshll.u32 %v238, 16
      %v370 = vrot.slane %v368, 5
      %v371 = vsel %vm285, %v366, %v370
      %v372 = vshrl.u32 %v238, 16
      %v374 = vrot.slane %v372, 4
      %v375 = vor.u32 %v374, %v370
      %v376 = vrot.slane %v375, 4
      %v378 = vshll.u32 %v239, 16
      %v380 = vrot.slane %v378, 5
      %v381 = vsel %vm285, %v376, %v380
      %v383 = vshrl.u32 %v240, 16
      %v385 = vrot.slane %v383, 4
      %v386 = vshll.u32 %v240, 16
      %v388 = vrot.slane %v386, 5
      %v389 = vor.u32 %v385, %v388
      %v390 = vrot.slane %v389, 4
      %v392 = vshll.u32 %v241, 16
      %v394 = vrot.slane %v392, 5
      %v395 = vsel %vm285, %v390, %v394
      %v396 = vshrl.u32 %v241, 16
      %v398 = vrot.slane %v396, 4
      %v399 = vor.u32 %v398, %v394
      %v400 = vrot.slane %v399, 4
      %v402 = vshll.u32 %v242, 16
      %v404 = vrot.slane %v402, 5
      %v405 = vsel %vm285, %v400, %v404
      %v407 = vshrl.u32 %v243, 16
      %v409 = vrot.slane %v407, 4
      %v410 = vshll.u32 %v243, 16
      %v412 = vrot.slane %v410, 5
      %v413 = vor.u32 %v409, %v412
      %v414 = vrot.slane %v413, 4
      %v416 = vshll.u32 %v244, 16
      %v418 = vrot.slane %v416, 5
      %v419 = vsel %vm285, %v414, %v418
      %v420 = vshrl.u32 %v244, 16
      %v422 = vrot.slane %v420, 4
      %v423 = vor.u32 %v422, %v418
      %v424 = vrot.slane %v423, 4
      %v426 = vshll.u32 %v245, 16
      %v428 = vrot.slane %v426, 5
      %v429 = vsel %vm285, %v424, %v428
      %v431 = vshrl.u32 %v246, 16
      %v433 = vrot.slane %v431, 4
      %v434 = vshll.u32 %v246, 16
      %v436 = vrot.slane %v434, 5
      %v437 = vor.u32 %v433, %v436
      %v438 = vrot.slane %v437, 4
      %v440 = vshll.u32 %v247, 16
      %v442 = vrot.slane %v440, 5
      %v443 = vsel %vm285, %v438, %v442
      %v444 = vshrl.u32 %v247, 16
      %v446 = vrot.slane %v444, 4
      %v447 = vor.u32 %v446, %v442
      %v448 = vrot.slane %v447, 4
      %v450 = vshll.u32 %v248, 16
      %v452 = vrot.slane %v450, 5
      %v453 = vsel %vm285, %v448, %v452
      %v455 = vshrl.u32 %v249, 16
      %v457 = vrot.slane %v455, 4
      %v458 = vshll.u32 %v249, 16
      %v460 = vrot.slane %v458, 5
      %v461 = vor.u32 %v457, %v460
      %v462 = vrot.slane %v461, 4
      %v464 = vshll.u32 %v250, 16
      %v466 = vrot.slane %v464, 5
      %v467 = vsel %vm285, %v462, %v466
      %v468 = vshrl.u32 %v250, 16
      %v470 = vrot.slane %v468, 4
      %v471 = vor.u32 %v470, %v466
      %v472 = vrot.slane %v471, 4
      %v474 = vshll.u32 %v251, 16
      %v476 = vrot.slane %v474, 5
      %v477 = vsel %vm285, %v472, %v476
      %v479 = vshrl.u32 %v252, 16
      %v481 = vrot.slane %v479, 4
      %v482 = vshll.u32 %v252, 16
      %v484 = vrot.slane %v482, 5
      %v485 = vor.u32 %v481, %v484
      %v486 = vrot.slane %v485, 4
      %v488 = vshll.u32 %v253, 16
      %v490 = vrot.slane %v488, 5
      %v491 = vsel %vm285, %v486, %v490
      %v492 = vshrl.u32 %v253, 16
      %v494 = vrot.slane %v492, 4
      %v495 = vor.u32 %v494, %v490
      %v496 = vrot.slane %v495, 4
      %v498 = vshll.u32 %v254, 16
      %v500 = vrot.slane %v498, 5
      %v501 = vsel %vm285, %v496, %v500
      %v503 = vshrl.u32 %v255, 16
      %v505 = vrot.slane %v503, 4
      %v506 = vshll.u32 %v255, 16
      %v508 = vrot.slane %v506, 5
      %v509 = vor.u32 %v505, %v508
      %v510 = vrot.slane %v509, 4
      %v512 = vshll.u32 %v256, 16
      %v514 = vrot.slane %v512, 5
      %v515 = vsel %vm285, %v510, %v514
      %v516 = vshrl.u32 %v256, 16
      %v518 = vrot.slane %v516, 4
      %v519 = vor.u32 %v518, %v514
      %v520 = vrot.slane %v519, 4
      %v522 = vshll.u32 %v257, 16
      %v524 = vrot.slane %v522, 5
      %v525 = vsel %vm285, %v520, %v524
      %v527 = vshrl.u32 %v258, 16
      %v529 = vrot.slane %v527, 4
      %v530 = vshll.u32 %v258, 16
      %v532 = vrot.slane %v530, 5
      %v533 = vor.u32 %v529, %v532
      %v534 = vrot.slane %v533, 4
      %v536 = vshll.u32 %v259, 16
      %v538 = vrot.slane %v536, 5
      %v539 = vsel %vm285, %v534, %v538
      %v540 = vshrl.u32 %v259, 16
      %v542 = vrot.slane %v540, 4
      %v543 = vor.u32 %v542, %v538
      %v544 = vrot.slane %v543, 4
      %v546 = vshll.u32 %v260, 16
      %v548 = vrot.slane %v546, 5
      %v549 = vsel %vm285, %v544, %v548
      %v551 = vshrl.u32 %v261, 16
      %v553 = vrot.slane %v551, 4
      %v554 = vshll.u32 %v261, 16
      %v556 = vrot.slane %v554, 5
      %v557 = vor.u32 %v553, %v556
      %v558 = vrot.slane %v557, 4
      %v560 = vshll.u32 %v262, 16
      %v562 = vrot.slane %v560, 5
      %v563 = vsel %vm285, %v558, %v562
      %v564 = vshrl.u32 %v262, 16
      %v566 = vrot.slane %v564, 4
      %v567 = vor.u32 %v566, %v562
      %v568 = vrot.slane %v567, 4
      %v570 = vshll.u32 %v263, 16
      %v572 = vrot.slane %v570, 5
      %v573 = vsel %vm285, %v568, %v572
      %v575 = vshrl.u32 %v264, 16
      %v577 = vrot.slane %v575, 4
      %v578 = vshll.u32 %v264, 16
      %v580 = vrot.slane %v578, 5
      %v581 = vor.u32 %v577, %v580
      %v582 = vrot.slane %v581, 4
      %v584 = vshll.u32 %v265, 16
      %v586 = vrot.slane %v584, 5
      %v587 = vsel %vm285, %v582, %v586
      %v588 = vshrl.u32 %v265, 16
      %v590 = vrot.slane %v588, 4
      %v591 = vor.u32 %v590, %v586
      %v592 = vrot.slane %v591, 4
      %v594 = vshll.u32 %v266, 16
      %v596 = vrot.slane %v594, 5
      %v597 = vsel %vm285, %v592, %v596
      %v599 = vshrl.u32 %v267, 16
      %v601 = vrot.slane %v599, 4
      %v602 = vshll.u32 %v267, 16
      %v604 = vrot.slane %v602, 5
      %v605 = vor.u32 %v601, %v604
      %v606 = vrot.slane %v605, 4
      %v608 = vshll.u32 %v268, 16
      %v610 = vrot.slane %v608, 5
      %v611 = vsel %vm285, %v606, %v610
      %v612 = vshrl.u32 %v268, 16
      %v614 = vrot.slane %v612, 4
      %v615 = vor.u32 %v614, %v610
      %v616 = vrot.slane %v615, 4
      %v618 = vshll.u32 %v269, 16
      %v620 = vrot.slane %v618, 5
      %v621 = vsel %vm285, %v616, %v620
      %v623 = vshrl.u32 %v270, 16
      %v625 = vrot.slane %v623, 4
      %v626 = vshll.u32 %v270, 16
      %v628 = vrot.slane %v626, 5
      %v629 = vor.u32 %v625, %v628
      %v630 = vrot.slane %v629, 4
      %v632 = vshll.u32 %v271, 16
      %v634 = vrot.slane %v632, 5
      %v635 = vsel %vm285, %v630, %v634
      %v636 = vshrl.u32 %v271, 16
      %v638 = vrot.slane %v636, 4
      %v639 = vor.u32 %v638, %v634
      %v640 = vrot.slane %v639, 4
      %v642 = vshll.u32 %v272, 16
      %v644 = vrot.slane %v642, 5
      %v645 = vsel %vm285, %v640, %v644
      %v647 = vshrl.u32 %v273, 16
      %v649 = vrot.slane %v647, 4
      %v650 = vshll.u32 %v273, 16
      %v652 = vrot.slane %v650, 5
      %v653 = vor.u32 %v649, %v652
      %v654 = vrot.slane %v653, 4
      %v656 = vshll.u32 %v274, 16
      %v658 = vrot.slane %v656, 5
      %v659 = vsel %vm285, %v654, %v658
      %v660 = vshrl.u32 %v274, 16
      %v662 = vrot.slane %v660, 4
      %v663 = vor.u32 %v662, %v658
      %v664 = vrot.slane %v663, 4
      %v666 = vshll.u32 %v275, 16
      %v668 = vrot.slane %v666, 5
      %v669 = vsel %vm285, %v664, %v668
      %v670 = vld [vmem:[%s1] sm:$0xc]
      %v671 = vunpack.c.l.b16 %v299
      %v672 = vunpack.c.l.b16 %v309
      %v673 = vunpack.c.l.b16 %v323
      %v674 = vunpack.c.l.b16 %v333
      %v675 = vunpack.c.l.b16 %v347
      %v676 = vunpack.c.l.b16 %v357
      %v677 = vunpack.c.l.b16 %v371
      %v678 = vunpack.c.l.b16 %v381
      %v679 = vunpack.c.l.b16 %v395
      %v680 = vunpack.c.l.b16 %v405
      %v681 = vunpack.c.l.b16 %v419
      %v682 = vunpack.c.l.b16 %v429
      %v683 = vunpack.c.l.b16 %v443
      %v684 = vunpack.c.l.b16 %v453
      %v685 = vunpack.c.l.b16 %v467
      %v686 = vunpack.c.l.b16 %v477
      %v687 = vunpack.c.l.b16 %v491
      %v688 = vunpack.c.l.b16 %v501
      %v689 = vunpack.c.l.b16 %v515
      %v690 = vunpack.c.l.b16 %v525
      %v691 = vunpack.c.l.b16 %v539
      %v692 = vunpack.c.l.b16 %v549
      %v693 = vunpack.c.l.b16 %v563
      %v694 = vunpack.c.l.b16 %v573
      %v695 = vunpack.c.l.b16 %v587
      %v696 = vunpack.c.l.b16 %v597
      %v697 = vunpack.c.l.b16 %v611
      %v698 = vunpack.c.l.b16 %v621
      %v699 = vunpack.c.l.b16 %v635
      %v700 = vunpack.c.l.b16 %v645
      %v701 = vunpack.c.l.b16 %v659
      %v702 = vunpack.c.l.b16 %v669
      %v703 = vpack.c.b16 %v672, %v671
      %v704 = vpack.c.b16 %v674, %v673
      %v705 = vpack.c.b16 %v676, %v675
      %v706 = vpack.c.b16 %v678, %v677
      %v707 = vpack.c.b16 %v680, %v679
      %v708 = vpack.c.b16 %v682, %v681
      %v709 = vpack.c.b16 %v684, %v683
      %v710 = vpack.c.b16 %v686, %v685
      %v711 = vpack.c.b16 %v688, %v687
      %v712 = vpack.c.b16 %v690, %v689
      %v713 = vpack.c.b16 %v692, %v691
      %v714 = vpack.c.b16 %v694, %v693
      %v715 = vpack.c.b16 %v696, %v695
      %v716 = vpack.c.b16 %v698, %v697
      %v717 = vpack.c.b16 %v700, %v699
      %v718 = vpack.c.b16 %v702, %v701
      %v720 = vunpack.c.l.b16 %v670
      %v721 = vpack.c.b16 %v720, %v720
      %v722 = vrot.slane %v721, 2
      %vm723 = vcmask 31744
      %v725 = vsel %vm723, %v703, 0
      %v728 = vsel %vm723, %v704, 0
      %v731 = vsel %vm723, %v705, 0
      %v734 = vsel %vm723, %v706, 0
      %v737 = vsel %vm723, %v707, 0
      %v740 = vsel %vm723, %v708, 0
      %v743 = vsel %vm723, %v709, 0
      %v746 = vsel %vm723, %v710, 0
      %v749 = vsel %vm723, %v711, 0
      %v752 = vsel %vm723, %v712, 0
      %v755 = vsel %vm723, %v713, 0
      %v758 = vsel %vm723, %v714, 0
      %v761 = vsel %vm723, %v715, 0
      %v764 = vsel %vm723, %v716, 0
      %v767 = vsel %vm723, %v717, 0
      %v770 = vsel %vm723, %v718, 0
      %vm772 = vcmask 1041408
      %v774 = vsel %vm772, %v722, 0
      %776 = vmatprep.subr.bf16.mxu0 0
      %777 = vmatpush1.bf16.msra.mxu0 0
      %778 = vmatprep.subr.bf16.mxu0 0
      %779 = vmatpush1.bf16.msra.mxu0 0
      %780 = vmatprep.subr.bf16.mxu0 0
      %781 = vmatpush1.bf16.msra.mxu0 0
      %782 = vmatprep.subr.bf16.mxu0 0
      %783 = vmatpush1.bf16.msra.mxu0 0
      %784 = vmatprep.subr.bf16.mxu0 0
      %785 = vmatpush1.bf16.msra.mxu0 0
      %786 = vmatprep.subr.bf16.mxu0 0
      %787 = vmatpush1.bf16.msra.mxu0 0
      %788 = vmatprep.subr.bf16.mxu0 0
      %789 = vmatpush1.bf16.msra.mxu0 0
      %790 = vmatprep.subr.bf16.mxu0 0
      %791 = vmatpush1.bf16.msra.mxu0 %v774
      %792 = vmatprep.subr.bf16.mxu0 0
      %793 = vmatpush2.bf16.msra.mxu0 0
      %794 = vmatprep.subr.bf16.mxu0 0
      %795 = vmatpush2.bf16.msra.mxu0 0
      %796 = vmatprep.subr.bf16.mxu0 0
      %797 = vmatpush2.bf16.msra.mxu0 0
      %798 = vmatprep.subr.bf16.mxu0 0
      %799 = vmatpush2.bf16.msra.mxu0 0
      %800 = vmatprep.subr.bf16.mxu0 0
      %801 = vmatpush2.bf16.msra.mxu0 0
      %802 = vmatprep.subr.bf16.mxu0 0
      %803 = vmatpush2.bf16.msra.mxu0 0
      %804 = vmatprep.subr.bf16.mxu0 0
      %805 = vmatpush2.bf16.msra.mxu0 0
      %806 = vmatprep.subr.bf16.mxu0 0
      %807 = vmatpush2.bf16.msra.mxu0 0
      %808 = vmatprep.mubr.bf16.mxu0 0
      %809 = vmatmul.mubr.bf16.gmra.mxu0 %v725
      %v810 = vpop.f32.mrf.mxu0
      %v811 = vadd.f32 0.0, %v810
      %v812 = vpop.f32.mrf.mxu0
      %v813 = vpop.f32.mrf.mxu0
      %v814 = vadd.f32 0.0, %v813
      %v815 = vpop.f32.mrf.mxu0
      %816 = vmatprep.mubr.bf16.mxu0 0
      %817 = vmatmul.mubr.bf16.gmra.mxu0 %v728
      %v818 = vpop.f32.mrf.mxu0
      %v819 = vadd.f32 0.0, %v818
      %v820 = vpop.f32.mrf.mxu0
      %v821 = vpop.f32.mrf.mxu0
      %v822 = vadd.f32 0.0, %v821
      %v823 = vpop.f32.mrf.mxu0
      %824 = vmatprep.mubr.bf16.mxu0 0
      %825 = vmatmul.mubr.bf16.gmra.mxu0 %v731
      %v826 = vpop.f32.mrf.mxu0
      %v827 = vadd.f32 0.0, %v826
      %v828 = vpop.f32.mrf.mxu0
      %v829 = vpop.f32.mrf.mxu0
      %v830 = vadd.f32 0.0, %v829
      %v831 = vpop.f32.mrf.mxu0
      %832 = vmatprep.mubr.bf16.mxu0 0
      %833 = vmatmul.mubr.bf16.gmra.mxu0 %v734
      %v834 = vpop.f32.mrf.mxu0
      %v835 = vadd.f32 0.0, %v834
      %v836 = vpop.f32.mrf.mxu0
      %v837 = vpop.f32.mrf.mxu0
      %v838 = vadd.f32 0.0, %v837
      %v839 = vpop.f32.mrf.mxu0
      %840 = vmatprep.mubr.bf16.mxu0 0
      %841 = vmatmul.mubr.bf16.gmra.mxu0 %v737
      %v842 = vpop.f32.mrf.mxu0
      %v843 = vadd.f32 0.0, %v842
      %v844 = vpop.f32.mrf.mxu0
      %v845 = vpop.f32.mrf.mxu0
      %v846 = vadd.f32 0.0, %v845
      %v847 = vpop.f32.mrf.mxu0
      %848 = vmatprep.mubr.bf16.mxu0 0
      %849 = vmatmul.mubr.bf16.gmra.mxu0 %v740
      %v850 = vpop.f32.mrf.mxu0
      %v851 = vadd.f32 0.0, %v850
      %v852 = vpop.f32.mrf.mxu0
      %v853 = vpop.f32.mrf.mxu0
      %v854 = vadd.f32 0.0, %v853
      %v855 = vpop.f32.mrf.mxu0
      %856 = vmatprep.mubr.bf16.mxu0 0
      %857 = vmatmul.mubr.bf16.gmra.mxu0 %v743
      %v858 = vpop.f32.mrf.mxu0
      %v859 = vadd.f32 0.0, %v858
      %v860 = vpop.f32.mrf.mxu0
      %v861 = vpop.f32.mrf.mxu0
      %v862 = vadd.f32 0.0, %v861
      %v863 = vpop.f32.mrf.mxu0
      %864 = vmatprep.mubr.bf16.mxu0 0
      %865 = vmatmul.mubr.bf16.gmra.mxu0 %v746
      %v866 = vpop.f32.mrf.mxu0
      %v867 = vadd.f32 0.0, %v866
      %v868 = vpop.f32.mrf.mxu0
      %v869 = vpop.f32.mrf.mxu0
      %v870 = vadd.f32 0.0, %v869
      %v871 = vpop.f32.mrf.mxu0
      %872 = vmatprep.mubr.bf16.mxu0 0
      %873 = vmatmul.mubr.bf16.gmra.mxu0 %v749
      %v874 = vpop.f32.mrf.mxu0
      %v875 = vadd.f32 0.0, %v874
      %v876 = vpop.f32.mrf.mxu0
      %v877 = vpop.f32.mrf.mxu0
      %v878 = vadd.f32 0.0, %v877
      %v879 = vpop.f32.mrf.mxu0
      %880 = vmatprep.mubr.bf16.mxu0 0
      %881 = vmatmul.mubr.bf16.gmra.mxu0 %v752
      %v882 = vpop.f32.mrf.mxu0
      %v883 = vadd.f32 0.0, %v882
      %v884 = vpop.f32.mrf.mxu0
      %v885 = vpop.f32.mrf.mxu0
      %v886 = vadd.f32 0.0, %v885
      %v887 = vpop.f32.mrf.mxu0
      %888 = vmatprep.mubr.bf16.mxu0 0
      %889 = vmatmul.mubr.bf16.gmra.mxu0 %v755
      %v890 = vpop.f32.mrf.mxu0
      %v891 = vadd.f32 0.0, %v890
      %v892 = vpop.f32.mrf.mxu0
      %v893 = vpop.f32.mrf.mxu0
      %v894 = vadd.f32 0.0, %v893
      %v895 = vpop.f32.mrf.mxu0
      %896 = vmatprep.mubr.bf16.mxu0 0
      %897 = vmatmul.mubr.bf16.gmra.mxu0 %v758
      %v898 = vpop.f32.mrf.mxu0
      %v899 = vadd.f32 0.0, %v898
      %v900 = vpop.f32.mrf.mxu0
      %v901 = vpop.f32.mrf.mxu0
      %v902 = vadd.f32 0.0, %v901
      %v903 = vpop.f32.mrf.mxu0
      %904 = vmatprep.mubr.bf16.mxu0 0
      %905 = vmatmul.mubr.bf16.gmra.mxu0 %v761
      %v906 = vpop.f32.mrf.mxu0
      %v907 = vadd.f32 0.0, %v906
      %v908 = vpop.f32.mrf.mxu0
      %v909 = vpop.f32.mrf.mxu0
      %v910 = vadd.f32 0.0, %v909
      %v911 = vpop.f32.mrf.mxu0
      %912 = vmatprep.mubr.bf16.mxu0 0
      %913 = vmatmul.mubr.bf16.gmra.mxu0 %v764
      %v914 = vpop.f32.mrf.mxu0
      %v915 = vadd.f32 0.0, %v914
      %v916 = vpop.f32.mrf.mxu0
      %v917 = vpop.f32.mrf.mxu0
      %v918 = vadd.f32 0.0, %v917
      %v919 = vpop.f32.mrf.mxu0
      %920 = vmatprep.mubr.bf16.mxu0 0
      %921 = vmatmul.mubr.bf16.gmra.mxu0 %v767
      %v922 = vpop.f32.mrf.mxu0
      %v923 = vadd.f32 0.0, %v922
      %v924 = vpop.f32.mrf.mxu0
      %v925 = vpop.f32.mrf.mxu0
      %v926 = vadd.f32 0.0, %v925
      %v927 = vpop.f32.mrf.mxu0
      %928 = vmatprep.mubr.bf16.mxu0 0
      %929 = vmatmul.mubr.bf16.gmra.mxu0 %v770
      %v930 = vpop.f32.mrf.mxu0
      %v931 = vadd.f32 0.0, %v930
      %v932 = vpop.f32.mrf.mxu0
      %v933 = vpop.f32.mrf.mxu0
      %v934 = vadd.f32 0.0, %v933
      %v935 = vpop.f32.mrf.mxu0
      %936 = vdwg.mxu0
      %v969 = vunpack.c.l.b16 %v228
      %v970 = vunpack.c.l.b16 %v229
      %v971 = vunpack.c.l.b16 %v231
      %v972 = vunpack.c.l.b16 %v232
      %v973 = vunpack.c.l.b16 %v234
      %v974 = vunpack.c.l.b16 %v235
      %v975 = vunpack.c.l.b16 %v237
      %v976 = vunpack.c.l.b16 %v238
      %v977 = vunpack.c.l.b16 %v240
      %v978 = vunpack.c.l.b16 %v241
      %v979 = vunpack.c.l.b16 %v243
      %v980 = vunpack.c.l.b16 %v244
      %v981 = vunpack.c.l.b16 %v246
      %v982 = vunpack.c.l.b16 %v247
      %v983 = vunpack.c.l.b16 %v249
      %v984 = vunpack.c.l.b16 %v250
      %v985 = vunpack.c.l.b16 %v252
      %v986 = vunpack.c.l.b16 %v253
      %v987 = vunpack.c.l.b16 %v255
      %v988 = vunpack.c.l.b16 %v256
      %v989 = vunpack.c.l.b16 %v258
      %v990 = vunpack.c.l.b16 %v259
      %v991 = vunpack.c.l.b16 %v261
      %v992 = vunpack.c.l.b16 %v262
      %v993 = vunpack.c.l.b16 %v264
      %v994 = vunpack.c.l.b16 %v265
      %v995 = vunpack.c.l.b16 %v267
      %v996 = vunpack.c.l.b16 %v268
      %v997 = vunpack.c.l.b16 %v270
      %v998 = vunpack.c.l.b16 %v271
      %v999 = vunpack.c.l.b16 %v273
      %v1000 = vunpack.c.l.b16 %v274
      %v1001 = vpack.c.b16 %v970, %v969
      %v1002 = vpack.c.b16 %v972, %v971
      %v1003 = vpack.c.b16 %v974, %v973
      %v1004 = vpack.c.b16 %v976, %v975
      %v1005 = vpack.c.b16 %v978, %v977
      %v1006 = vpack.c.b16 %v980, %v979
      %v1007 = vpack.c.b16 %v982, %v981
      %v1008 = vpack.c.b16 %v984, %v983
      %v1009 = vpack.c.b16 %v986, %v985
      %v1010 = vpack.c.b16 %v988, %v987
      %v1011 = vpack.c.b16 %v990, %v989
      %v1012 = vpack.c.b16 %v992, %v991
      %v1013 = vpack.c.b16 %v994, %v993
      %v1014 = vpack.c.b16 %v996, %v995
      %v1015 = vpack.c.b16 %v998, %v997
      %v1016 = vpack.c.b16 %v1000, %v999
      %v1018 = vsel %vm723, %v1001, 0
      %v1021 = vsel %vm723, %v1002, 0
      %v1024 = vsel %vm723, %v1003, 0
      %v1027 = vsel %vm723, %v1004, 0
      %v1030 = vsel %vm723, %v1005, 0
      %v1033 = vsel %vm723, %v1006, 0
      %v1036 = vsel %vm723, %v1007, 0
      %v1039 = vsel %vm723, %v1008, 0
      %v1042 = vsel %vm723, %v1009, 0
      %v1045 = vsel %vm723, %v1010, 0
      %v1048 = vsel %vm723, %v1011, 0
      %v1051 = vsel %vm723, %v1012, 0
      %v1054 = vsel %vm723, %v1013, 0
      %v1057 = vsel %vm723, %v1014, 0
      %v1060 = vsel %vm723, %v1015, 0
      %v1063 = vsel %vm723, %v1016, 0
      %v1066 = vsel %vm772, %v282, 0
      %1068 = vmatprep.subr.bf16.mxu0 0
      %1069 = vmatpush1.bf16.msra.mxu0 0
      %1070 = vmatprep.subr.bf16.mxu0 0
      %1071 = vmatpush1.bf16.msra.mxu0 0
      %1072 = vmatprep.subr.bf16.mxu0 0
      %1073 = vmatpush1.bf16.msra.mxu0 0
      %1074 = vmatprep.subr.bf16.mxu0 0
      %1075 = vmatpush1.bf16.msra.mxu0 0
      %1076 = vmatprep.subr.bf16.mxu0 0
      %1077 = vmatpush1.bf16.msra.mxu0 0
      %1078 = vmatprep.subr.bf16.mxu0 0
      %1079 = vmatpush1.bf16.msra.mxu0 0
      %1080 = vmatprep.subr.bf16.mxu0 0
      %1081 = vmatpush1.bf16.msra.mxu0 0
      %1082 = vmatprep.subr.bf16.mxu0 0
      %1083 = vmatpush1.bf16.msra.mxu0 %v1066
      %1084 = vmatprep.subr.bf16.mxu0 0
      %1085 = vmatpush2.bf16.msra.mxu0 0
      %1086 = vmatprep.subr.bf16.mxu0 0
      %1087 = vmatpush2.bf16.msra.mxu0 0
      %1088 = vmatprep.subr.bf16.mxu0 0
      %1089 = vmatpush2.bf16.msra.mxu0 0
      %1090 = vmatprep.subr.bf16.mxu0 0
      %1091 = vmatpush2.bf16.msra.mxu0 0
      %1092 = vmatprep.subr.bf16.mxu0 0
      %1093 = vmatpush2.bf16.msra.mxu0 0
      %1094 = vmatprep.subr.bf16.mxu0 0
      %1095 = vmatpush2.bf16.msra.mxu0 0
      %1096 = vmatprep.subr.bf16.mxu0 0
      %1097 = vmatpush2.bf16.msra.mxu0 0
      %1098 = vmatprep.subr.bf16.mxu0 0
      %1099 = vmatpush2.bf16.msra.mxu0 0
      %1100 = vmatprep.mubr.bf16.mxu0 0
      %1101 = vmatmul.mubr.bf16.gmra.mxu0 %v1018
      %v1102 = vpop.f32.mrf.mxu0
      %v1103 = vadd.f32 %v811, %v1102
      %v1104 = vpop.f32.mrf.mxu0
      %v1105 = vpop.f32.mrf.mxu0
      %v1106 = vadd.f32 %v814, %v1105
      %v1107 = vpop.f32.mrf.mxu0
      %1108 = vmatprep.mubr.bf16.mxu0 0
      %1109 = vmatmul.mubr.bf16.gmra.mxu0 %v1021
      %v1110 = vpop.f32.mrf.mxu0
      %v1111 = vadd.f32 %v819, %v1110
      %v1112 = vpop.f32.mrf.mxu0
      %v1113 = vpop.f32.mrf.mxu0
      %v1114 = vadd.f32 %v822, %v1113
      %v1115 = vpop.f32.mrf.mxu0
      %1116 = vmatprep.mubr.bf16.mxu0 0
      %1117 = vmatmul.mubr.bf16.gmra.mxu0 %v1024
      %v1118 = vpop.f32.mrf.mxu0
      %v1119 = vadd.f32 %v827, %v1118
      %v1120 = vpop.f32.mrf.mxu0
      %v1121 = vpop.f32.mrf.mxu0
      %v1122 = vadd.f32 %v830, %v1121
      %v1123 = vpop.f32.mrf.mxu0
      %1124 = vmatprep.mubr.bf16.mxu0 0
      %1125 = vmatmul.mubr.bf16.gmra.mxu0 %v1027
      %v1126 = vpop.f32.mrf.mxu0
      %v1127 = vadd.f32 %v835, %v1126
      %v1128 = vpop.f32.mrf.mxu0
      %v1129 = vpop.f32.mrf.mxu0
      %v1130 = vadd.f32 %v838, %v1129
      %v1131 = vpop.f32.mrf.mxu0
      %1132 = vmatprep.mubr.bf16.mxu0 0
      %1133 = vmatmul.mubr.bf16.gmra.mxu0 %v1030
      %v1134 = vpop.f32.mrf.mxu0
      %v1135 = vadd.f32 %v843, %v1134
      %v1136 = vpop.f32.mrf.mxu0
      %v1137 = vpop.f32.mrf.mxu0
      %v1138 = vadd.f32 %v846, %v1137
      %v1139 = vpop.f32.mrf.mxu0
      %1140 = vmatprep.mubr.bf16.mxu0 0
      %1141 = vmatmul.mubr.bf16.gmra.mxu0 %v1033
      %v1142 = vpop.f32.mrf.mxu0
      %v1143 = vadd.f32 %v851, %v1142
      %v1144 = vpop.f32.mrf.mxu0
      %v1145 = vpop.f32.mrf.mxu0
      %v1146 = vadd.f32 %v854, %v1145
      %v1147 = vpop.f32.mrf.mxu0
      %1148 = vmatprep.mubr.bf16.mxu0 0
      %1149 = vmatmul.mubr.bf16.gmra.mxu0 %v1036
      %v1150 = vpop.f32.mrf.mxu0
      %v1151 = vadd.f32 %v859, %v1150
      %v1152 = vpop.f32.mrf.mxu0
      %v1153 = vpop.f32.mrf.mxu0
      %v1154 = vadd.f32 %v862, %v1153
      %v1155 = vpop.f32.mrf.mxu0
      %1156 = vmatprep.mubr.bf16.mxu0 0
      %1157 = vmatmul.mubr.bf16.gmra.mxu0 %v1039
      %v1158 = vpop.f32.mrf.mxu0
      %v1159 = vadd.f32 %v867, %v1158
      %v1160 = vpop.f32.mrf.mxu0
      %v1161 = vpop.f32.mrf.mxu0
      %v1162 = vadd.f32 %v870, %v1161
      %v1163 = vpop.f32.mrf.mxu0
      %1164 = vmatprep.mubr.bf16.mxu0 0
      %1165 = vmatmul.mubr.bf16.gmra.mxu0 %v1042
      %v1166 = vpop.f32.mrf.mxu0
      %v1167 = vadd.f32 %v875, %v1166
      %v1168 = vpop.f32.mrf.mxu0
      %v1169 = vpop.f32.mrf.mxu0
      %v1170 = vadd.f32 %v878, %v1169
      %v1171 = vpop.f32.mrf.mxu0
      %1172 = vmatprep.mubr.bf16.mxu0 0
      %1173 = vmatmul.mubr.bf16.gmra.mxu0 %v1045
      %v1174 = vpop.f32.mrf.mxu0
      %v1175 = vadd.f32 %v883, %v1174
      %v1176 = vpop.f32.mrf.mxu0
      %v1177 = vpop.f32.mrf.mxu0
      %v1178 = vadd.f32 %v886, %v1177
      %v1179 = vpop.f32.mrf.mxu0
      %1180 = vmatprep.mubr.bf16.mxu0 0
      %1181 = vmatmul.mubr.bf16.gmra.mxu0 %v1048
      %v1182 = vpop.f32.mrf.mxu0
      %v1183 = vadd.f32 %v891, %v1182
      %v1184 = vpop.f32.mrf.mxu0
      %v1185 = vpop.f32.mrf.mxu0
      %v1186 = vadd.f32 %v894, %v1185
      %v1187 = vpop.f32.mrf.mxu0
      %1188 = vmatprep.mubr.bf16.mxu0 0
      %1189 = vmatmul.mubr.bf16.gmra.mxu0 %v1051
      %v1190 = vpop.f32.mrf.mxu0
      %v1191 = vadd.f32 %v899, %v1190
      %v1192 = vpop.f32.mrf.mxu0
      %v1193 = vpop.f32.mrf.mxu0
      %v1194 = vadd.f32 %v902, %v1193
      %v1195 = vpop.f32.mrf.mxu0
      %1196 = vmatprep.mubr.bf16.mxu0 0
      %1197 = vmatmul.mubr.bf16.gmra.mxu0 %v1054
      %v1198 = vpop.f32.mrf.mxu0
      %v1199 = vadd.f32 %v907, %v1198
      %v1200 = vpop.f32.mrf.mxu0
      %v1201 = vpop.f32.mrf.mxu0
      %v1202 = vadd.f32 %v910, %v1201
      %v1203 = vpop.f32.mrf.mxu0
      %1204 = vmatprep.mubr.bf16.mxu0 0
      %1205 = vmatmul.mubr.bf16.gmra.mxu0 %v1057
      %v1206 = vpop.f32.mrf.mxu0
      %v1207 = vadd.f32 %v915, %v1206
      %v1208 = vpop.f32.mrf.mxu0
      %v1209 = vpop.f32.mrf.mxu0
      %v1210 = vadd.f32 %v918, %v1209
      %v1211 = vpop.f32.mrf.mxu0
      %1212 = vmatprep.mubr.bf16.mxu0 0
      %1213 = vmatmul.mubr.bf16.gmra.mxu0 %v1060
      %v1214 = vpop.f32.mrf.mxu0
      %v1215 = vadd.f32 %v923, %v1214
      %v1216 = vpop.f32.mrf.mxu0
      %v1217 = vpop.f32.mrf.mxu0
      %v1218 = vadd.f32 %v926, %v1217
      %v1219 = vpop.f32.mrf.mxu0
      %1220 = vmatprep.mubr.bf16.mxu0 0
      %1221 = vmatmul.mubr.bf16.gmra.mxu0 %v1063
      %v1222 = vpop.f32.mrf.mxu0
      %v1223 = vadd.f32 %v931, %v1222
      %v1224 = vpop.f32.mrf.mxu0
      %v1225 = vpop.f32.mrf.mxu0
      %v1226 = vadd.f32 %v934, %v1225
      %v1227 = vpop.f32.mrf.mxu0
      %1228 = vdwg.mxu0
      %vm1245 = vcmask 1042432
      %vm1246 = vcmask 1046532
      %vm1247 = vmor %vm1245, %vm1246
      %v1248 = vrot.slane %v228, 5
      %v1249 = vrot.slane %v1248, 4
      %v1250 = vrot.slane %v229, 5
      %v1251 = vsel %vm1247, %v1249, %v1250
      %v1252 = vrot.slane %v1250, 4
      %v1253 = vrot.slane %v230, 5
      %v1254 = vsel %vm1247, %v1252, %v1253
      %v1255 = vrot.slane %v231, 5
      %v1256 = vrot.slane %v1255, 4
      %v1257 = vrot.slane %v232, 5
      %v1258 = vsel %vm1247, %v1256, %v1257
      %v1259 = vrot.slane %v1257, 4
      %v1260 = vrot.slane %v233, 5
      %v1261 = vsel %vm1247, %v1259, %v1260
      %v1262 = vrot.slane %v234, 5
      %v1263 = vrot.slane %v1262, 4
      %v1264 = vrot.slane %v235, 5
      %v1265 = vsel %vm1247, %v1263, %v1264
      %v1266 = vrot.slane %v1264, 4
      %v1267 = vrot.slane %v236, 5
      %v1268 = vsel %vm1247, %v1266, %v1267
      %v1269 = vrot.slane %v237, 5
      %v1270 = vrot.slane %v1269, 4
      %v1271 = vrot.slane %v238, 5
      %v1272 = vsel %vm1247, %v1270, %v1271
      %v1273 = vrot.slane %v1271, 4
      %v1274 = vrot.slane %v239, 5
      %v1275 = vsel %vm1247, %v1273, %v1274
      %v1276 = vrot.slane %v240, 5
      %v1277 = vrot.slane %v1276, 4
      %v1278 = vrot.slane %v241, 5
      %v1279 = vsel %vm1247, %v1277, %v1278
      %v1280 = vrot.slane %v1278, 4
      %v1281 = vrot.slane %v242, 5
      %v1282 = vsel %vm1247, %v1280, %v1281
      %v1283 = vrot.slane %v243, 5
      %v1284 = vrot.slane %v1283, 4
      %v1285 = vrot.slane %v244, 5
      %v1286 = vsel %vm1247, %v1284, %v1285
      %v1287 = vrot.slane %v1285, 4
      %v1288 = vrot.slane %v245, 5
      %v1289 = vsel %vm1247, %v1287, %v1288
      %v1290 = vrot.slane %v246, 5
      %v1291 = vrot.slane %v1290, 4
      %v1292 = vrot.slane %v247, 5
      %v1293 = vsel %vm1247, %v1291, %v1292
      %v1294 = vrot.slane %v1292, 4
      %v1295 = vrot.slane %v248, 5
      %v1296 = vsel %vm1247, %v1294, %v1295
      %v1297 = vrot.slane %v249, 5
      %v1298 = vrot.slane %v1297, 4
      %v1299 = vrot.slane %v250, 5
      %v1300 = vsel %vm1247, %v1298, %v1299
      %v1301 = vrot.slane %v1299, 4
      %v1302 = vrot.slane %v251, 5
      %v1303 = vsel %vm1247, %v1301, %v1302
      %v1304 = vrot.slane %v252, 5
      %v1305 = vrot.slane %v1304, 4
      %v1306 = vrot.slane %v253, 5
      %v1307 = vsel %vm1247, %v1305, %v1306
      %v1308 = vrot.slane %v1306, 4
      %v1309 = vrot.slane %v254, 5
      %v1310 = vsel %vm1247, %v1308, %v1309
      %v1311 = vrot.slane %v255, 5
      %v1312 = vrot.slane %v1311, 4
      %v1313 = vrot.slane %v256, 5
      %v1314 = vsel %vm1247, %v1312, %v1313
      %v1315 = vrot.slane %v1313, 4
      %v1316 = vrot.slane %v257, 5
      %v1317 = vsel %vm1247, %v1315, %v1316
      %v1318 = vrot.slane %v258, 5
      %v1319 = vrot.slane %v1318, 4
      %v1320 = vrot.slane %v259, 5
      %v1321 = vsel %vm1247, %v1319, %v1320
      %v1322 = vrot.slane %v1320, 4
      %v1323 = vrot.slane %v260, 5
      %v1324 = vsel %vm1247, %v1322, %v1323
      %v1325 = vrot.slane %v261, 5
      %v1326 = vrot.slane %v1325, 4
      %v1327 = vrot.slane %v262, 5
      %v1328 = vsel %vm1247, %v1326, %v1327
      %v1329 = vrot.slane %v1327, 4
      %v1330 = vrot.slane %v263, 5
      %v1331 = vsel %vm1247, %v1329, %v1330
      %v1332 = vrot.slane %v264, 5
      %v1333 = vrot.slane %v1332, 4
      %v1334 = vrot.slane %v265, 5
      %v1335 = vsel %vm1247, %v1333, %v1334
      %v1336 = vrot.slane %v1334, 4
      %v1337 = vrot.slane %v266, 5
      %v1338 = vsel %vm1247, %v1336, %v1337
      %v1339 = vrot.slane %v267, 5
      %v1340 = vrot.slane %v1339, 4
      %v1341 = vrot.slane %v268, 5
      %v1342 = vsel %vm1247, %v1340, %v1341
      %v1343 = vrot.slane %v1341, 4
      %v1344 = vrot.slane %v269, 5
      %v1345 = vsel %vm1247, %v1343, %v1344
      %v1346 = vrot.slane %v270, 5
      %v1347 = vrot.slane %v1346, 4
      %v1348 = vrot.slane %v271, 5
      %v1349 = vsel %vm1247, %v1347, %v1348
      %v1350 = vrot.slane %v1348, 4
      %v1351 = vrot.slane %v272, 5
      %v1352 = vsel %vm1247, %v1350, %v1351
      %v1353 = vrot.slane %v273, 5
      %v1354 = vrot.slane %v1353, 4
      %v1355 = vrot.slane %v274, 5
      %v1356 = vsel %vm1247, %v1354, %v1355
      %v1357 = vrot.slane %v1355, 4
      %v1358 = vrot.slane %v275, 5
      %v1359 = vsel %vm1247, %v1357, %v1358
      %v1360 = vld [vmem:[%s1 + $0x4] sm:$0x3]
      %v1361 = vunpack.c.l.b16 %v1251
      %v1362 = vunpack.c.l.b16 %v1254
      %v1363 = vunpack.c.l.b16 %v1258
      %v1364 = vunpack.c.l.b16 %v1261
      %v1365 = vunpack.c.l.b16 %v1265
      %v1366 = vunpack.c.l.b16 %v1268
      %v1367 = vunpack.c.l.b16 %v1272
      %v1368 = vunpack.c.l.b16 %v1275
      %v1369 = vunpack.c.l.b16 %v1279
      %v1370 = vunpack.c.l.b16 %v1282
      %v1371 = vunpack.c.l.b16 %v1286
      %v1372 = vunpack.c.l.b16 %v1289
      %v1373 = vunpack.c.l.b16 %v1293
      %v1374 = vunpack.c.l.b16 %v1296
      %v1375 = vunpack.c.l.b16 %v1300
      %v1376 = vunpack.c.l.b16 %v1303
      %v1377 = vunpack.c.l.b16 %v1307
      %v1378 = vunpack.c.l.b16 %v1310
      %v1379 = vunpack.c.l.b16 %v1314
      %v1380 = vunpack.c.l.b16 %v1317
      %v1381 = vunpack.c.l.b16 %v1321
      %v1382 = vunpack.c.l.b16 %v1324
      %v1383 = vunpack.c.l.b16 %v1328
      %v1384 = vunpack.c.l.b16 %v1331
      %v1385 = vunpack.c.l.b16 %v1335
      %v1386 = vunpack.c.l.b16 %v1338
      %v1387 = vunpack.c.l.b16 %v1342
      %v1388 = vunpack.c.l.b16 %v1345
      %v1389 = vunpack.c.l.b16 %v1349
      %v1390 = vunpack.c.l.b16 %v1352
      %v1391 = vunpack.c.l.b16 %v1356
      %v1392 = vunpack.c.l.b16 %v1359
      %v1393 = vpack.c.b16 %v1362, %v1361
      %v1394 = vpack.c.b16 %v1364, %v1363
      %v1395 = vpack.c.b16 %v1366, %v1365
      %v1396 = vpack.c.b16 %v1368, %v1367
      %v1397 = vpack.c.b16 %v1370, %v1369
      %v1398 = vpack.c.b16 %v1372, %v1371
      %v1399 = vpack.c.b16 %v1374, %v1373
      %v1400 = vpack.c.b16 %v1376, %v1375
      %v1401 = vpack.c.b16 %v1378, %v1377
      %v1402 = vpack.c.b16 %v1380, %v1379
      %v1403 = vpack.c.b16 %v1382, %v1381
      %v1404 = vpack.c.b16 %v1384, %v1383
      %v1405 = vpack.c.b16 %v1386, %v1385
      %v1406 = vpack.c.b16 %v1388, %v1387
      %v1407 = vpack.c.b16 %v1390, %v1389
      %v1408 = vpack.c.b16 %v1392, %v1391
      %v1410 = vsel %vm723, %v1393, 0
      %v1413 = vsel %vm723, %v1394, 0
      %v1416 = vsel %vm723, %v1395, 0
      %v1419 = vsel %vm723, %v1396, 0
      %v1422 = vsel %vm723, %v1397, 0
      %v1425 = vsel %vm723, %v1398, 0
      %v1428 = vsel %vm723, %v1399, 0
      %v1431 = vsel %vm723, %v1400, 0
      %v1434 = vsel %vm723, %v1401, 0
      %v1437 = vsel %vm723, %v1402, 0
      %v1440 = vsel %vm723, %v1403, 0
      %v1443 = vsel %vm723, %v1404, 0
      %v1446 = vsel %vm723, %v1405, 0
      %v1449 = vsel %vm723, %v1406, 0
      %v1452 = vsel %vm723, %v1407, 0
      %v1455 = vsel %vm723, %v1408, 0
      %v1458 = vsel %vm772, %v1360, 0
      %1460 = vmatprep.subr.bf16.mxu0 0
      %1461 = vmatpush1.bf16.msra.mxu0 0
      %1462 = vmatprep.subr.bf16.mxu0 0
      %1463 = vmatpush1.bf16.msra.mxu0 0
      %1464 = vmatprep.subr.bf16.mxu0 0
      %1465 = vmatpush1.bf16.msra.mxu0 0
      %1466 = vmatprep.subr.bf16.mxu0 0
      %1467 = vmatpush1.bf16.msra.mxu0 0
      %1468 = vmatprep.subr.bf16.mxu0 0
      %1469 = vmatpush1.bf16.msra.mxu0 0
      %1470 = vmatprep.subr.bf16.mxu0 0
      %1471 = vmatpush1.bf16.msra.mxu0 0
      %1472 = vmatprep.subr.bf16.mxu0 0
      %1473 = vmatpush1.bf16.msra.mxu0 0
      %1474 = vmatprep.subr.bf16.mxu0 0
      %1475 = vmatpush1.bf16.msra.mxu0 %v1458
      %1476 = vmatprep.subr.bf16.mxu0 0
      %1477 = vmatpush2.bf16.msra.mxu0 0
      %1478 = vmatprep.subr.bf16.mxu0 0
      %1479 = vmatpush2.bf16.msra.mxu0 0
      %1480 = vmatprep.subr.bf16.mxu0 0
      %1481 = vmatpush2.bf16.msra.mxu0 0
      %1482 = vmatprep.subr.bf16.mxu0 0
      %1483 = vmatpush2.bf16.msra.mxu0 0
      %1484 = vmatprep.subr.bf16.mxu0 0
      %1485 = vmatpush2.bf16.msra.mxu0 0
      %1486 = vmatprep.subr.bf16.mxu0 0
      %1487 = vmatpush2.bf16.msra.mxu0 0
      %1488 = vmatprep.subr.bf16.mxu0 0
      %1489 = vmatpush2.bf16.msra.mxu0 0
      %1490 = vmatprep.subr.bf16.mxu0 0
      %1491 = vmatpush2.bf16.msra.mxu0 0
      %1492 = vmatprep.mubr.bf16.mxu0 0
      %1493 = vmatmul.mubr.bf16.gmra.mxu0 %v1410
      %v1494 = vpop.f32.mrf.mxu0
      %v1495 = vadd.f32 0.0, %v1494
      %v1496 = vpop.f32.mrf.mxu0
      %v1497 = vpop.f32.mrf.mxu0
      %v1498 = vadd.f32 0.0, %v1497
      %v1499 = vpop.f32.mrf.mxu0
      %1500 = vmatprep.mubr.bf16.mxu0 0
      %1501 = vmatmul.mubr.bf16.gmra.mxu0 %v1413
      %v1502 = vpop.f32.mrf.mxu0
      %v1503 = vadd.f32 0.0, %v1502
      %v1504 = vpop.f32.mrf.mxu0
      %v1505 = vpop.f32.mrf.mxu0
      %v1506 = vadd.f32 0.0, %v1505
      %v1507 = vpop.f32.mrf.mxu0
      %1508 = vmatprep.mubr.bf16.mxu0 0
      %1509 = vmatmul.mubr.bf16.gmra.mxu0 %v1416
      %v1510 = vpop.f32.mrf.mxu0
      %v1511 = vadd.f32 0.0, %v1510
      %v1512 = vpop.f32.mrf.mxu0
      %v1513 = vpop.f32.mrf.mxu0
      %v1514 = vadd.f32 0.0, %v1513
      %v1515 = vpop.f32.mrf.mxu0
      %1516 = vmatprep.mubr.bf16.mxu0 0
      %1517 = vmatmul.mubr.bf16.gmra.mxu0 %v1419
      %v1518 = vpop.f32.mrf.mxu0
      %v1519 = vadd.f32 0.0, %v1518
      %v1520 = vpop.f32.mrf.mxu0
      %v1521 = vpop.f32.mrf.mxu0
      %v1522 = vadd.f32 0.0, %v1521
      %v1523 = vpop.f32.mrf.mxu0
      %1524 = vmatprep.mubr.bf16.mxu0 0
      %1525 = vmatmul.mubr.bf16.gmra.mxu0 %v1422
      %v1526 = vpop.f32.mrf.mxu0
      %v1527 = vadd.f32 0.0, %v1526
      %v1528 = vpop.f32.mrf.mxu0
      %v1529 = vpop.f32.mrf.mxu0
      %v1530 = vadd.f32 0.0, %v1529
      %v1531 = vpop.f32.mrf.mxu0
      %1532 = vmatprep.mubr.bf16.mxu0 0
      %1533 = vmatmul.mubr.bf16.gmra.mxu0 %v1425
      %v1534 = vpop.f32.mrf.mxu0
      %v1535 = vadd.f32 0.0, %v1534
      %v1536 = vpop.f32.mrf.mxu0
      %v1537 = vpop.f32.mrf.mxu0
      %v1538 = vadd.f32 0.0, %v1537
      %v1539 = vpop.f32.mrf.mxu0
      %1540 = vmatprep.mubr.bf16.mxu0 0
      %1541 = vmatmul.mubr.bf16.gmra.mxu0 %v1428
      %v1542 = vpop.f32.mrf.mxu0
      %v1543 = vadd.f32 0.0, %v1542
      %v1544 = vpop.f32.mrf.mxu0
      %v1545 = vpop.f32.mrf.mxu0
      %v1546 = vadd.f32 0.0, %v1545
      %v1547 = vpop.f32.mrf.mxu0
      %1548 = vmatprep.mubr.bf16.mxu0 0
      %1549 = vmatmul.mubr.bf16.gmra.mxu0 %v1431
      %v1550 = vpop.f32.mrf.mxu0
      %v1551 = vadd.f32 0.0, %v1550
      %v1552 = vpop.f32.mrf.mxu0
      %v1553 = vpop.f32.mrf.mxu0
      %v1554 = vadd.f32 0.0, %v1553
      %v1555 = vpop.f32.mrf.mxu0
      %1556 = vmatprep.mubr.bf16.mxu0 0
      %1557 = vmatmul.mubr.bf16.gmra.mxu0 %v1434
      %v1558 = vpop.f32.mrf.mxu0
      %v1559 = vadd.f32 0.0, %v1558
      %v1560 = vpop.f32.mrf.mxu0
      %v1561 = vpop.f32.mrf.mxu0
      %v1562 = vadd.f32 0.0, %v1561
      %v1563 = vpop.f32.mrf.mxu0
      %1564 = vmatprep.mubr.bf16.mxu0 0
      %1565 = vmatmul.mubr.bf16.gmra.mxu0 %v1437
      %v1566 = vpop.f32.mrf.mxu0
      %v1567 = vadd.f32 0.0, %v1566
      %v1568 = vpop.f32.mrf.mxu0
      %v1569 = vpop.f32.mrf.mxu0
      %v1570 = vadd.f32 0.0, %v1569
      %v1571 = vpop.f32.mrf.mxu0
      %1572 = vmatprep.mubr.bf16.mxu0 0
      %1573 = vmatmul.mubr.bf16.gmra.mxu0 %v1440
      %v1574 = vpop.f32.mrf.mxu0
      %v1575 = vadd.f32 0.0, %v1574
      %v1576 = vpop.f32.mrf.mxu0
      %v1577 = vpop.f32.mrf.mxu0
      %v1578 = vadd.f32 0.0, %v1577
      %v1579 = vpop.f32.mrf.mxu0
      %1580 = vmatprep.mubr.bf16.mxu0 0
      %1581 = vmatmul.mubr.bf16.gmra.mxu0 %v1443
      %v1582 = vpop.f32.mrf.mxu0
      %v1583 = vadd.f32 0.0, %v1582
      %v1584 = vpop.f32.mrf.mxu0
      %v1585 = vpop.f32.mrf.mxu0
      %v1586 = vadd.f32 0.0, %v1585
      %v1587 = vpop.f32.mrf.mxu0
      %1588 = vmatprep.mubr.bf16.mxu0 0
      %1589 = vmatmul.mubr.bf16.gmra.mxu0 %v1446
      %v1590 = vpop.f32.mrf.mxu0
      %v1591 = vadd.f32 0.0, %v1590
      %v1592 = vpop.f32.mrf.mxu0
      %v1593 = vpop.f32.mrf.mxu0
      %v1594 = vadd.f32 0.0, %v1593
      %v1595 = vpop.f32.mrf.mxu0
      %1596 = vmatprep.mubr.bf16.mxu0 0
      %1597 = vmatmul.mubr.bf16.gmra.mxu0 %v1449
      %v1598 = vpop.f32.mrf.mxu0
      %v1599 = vadd.f32 0.0, %v1598
      %v1600 = vpop.f32.mrf.mxu0
      %v1601 = vpop.f32.mrf.mxu0
      %v1602 = vadd.f32 0.0, %v1601
      %v1603 = vpop.f32.mrf.mxu0
      %1604 = vmatprep.mubr.bf16.mxu0 0
      %1605 = vmatmul.mubr.bf16.gmra.mxu0 %v1452
      %v1606 = vpop.f32.mrf.mxu0
      %v1607 = vadd.f32 0.0, %v1606
      %v1608 = vpop.f32.mrf.mxu0
      %v1609 = vpop.f32.mrf.mxu0
      %v1610 = vadd.f32 0.0, %v1609
      %v1611 = vpop.f32.mrf.mxu0
      %1612 = vmatprep.mubr.bf16.mxu0 0
      %1613 = vmatmul.mubr.bf16.gmra.mxu0 %v1455
      %v1614 = vpop.f32.mrf.mxu0
      %v1615 = vadd.f32 0.0, %v1614
      %v1616 = vpop.f32.mrf.mxu0
      %v1617 = vpop.f32.mrf.mxu0
      %v1618 = vadd.f32 0.0, %v1617
      %v1619 = vpop.f32.mrf.mxu0
      %1620 = vdwg.mxu0
      %v1621 = vadd.f32 %v1103, %v1495
      %v1622 = vadd.f32 %v1106, %v1498
      %v1623 = vadd.f32 %v1111, %v1503
      %v1624 = vadd.f32 %v1114, %v1506
      %v1625 = vadd.f32 %v1119, %v1511
      %v1626 = vadd.f32 %v1122, %v1514
      %v1627 = vadd.f32 %v1127, %v1519
      %v1628 = vadd.f32 %v1130, %v1522
      %v1629 = vadd.f32 %v1135, %v1527
      %v1630 = vadd.f32 %v1138, %v1530
      %v1631 = vadd.f32 %v1143, %v1535
      %v1632 = vadd.f32 %v1146, %v1538
      %v1633 = vadd.f32 %v1151, %v1543
      %v1634 = vadd.f32 %v1154, %v1546
      %v1635 = vadd.f32 %v1159, %v1551
      %v1636 = vadd.f32 %v1162, %v1554
      %v1637 = vadd.f32 %v1167, %v1559
      %v1638 = vadd.f32 %v1170, %v1562
      %v1639 = vadd.f32 %v1175, %v1567
      %v1640 = vadd.f32 %v1178, %v1570
      %v1641 = vadd.f32 %v1183, %v1575
      %v1642 = vadd.f32 %v1186, %v1578
      %v1643 = vadd.f32 %v1191, %v1583
      %v1644 = vadd.f32 %v1194, %v1586
      %v1645 = vadd.f32 %v1199, %v1591
      %v1646 = vadd.f32 %v1202, %v1594
      %v1647 = vadd.f32 %v1207, %v1599
      %v1648 = vadd.f32 %v1210, %v1602
      %v1649 = vadd.f32 %v1215, %v1607
      %v1650 = vadd.f32 %v1218, %v1610
      %v1651 = vadd.f32 %v1223, %v1615
      %v1652 = vadd.f32 %v1226, %v1618
      %v1653 = vld [vmem:[%s1 + $0x4] sm:$0xc]
      %v1656 = vunpack.c.l.b16 %v276
      %v1657 = vunpack.c.l.b16 %v277
      %v1658 = vpack.c.b16 %v1657, %v1656
      %v1660 = vunpack.c.l.b16 %v1653
      %v1661 = vpack.c.b16 %v1660, %v1660
      %v1662 = vrot.slane %v1661, 2
      %v1664 = vsel %vm723, %v1658, 0
      %v1667 = vsel %vm772, %v1662, 0
      %1669 = vmatprep.subr.bf16.mxu0 0
      %1670 = vmatpush1.bf16.msra.mxu0 0
      %1671 = vmatprep.subr.bf16.mxu0 0
      %1672 = vmatpush1.bf16.msra.mxu0 0
      %1673 = vmatprep.subr.bf16.mxu0 0
      %1674 = vmatpush1.bf16.msra.mxu0 0
      %1675 = vmatprep.subr.bf16.mxu0 0
      %1676 = vmatpush1.bf16.msra.mxu0 0
      %1677 = vmatprep.subr.bf16.mxu0 0
      %1678 = vmatpush1.bf16.msra.mxu0 0
      %1679 = vmatprep.subr.bf16.mxu0 0
      %1680 = vmatpush1.bf16.msra.mxu0 0
      %1681 = vmatprep.subr.bf16.mxu0 0
      %1682 = vmatpush1.bf16.msra.mxu0 0
      %1683 = vmatprep.subr.bf16.mxu0 0
      %1684 = vmatpush1.bf16.msra.mxu0 %v1667
      %1685 = vmatprep.subr.bf16.mxu0 0
      %1686 = vmatpush2.bf16.msra.mxu0 0
      %1687 = vmatprep.subr.bf16.mxu0 0
      %1688 = vmatpush2.bf16.msra.mxu0 0
      %1689 = vmatprep.subr.bf16.mxu0 0
      %1690 = vmatpush2.bf16.msra.mxu0 0
      %1691 = vmatprep.subr.bf16.mxu0 0
      %1692 = vmatpush2.bf16.msra.mxu0 0
      %1693 = vmatprep.subr.bf16.mxu0 0
      %1694 = vmatpush2.bf16.msra.mxu0 0
      %1695 = vmatprep.subr.bf16.mxu0 0
      %1696 = vmatpush2.bf16.msra.mxu0 0
      %1697 = vmatprep.subr.bf16.mxu0 0
      %1698 = vmatpush2.bf16.msra.mxu0 0
      %1699 = vmatprep.subr.bf16.mxu0 0
      %1700 = vmatpush2.bf16.msra.mxu0 0
      %1701 = vmatprep.mubr.bf16.mxu0 0
      %1702 = vmatmul.mubr.bf16.gmra.mxu0 %v1021
      %v1703 = vpop.f32.mrf.mxu0
      %v1704 = vadd.f32 0.0, %v1703
      %v1705 = vpop.f32.mrf.mxu0
      %v1706 = vpop.f32.mrf.mxu0
      %v1707 = vadd.f32 0.0, %v1706
      %v1708 = vpop.f32.mrf.mxu0
      %1709 = vmatprep.mubr.bf16.mxu0 0
      %1710 = vmatmul.mubr.bf16.gmra.mxu0 %v1024
      %v1711 = vpop.f32.mrf.mxu0
      %v1712 = vadd.f32 0.0, %v1711
      %v1713 = vpop.f32.mrf.mxu0
      %v1714 = vpop.f32.mrf.mxu0
      %v1715 = vadd.f32 0.0, %v1714
      %v1716 = vpop.f32.mrf.mxu0
      %1717 = vmatprep.mubr.bf16.mxu0 0
      %1718 = vmatmul.mubr.bf16.gmra.mxu0 %v1027
      %v1719 = vpop.f32.mrf.mxu0
      %v1720 = vadd.f32 0.0, %v1719
      %v1721 = vpop.f32.mrf.mxu0
      %v1722 = vpop.f32.mrf.mxu0
      %v1723 = vadd.f32 0.0, %v1722
      %v1724 = vpop.f32.mrf.mxu0
      %1725 = vmatprep.mubr.bf16.mxu0 0
      %1726 = vmatmul.mubr.bf16.gmra.mxu0 %v1030
      %v1727 = vpop.f32.mrf.mxu0
      %v1728 = vadd.f32 0.0, %v1727
      %v1729 = vpop.f32.mrf.mxu0
      %v1730 = vpop.f32.mrf.mxu0
      %v1731 = vadd.f32 0.0, %v1730
      %v1732 = vpop.f32.mrf.mxu0
      %1733 = vmatprep.mubr.bf16.mxu0 0
      %1734 = vmatmul.mubr.bf16.gmra.mxu0 %v1033
      %v1735 = vpop.f32.mrf.mxu0
      %v1736 = vadd.f32 0.0, %v1735
      %v1737 = vpop.f32.mrf.mxu0
      %v1738 = vpop.f32.mrf.mxu0
      %v1739 = vadd.f32 0.0, %v1738
      %v1740 = vpop.f32.mrf.mxu0
      %1741 = vmatprep.mubr.bf16.mxu0 0
      %1742 = vmatmul.mubr.bf16.gmra.mxu0 %v1036
      %v1743 = vpop.f32.mrf.mxu0
      %v1744 = vadd.f32 0.0, %v1743
      %v1745 = vpop.f32.mrf.mxu0
      %v1746 = vpop.f32.mrf.mxu0
      %v1747 = vadd.f32 0.0, %v1746
      %v1748 = vpop.f32.mrf.mxu0
      %1749 = vmatprep.mubr.bf16.mxu0 0
      %1750 = vmatmul.mubr.bf16.gmra.mxu0 %v1039
      %v1751 = vpop.f32.mrf.mxu0
      %v1752 = vadd.f32 0.0, %v1751
      %v1753 = vpop.f32.mrf.mxu0
      %v1754 = vpop.f32.mrf.mxu0
      %v1755 = vadd.f32 0.0, %v1754
      %v1756 = vpop.f32.mrf.mxu0
      %1757 = vmatprep.mubr.bf16.mxu0 0
      %1758 = vmatmul.mubr.bf16.gmra.mxu0 %v1042
      %v1759 = vpop.f32.mrf.mxu0
      %v1760 = vadd.f32 0.0, %v1759
      %v1761 = vpop.f32.mrf.mxu0
      %v1762 = vpop.f32.mrf.mxu0
      %v1763 = vadd.f32 0.0, %v1762
      %v1764 = vpop.f32.mrf.mxu0
      %1765 = vmatprep.mubr.bf16.mxu0 0
      %1766 = vmatmul.mubr.bf16.gmra.mxu0 %v1045
      %v1767 = vpop.f32.mrf.mxu0
      %v1768 = vadd.f32 0.0, %v1767
      %v1769 = vpop.f32.mrf.mxu0
      %v1770 = vpop.f32.mrf.mxu0
      %v1771 = vadd.f32 0.0, %v1770
      %v1772 = vpop.f32.mrf.mxu0
      %1773 = vmatprep.mubr.bf16.mxu0 0
      %1774 = vmatmul.mubr.bf16.gmra.mxu0 %v1048
      %v1775 = vpop.f32.mrf.mxu0
      %v1776 = vadd.f32 0.0, %v1775
      %v1777 = vpop.f32.mrf.mxu0
      %v1778 = vpop.f32.mrf.mxu0
      %v1779 = vadd.f32 0.0, %v1778
      %v1780 = vpop.f32.mrf.mxu0
      %1781 = vmatprep.mubr.bf16.mxu0 0
      %1782 = vmatmul.mubr.bf16.gmra.mxu0 %v1051
      %v1783 = vpop.f32.mrf.mxu0
      %v1784 = vadd.f32 0.0, %v1783
      %v1785 = vpop.f32.mrf.mxu0
      %v1786 = vpop.f32.mrf.mxu0
      %v1787 = vadd.f32 0.0, %v1786
      %v1788 = vpop.f32.mrf.mxu0
      %1789 = vmatprep.mubr.bf16.mxu0 0
      %1790 = vmatmul.mubr.bf16.gmra.mxu0 %v1054
      %v1791 = vpop.f32.mrf.mxu0
      %v1792 = vadd.f32 0.0, %v1791
      %v1793 = vpop.f32.mrf.mxu0
      %v1794 = vpop.f32.mrf.mxu0
      %v1795 = vadd.f32 0.0, %v1794
      %v1796 = vpop.f32.mrf.mxu0
      %1797 = vmatprep.mubr.bf16.mxu0 0
      %1798 = vmatmul.mubr.bf16.gmra.mxu0 %v1057
      %v1799 = vpop.f32.mrf.mxu0
      %v1800 = vadd.f32 0.0, %v1799
      %v1801 = vpop.f32.mrf.mxu0
      %v1802 = vpop.f32.mrf.mxu0
      %v1803 = vadd.f32 0.0, %v1802
      %v1804 = vpop.f32.mrf.mxu0
      %1805 = vmatprep.mubr.bf16.mxu0 0
      %1806 = vmatmul.mubr.bf16.gmra.mxu0 %v1060
      %v1807 = vpop.f32.mrf.mxu0
      %v1808 = vadd.f32 0.0, %v1807
      %v1809 = vpop.f32.mrf.mxu0
      %v1810 = vpop.f32.mrf.mxu0
      %v1811 = vadd.f32 0.0, %v1810
      %v1812 = vpop.f32.mrf.mxu0
      %1813 = vmatprep.mubr.bf16.mxu0 0
      %1814 = vmatmul.mubr.bf16.gmra.mxu0 %v1063
      %v1815 = vpop.f32.mrf.mxu0
      %v1816 = vadd.f32 0.0, %v1815
      %v1817 = vpop.f32.mrf.mxu0
      %v1818 = vpop.f32.mrf.mxu0
      %v1819 = vadd.f32 0.0, %v1818
      %v1820 = vpop.f32.mrf.mxu0
      %1821 = vmatprep.mubr.bf16.mxu0 0
      %1822 = vmatmul.mubr.bf16.gmra.mxu0 %v1664
      %v1823 = vpop.f32.mrf.mxu0
      %v1824 = vadd.f32 0.0, %v1823
      %v1825 = vpop.f32.mrf.mxu0
      %v1826 = vpop.f32.mrf.mxu0
      %v1827 = vadd.f32 0.0, %v1826
      %v1828 = vpop.f32.mrf.mxu0
      %1829 = vdwg.mxu0
      %v1830 = vadd.f32 %v1621, %v1704
      %v1831 = vadd.f32 %v1622, %v1707
      %v1832 = vadd.f32 %v1623, %v1712
      %v1833 = vadd.f32 %v1624, %v1715
      %v1834 = vadd.f32 %v1625, %v1720
      %v1835 = vadd.f32 %v1626, %v1723
      %v1836 = vadd.f32 %v1627, %v1728
      %v1837 = vadd.f32 %v1628, %v1731
      %v1838 = vadd.f32 %v1629, %v1736
      %v1839 = vadd.f32 %v1630, %v1739
      %v1840 = vadd.f32 %v1631, %v1744
      %v1841 = vadd.f32 %v1632, %v1747
      %v1842 = vadd.f32 %v1633, %v1752
      %v1843 = vadd.f32 %v1634, %v1755
      %v1844 = vadd.f32 %v1635, %v1760
      %v1845 = vadd.f32 %v1636, %v1763
      %v1846 = vadd.f32 %v1637, %v1768
      %v1847 = vadd.f32 %v1638, %v1771
      %v1848 = vadd.f32 %v1639, %v1776
      %v1849 = vadd.f32 %v1640, %v1779
      %v1850 = vadd.f32 %v1641, %v1784
      %v1851 = vadd.f32 %v1642, %v1787
      %v1852 = vadd.f32 %v1643, %v1792
      %v1853 = vadd.f32 %v1644, %v1795
      %v1854 = vadd.f32 %v1645, %v1800
      %v1855 = vadd.f32 %v1646, %v1803
      %v1856 = vadd.f32 %v1647, %v1808
      %v1857 = vadd.f32 %v1648, %v1811
      %v1858 = vadd.f32 %v1649, %v1816
      %v1859 = vadd.f32 %v1650, %v1819
      %v1860 = vadd.f32 %v1651, %v1824
      %v1861 = vadd.f32 %v1652, %v1827
      %v1863 = vshrl.u32 %v276, 16
      %v1865 = vrot.slane %v1863, 4
      %v1866 = vshll.u32 %v276, 16
      %v1868 = vrot.slane %v1866, 5
      %v1869 = vor.u32 %v1865, %v1868
      %v1870 = vrot.slane %v1869, 4
      %v1872 = vshll.u32 %v277, 16
      %v1874 = vrot.slane %v1872, 5
      %v1875 = vsel %vm285, %v1870, %v1874
      %v1876 = vshrl.u32 %v277, 16
      %v1878 = vrot.slane %v1876, 4
      %v1879 = vor.u32 %v1878, %v1874
      %v1880 = vrot.slane %v1879, 4
      %v1882 = vshll.u32 %v278, 16
      %v1884 = vrot.slane %v1882, 5
      %v1885 = vsel %vm285, %v1880, %v1884
      %v1886 = vld [vmem:[%s1 + $0x8] sm:$0x3]
      %v1887 = vunpack.c.l.b16 %v1875
      %v1888 = vunpack.c.l.b16 %v1885
      %v1889 = vpack.c.b16 %v1888, %v1887
      %v1891 = vsel %vm723, %v1889, 0
      %v1894 = vsel %vm772, %v1886, 0
      %1896 = vmatprep.subr.bf16.mxu0 0
      %1897 = vmatpush1.bf16.msra.mxu0 0
      %1898 = vmatprep.subr.bf16.mxu0 0
      %1899 = vmatpush1.bf16.msra.mxu0 0
      %1900 = vmatprep.subr.bf16.mxu0 0
      %1901 = vmatpush1.bf16.msra.mxu0 0
      %1902 = vmatprep.subr.bf16.mxu0 0
      %1903 = vmatpush1.bf16.msra.mxu0 0
      %1904 = vmatprep.subr.bf16.mxu0 0
      %1905 = vmatpush1.bf16.msra.mxu0 0
      %1906 = vmatprep.subr.bf16.mxu0 0
      %1907 = vmatpush1.bf16.msra.mxu0 0
      %1908 = vmatprep.subr.bf16.mxu0 0
      %1909 = vmatpush1.bf16.msra.mxu0 0
      %1910 = vmatprep.subr.bf16.mxu0 0
      %1911 = vmatpush1.bf16.msra.mxu0 %v1894
      %1912 = vmatprep.subr.bf16.mxu0 0
      %1913 = vmatpush2.bf16.msra.mxu0 0
      %1914 = vmatprep.subr.bf16.mxu0 0
      %1915 = vmatpush2.bf16.msra.mxu0 0
      %1916 = vmatprep.subr.bf16.mxu0 0
      %1917 = vmatpush2.bf16.msra.mxu0 0
      %1918 = vmatprep.subr.bf16.mxu0 0
      %1919 = vmatpush2.bf16.msra.mxu0 0
      %1920 = vmatprep.subr.bf16.mxu0 0
      %1921 = vmatpush2.bf16.msra.mxu0 0
      %1922 = vmatprep.subr.bf16.mxu0 0
      %1923 = vmatpush2.bf16.msra.mxu0 0
      %1924 = vmatprep.subr.bf16.mxu0 0
      %1925 = vmatpush2.bf16.msra.mxu0 0
      %1926 = vmatprep.subr.bf16.mxu0 0
      %1927 = vmatpush2.bf16.msra.mxu0 0
      %1928 = vmatprep.mubr.bf16.mxu0 0
      %1929 = vmatmul.mubr.bf16.gmra.mxu0 %v728
      %v1930 = vpop.f32.mrf.mxu0
      %v1931 = vadd.f32 0.0, %v1930
      %v1932 = vpop.f32.mrf.mxu0
      %v1933 = vpop.f32.mrf.mxu0
      %v1934 = vadd.f32 0.0, %v1933
      %v1935 = vpop.f32.mrf.mxu0
      %1936 = vmatprep.mubr.bf16.mxu0 0
      %1937 = vmatmul.mubr.bf16.gmra.mxu0 %v731
      %v1938 = vpop.f32.mrf.mxu0
      %v1939 = vadd.f32 0.0, %v1938
      %v1940 = vpop.f32.mrf.mxu0
      %v1941 = vpop.f32.mrf.mxu0
      %v1942 = vadd.f32 0.0, %v1941
      %v1943 = vpop.f32.mrf.mxu0
      %1944 = vmatprep.mubr.bf16.mxu0 0
      %1945 = vmatmul.mubr.bf16.gmra.mxu0 %v734
      %v1946 = vpop.f32.mrf.mxu0
      %v1947 = vadd.f32 0.0, %v1946
      %v1948 = vpop.f32.mrf.mxu0
      %v1949 = vpop.f32.mrf.mxu0
      %v1950 = vadd.f32 0.0, %v1949
      %v1951 = vpop.f32.mrf.mxu0
      %1952 = vmatprep.mubr.bf16.mxu0 0
      %1953 = vmatmul.mubr.bf16.gmra.mxu0 %v737
      %v1954 = vpop.f32.mrf.mxu0
      %v1955 = vadd.f32 0.0, %v1954
      %v1956 = vpop.f32.mrf.mxu0
      %v1957 = vpop.f32.mrf.mxu0
      %v1958 = vadd.f32 0.0, %v1957
      %v1959 = vpop.f32.mrf.mxu0
      %1960 = vmatprep.mubr.bf16.mxu0 0
      %1961 = vmatmul.mubr.bf16.gmra.mxu0 %v740
      %v1962 = vpop.f32.mrf.mxu0
      %v1963 = vadd.f32 0.0, %v1962
      %v1964 = vpop.f32.mrf.mxu0
      %v1965 = vpop.f32.mrf.mxu0
      %v1966 = vadd.f32 0.0, %v1965
      %v1967 = vpop.f32.mrf.mxu0
      %1968 = vmatprep.mubr.bf16.mxu0 0
      %1969 = vmatmul.mubr.bf16.gmra.mxu0 %v743
      %v1970 = vpop.f32.mrf.mxu0
      %v1971 = vadd.f32 0.0, %v1970
      %v1972 = vpop.f32.mrf.mxu0
      %v1973 = vpop.f32.mrf.mxu0
      %v1974 = vadd.f32 0.0, %v1973
      %v1975 = vpop.f32.mrf.mxu0
      %1976 = vmatprep.mubr.bf16.mxu0 0
      %1977 = vmatmul.mubr.bf16.gmra.mxu0 %v746
      %v1978 = vpop.f32.mrf.mxu0
      %v1979 = vadd.f32 0.0, %v1978
      %v1980 = vpop.f32.mrf.mxu0
      %v1981 = vpop.f32.mrf.mxu0
      %v1982 = vadd.f32 0.0, %v1981
      %v1983 = vpop.f32.mrf.mxu0
      %1984 = vmatprep.mubr.bf16.mxu0 0
      %1985 = vmatmul.mubr.bf16.gmra.mxu0 %v749
      %v1986 = vpop.f32.mrf.mxu0
      %v1987 = vadd.f32 0.0, %v1986
      %v1988 = vpop.f32.mrf.mxu0
      %v1989 = vpop.f32.mrf.mxu0
      %v1990 = vadd.f32 0.0, %v1989
      %v1991 = vpop.f32.mrf.mxu0
      %1992 = vmatprep.mubr.bf16.mxu0 0
      %1993 = vmatmul.mubr.bf16.gmra.mxu0 %v752
      %v1994 = vpop.f32.mrf.mxu0
      %v1995 = vadd.f32 0.0, %v1994
      %v1996 = vpop.f32.mrf.mxu0
      %v1997 = vpop.f32.mrf.mxu0
      %v1998 = vadd.f32 0.0, %v1997
      %v1999 = vpop.f32.mrf.mxu0
      %2000 = vmatprep.mubr.bf16.mxu0 0
      %2001 = vmatmul.mubr.bf16.gmra.mxu0 %v755
      %v2002 = vpop.f32.mrf.mxu0
      %v2003 = vadd.f32 0.0, %v2002
      %v2004 = vpop.f32.mrf.mxu0
      %v2005 = vpop.f32.mrf.mxu0
      %v2006 = vadd.f32 0.0, %v2005
      %v2007 = vpop.f32.mrf.mxu0
      %2008 = vmatprep.mubr.bf16.mxu0 0
      %2009 = vmatmul.mubr.bf16.gmra.mxu0 %v758
      %v2010 = vpop.f32.mrf.mxu0
      %v2011 = vadd.f32 0.0, %v2010
      %v2012 = vpop.f32.mrf.mxu0
      %v2013 = vpop.f32.mrf.mxu0
      %v2014 = vadd.f32 0.0, %v2013
      %v2015 = vpop.f32.mrf.mxu0
      %2016 = vmatprep.mubr.bf16.mxu0 0
      %2017 = vmatmul.mubr.bf16.gmra.mxu0 %v761
      %v2018 = vpop.f32.mrf.mxu0
      %v2019 = vadd.f32 0.0, %v2018
      %v2020 = vpop.f32.mrf.mxu0
      %v2021 = vpop.f32.mrf.mxu0
      %v2022 = vadd.f32 0.0, %v2021
      %v2023 = vpop.f32.mrf.mxu0
      %2024 = vmatprep.mubr.bf16.mxu0 0
      %2025 = vmatmul.mubr.bf16.gmra.mxu0 %v764
      %v2026 = vpop.f32.mrf.mxu0
      %v2027 = vadd.f32 0.0, %v2026
      %v2028 = vpop.f32.mrf.mxu0
      %v2029 = vpop.f32.mrf.mxu0
      %v2030 = vadd.f32 0.0, %v2029
      %v2031 = vpop.f32.mrf.mxu0
      %2032 = vmatprep.mubr.bf16.mxu0 0
      %2033 = vmatmul.mubr.bf16.gmra.mxu0 %v767
      %v2034 = vpop.f32.mrf.mxu0
      %v2035 = vadd.f32 0.0, %v2034
      %v2036 = vpop.f32.mrf.mxu0
      %v2037 = vpop.f32.mrf.mxu0
      %v2038 = vadd.f32 0.0, %v2037
      %v2039 = vpop.f32.mrf.mxu0
      %2040 = vmatprep.mubr.bf16.mxu0 0
      %2041 = vmatmul.mubr.bf16.gmra.mxu0 %v770
      %v2042 = vpop.f32.mrf.mxu0
      %v2043 = vadd.f32 0.0, %v2042
      %v2044 = vpop.f32.mrf.mxu0
      %v2045 = vpop.f32.mrf.mxu0
      %v2046 = vadd.f32 0.0, %v2045
      %v2047 = vpop.f32.mrf.mxu0
      %2048 = vmatprep.mubr.bf16.mxu0 0
      %2049 = vmatmul.mubr.bf16.gmra.mxu0 %v1891
      %v2050 = vpop.f32.mrf.mxu0
      %v2051 = vadd.f32 0.0, %v2050
      %v2052 = vpop.f32.mrf.mxu0
      %v2053 = vpop.f32.mrf.mxu0
      %v2054 = vadd.f32 0.0, %v2053
      %v2055 = vpop.f32.mrf.mxu0
      %2056 = vdwg.mxu0
      %v2057 = vadd.f32 %v1830, %v1931
      %v2058 = vadd.f32 %v1831, %v1934
      %v2059 = vadd.f32 %v1832, %v1939
      %v2060 = vadd.f32 %v1833, %v1942
      %v2061 = vadd.f32 %v1834, %v1947
      %v2062 = vadd.f32 %v1835, %v1950
      %v2063 = vadd.f32 %v1836, %v1955
      %v2064 = vadd.f32 %v1837, %v1958
      %v2065 = vadd.f32 %v1838, %v1963
      %v2066 = vadd.f32 %v1839, %v1966
      %v2067 = vadd.f32 %v1840, %v1971
      %v2068 = vadd.f32 %v1841, %v1974
      %v2069 = vadd.f32 %v1842, %v1979
      %v2070 = vadd.f32 %v1843, %v1982
      %v2071 = vadd.f32 %v1844, %v1987
      %v2072 = vadd.f32 %v1845, %v1990
      %v2073 = vadd.f32 %v1846, %v1995
      %v2074 = vadd.f32 %v1847, %v1998
      %v2075 = vadd.f32 %v1848, %v2003
      %v2076 = vadd.f32 %v1849, %v2006
      %v2077 = vadd.f32 %v1850, %v2011
      %v2078 = vadd.f32 %v1851, %v2014
      %v2079 = vadd.f32 %v1852, %v2019
      %v2080 = vadd.f32 %v1853, %v2022
      %v2081 = vadd.f32 %v1854, %v2027
      %v2082 = vadd.f32 %v1855, %v2030
      %v2083 = vadd.f32 %v1856, %v2035
      %v2084 = vadd.f32 %v1857, %v2038
      %v2085 = vadd.f32 %v1858, %v2043
      %v2086 = vadd.f32 %v1859, %v2046
      %v2087 = vadd.f32 %v1860, %v2051
      %v2088 = vadd.f32 %v1861, %v2054
      %v2090 = vrot.slane %v276, 5
      %v2091 = vrot.slane %v2090, 4
      %v2092 = vrot.slane %v277, 5
      %v2093 = vsel %vm1247, %v2091, %v2092
      %v2094 = vrot.slane %v2092, 4
      %v2095 = vrot.slane %v278, 5
      %v2096 = vsel %vm1247, %v2094, %v2095
      %v2097 = vld [vmem:[%s1 + $0x8] sm:$0xc]
      %v2098 = vunpack.c.l.b16 %v2093
      %v2099 = vunpack.c.l.b16 %v2096
      %v2100 = vpack.c.b16 %v2099, %v2098
      %v2102 = vunpack.c.l.b16 %v2097
      %v2103 = vpack.c.b16 %v2102, %v2102
      %v2104 = vrot.slane %v2103, 2
      %v2106 = vsel %vm723, %v2100, 0
      %v2109 = vsel %vm772, %v2104, 0
      %2111 = vmatprep.subr.bf16.mxu0 0
      %2112 = vmatpush1.bf16.msra.mxu0 0
      %2113 = vmatprep.subr.bf16.mxu0 0
      %2114 = vmatpush1.bf16.msra.mxu0 0
      %2115 = vmatprep.subr.bf16.mxu0 0
      %2116 = vmatpush1.bf16.msra.mxu0 0
      %2117 = vmatprep.subr.bf16.mxu0 0
      %2118 = vmatpush1.bf16.msra.mxu0 0
      %2119 = vmatprep.subr.bf16.mxu0 0
      %2120 = vmatpush1.bf16.msra.mxu0 0
      %2121 = vmatprep.subr.bf16.mxu0 0
      %2122 = vmatpush1.bf16.msra.mxu0 0
      %2123 = vmatprep.subr.bf16.mxu0 0
      %2124 = vmatpush1.bf16.msra.mxu0 0
      %2125 = vmatprep.subr.bf16.mxu0 0
      %2126 = vmatpush1.bf16.msra.mxu0 %v2109
      %2127 = vmatprep.subr.bf16.mxu0 0
      %2128 = vmatpush2.bf16.msra.mxu0 0
      %2129 = vmatprep.subr.bf16.mxu0 0
      %2130 = vmatpush2.bf16.msra.mxu0 0
      %2131 = vmatprep.subr.bf16.mxu0 0
      %2132 = vmatpush2.bf16.msra.mxu0 0
      %2133 = vmatprep.subr.bf16.mxu0 0
      %2134 = vmatpush2.bf16.msra.mxu0 0
      %2135 = vmatprep.subr.bf16.mxu0 0
      %2136 = vmatpush2.bf16.msra.mxu0 0
      %2137 = vmatprep.subr.bf16.mxu0 0
      %2138 = vmatpush2.bf16.msra.mxu0 0
      %2139 = vmatprep.subr.bf16.mxu0 0
      %2140 = vmatpush2.bf16.msra.mxu0 0
      %2141 = vmatprep.subr.bf16.mxu0 0
      %2142 = vmatpush2.bf16.msra.mxu0 0
      %2143 = vmatprep.mubr.bf16.mxu0 0
      %2144 = vmatmul.mubr.bf16.gmra.mxu0 %v1413
      %v2145 = vpop.f32.mrf.mxu0
      %v2146 = vadd.f32 0.0, %v2145
      %v2147 = vpop.f32.mrf.mxu0
      %v2148 = vpop.f32.mrf.mxu0
      %v2149 = vadd.f32 0.0, %v2148
      %v2150 = vpop.f32.mrf.mxu0
      %2151 = vmatprep.mubr.bf16.mxu0 0
      %2152 = vmatmul.mubr.bf16.gmra.mxu0 %v1416
      %v2153 = vpop.f32.mrf.mxu0
      %v2154 = vadd.f32 0.0, %v2153
      %v2155 = vpop.f32.mrf.mxu0
      %v2156 = vpop.f32.mrf.mxu0
      %v2157 = vadd.f32 0.0, %v2156
      %v2158 = vpop.f32.mrf.mxu0
      %2159 = vmatprep.mubr.bf16.mxu0 0
      %2160 = vmatmul.mubr.bf16.gmra.mxu0 %v1419
      %v2161 = vpop.f32.mrf.mxu0
      %v2162 = vadd.f32 0.0, %v2161
      %v2163 = vpop.f32.mrf.mxu0
      %v2164 = vpop.f32.mrf.mxu0
      %v2165 = vadd.f32 0.0, %v2164
      %v2166 = vpop.f32.mrf.mxu0
      %2167 = vmatprep.mubr.bf16.mxu0 0
      %2168 = vmatmul.mubr.bf16.gmra.mxu0 %v1422
      %v2169 = vpop.f32.mrf.mxu0
      %v2170 = vadd.f32 0.0, %v2169
      %v2171 = vpop.f32.mrf.mxu0
      %v2172 = vpop.f32.mrf.mxu0
      %v2173 = vadd.f32 0.0, %v2172
      %v2174 = vpop.f32.mrf.mxu0
      %2175 = vmatprep.mubr.bf16.mxu0 0
      %2176 = vmatmul.mubr.bf16.gmra.mxu0 %v1425
      %v2177 = vpop.f32.mrf.mxu0
      %v2178 = vadd.f32 0.0, %v2177
      %v2179 = vpop.f32.mrf.mxu0
      %v2180 = vpop.f32.mrf.mxu0
      %v2181 = vadd.f32 0.0, %v2180
      %v2182 = vpop.f32.mrf.mxu0
      %2183 = vmatprep.mubr.bf16.mxu0 0
      %2184 = vmatmul.mubr.bf16.gmra.mxu0 %v1428
      %v2185 = vpop.f32.mrf.mxu0
      %v2186 = vadd.f32 0.0, %v2185
      %v2187 = vpop.f32.mrf.mxu0
      %v2188 = vpop.f32.mrf.mxu0
      %v2189 = vadd.f32 0.0, %v2188
      %v2190 = vpop.f32.mrf.mxu0
      %2191 = vmatprep.mubr.bf16.mxu0 0
      %2192 = vmatmul.mubr.bf16.gmra.mxu0 %v1431
      %v2193 = vpop.f32.mrf.mxu0
      %v2194 = vadd.f32 0.0, %v2193
      %v2195 = vpop.f32.mrf.mxu0
      %v2196 = vpop.f32.mrf.mxu0
      %v2197 = vadd.f32 0.0, %v2196
      %v2198 = vpop.f32.mrf.mxu0
      %2199 = vmatprep.mubr.bf16.mxu0 0
      %2200 = vmatmul.mubr.bf16.gmra.mxu0 %v1434
      %v2201 = vpop.f32.mrf.mxu0
      %v2202 = vadd.f32 0.0, %v2201
      %v2203 = vpop.f32.mrf.mxu0
      %v2204 = vpop.f32.mrf.mxu0
      %v2205 = vadd.f32 0.0, %v2204
      %v2206 = vpop.f32.mrf.mxu0
      %2207 = vmatprep.mubr.bf16.mxu0 0
      %2208 = vmatmul.mubr.bf16.gmra.mxu0 %v1437
      %v2209 = vpop.f32.mrf.mxu0
      %v2210 = vadd.f32 0.0, %v2209
      %v2211 = vpop.f32.mrf.mxu0
      %v2212 = vpop.f32.mrf.mxu0
      %v2213 = vadd.f32 0.0, %v2212
      %v2214 = vpop.f32.mrf.mxu0
      %2215 = vmatprep.mubr.bf16.mxu0 0
      %2216 = vmatmul.mubr.bf16.gmra.mxu0 %v1440
      %v2217 = vpop.f32.mrf.mxu0
      %v2218 = vadd.f32 0.0, %v2217
      %v2219 = vpop.f32.mrf.mxu0
      %v2220 = vpop.f32.mrf.mxu0
      %v2221 = vadd.f32 0.0, %v2220
      %v2222 = vpop.f32.mrf.mxu0
      %2223 = vmatprep.mubr.bf16.mxu0 0
      %2224 = vmatmul.mubr.bf16.gmra.mxu0 %v1443
      %v2225 = vpop.f32.mrf.mxu0
      %v2226 = vadd.f32 0.0, %v2225
      %v2227 = vpop.f32.mrf.mxu0
      %v2228 = vpop.f32.mrf.mxu0
      %v2229 = vadd.f32 0.0, %v2228
      %v2230 = vpop.f32.mrf.mxu0
      %2231 = vmatprep.mubr.bf16.mxu0 0
      %2232 = vmatmul.mubr.bf16.gmra.mxu0 %v1446
      %v2233 = vpop.f32.mrf.mxu0
      %v2234 = vadd.f32 0.0, %v2233
      %v2235 = vpop.f32.mrf.mxu0
      %v2236 = vpop.f32.mrf.mxu0
      %v2237 = vadd.f32 0.0, %v2236
      %v2238 = vpop.f32.mrf.mxu0
      %2239 = vmatprep.mubr.bf16.mxu0 0
      %2240 = vmatmul.mubr.bf16.gmra.mxu0 %v1449
      %v2241 = vpop.f32.mrf.mxu0
      %v2242 = vadd.f32 0.0, %v2241
      %v2243 = vpop.f32.mrf.mxu0
      %v2244 = vpop.f32.mrf.mxu0
      %v2245 = vadd.f32 0.0, %v2244
      %v2246 = vpop.f32.mrf.mxu0
      %2247 = vmatprep.mubr.bf16.mxu0 0
      %2248 = vmatmul.mubr.bf16.gmra.mxu0 %v1452
      %v2249 = vpop.f32.mrf.mxu0
      %v2250 = vadd.f32 0.0, %v2249
      %v2251 = vpop.f32.mrf.mxu0
      %v2252 = vpop.f32.mrf.mxu0
      %v2253 = vadd.f32 0.0, %v2252
      %v2254 = vpop.f32.mrf.mxu0
      %2255 = vmatprep.mubr.bf16.mxu0 0
      %2256 = vmatmul.mubr.bf16.gmra.mxu0 %v1455
      %v2257 = vpop.f32.mrf.mxu0
      %v2258 = vadd.f32 0.0, %v2257
      %v2259 = vpop.f32.mrf.mxu0
      %v2260 = vpop.f32.mrf.mxu0
      %v2261 = vadd.f32 0.0, %v2260
      %v2262 = vpop.f32.mrf.mxu0
      %2263 = vmatprep.mubr.bf16.mxu0 0
      %2264 = vmatmul.mubr.bf16.gmra.mxu0 %v2106
      %v2265 = vpop.f32.mrf.mxu0
      %v2266 = vadd.f32 0.0, %v2265
      %v2267 = vpop.f32.mrf.mxu0
      %v2268 = vpop.f32.mrf.mxu0
      %v2269 = vadd.f32 0.0, %v2268
      %v2270 = vpop.f32.mrf.mxu0
      %2271 = vdwg.mxu0
      %v2272 = vadd.f32 %v2057, %v2146
      %v2273 = vadd.f32 %v2058, %v2149
      %v2274 = vadd.f32 %v2059, %v2154
      %v2275 = vadd.f32 %v2060, %v2157
      %v2276 = vadd.f32 %v2061, %v2162
      %v2277 = vadd.f32 %v2062, %v2165
      %v2278 = vadd.f32 %v2063, %v2170
      %v2279 = vadd.f32 %v2064, %v2173
      %v2280 = vadd.f32 %v2065, %v2178
      %v2281 = vadd.f32 %v2066, %v2181
      %v2282 = vadd.f32 %v2067, %v2186
      %v2283 = vadd.f32 %v2068, %v2189
      %v2284 = vadd.f32 %v2069, %v2194
      %v2285 = vadd.f32 %v2070, %v2197
      %v2286 = vadd.f32 %v2071, %v2202
      %v2287 = vadd.f32 %v2072, %v2205
      %v2288 = vadd.f32 %v2073, %v2210
      %v2289 = vadd.f32 %v2074, %v2213
      %v2290 = vadd.f32 %v2075, %v2218
      %v2291 = vadd.f32 %v2076, %v2221
      %v2292 = vadd.f32 %v2077, %v2226
      %v2293 = vadd.f32 %v2078, %v2229
      %v2294 = vadd.f32 %v2079, %v2234
      %v2295 = vadd.f32 %v2080, %v2237
      %v2296 = vadd.f32 %v2081, %v2242
      %v2297 = vadd.f32 %v2082, %v2245
      %v2298 = vadd.f32 %v2083, %v2250
      %v2299 = vadd.f32 %v2084, %v2253
      %v2300 = vadd.f32 %v2085, %v2258
      %v2301 = vadd.f32 %v2086, %v2261
      %v2302 = vadd.f32 %v2087, %v2266
      %v2303 = vadd.f32 %v2088, %v2269
      %v2304 = vld [vmem:[%s1 + $0xc] sm:$0x3]
      %v2307 = vunpack.c.l.b16 %v279
      %v2308 = vunpack.c.l.b16 %v280
      %v2309 = vpack.c.b16 %v2308, %v2307
      %v2311 = vsel %vm723, %v2309, 0
      %v2314 = vsel %vm772, %v2304, 0
      %2316 = vmatprep.subr.bf16.mxu0 0
      %2317 = vmatpush1.bf16.msra.mxu0 0
      %2318 = vmatprep.subr.bf16.mxu0 0
      %2319 = vmatpush1.bf16.msra.mxu0 0
      %2320 = vmatprep.subr.bf16.mxu0 0
      %2321 = vmatpush1.bf16.msra.mxu0 0
      %2322 = vmatprep.subr.bf16.mxu0 0
      %2323 = vmatpush1.bf16.msra.mxu0 0
      %2324 = vmatprep.subr.bf16.mxu0 0
      %2325 = vmatpush1.bf16.msra.mxu0 0
      %2326 = vmatprep.subr.bf16.mxu0 0
      %2327 = vmatpush1.bf16.msra.mxu0 0
      %2328 = vmatprep.subr.bf16.mxu0 0
      %2329 = vmatpush1.bf16.msra.mxu0 0
      %2330 = vmatprep.subr.bf16.mxu0 0
      %2331 = vmatpush1.bf16.msra.mxu0 %v2314
      %2332 = vmatprep.subr.bf16.mxu0 0
      %2333 = vmatpush2.bf16.msra.mxu0 0
      %2334 = vmatprep.subr.bf16.mxu0 0
      %2335 = vmatpush2.bf16.msra.mxu0 0
      %2336 = vmatprep.subr.bf16.mxu0 0
      %2337 = vmatpush2.bf16.msra.mxu0 0
      %2338 = vmatprep.subr.bf16.mxu0 0
      %2339 = vmatpush2.bf16.msra.mxu0 0
      %2340 = vmatprep.subr.bf16.mxu0 0
      %2341 = vmatpush2.bf16.msra.mxu0 0
      %2342 = vmatprep.subr.bf16.mxu0 0
      %2343 = vmatpush2.bf16.msra.mxu0 0
      %2344 = vmatprep.subr.bf16.mxu0 0
      %2345 = vmatpush2.bf16.msra.mxu0 0
      %2346 = vmatprep.subr.bf16.mxu0 0
      %2347 = vmatpush2.bf16.msra.mxu0 0
      %2348 = vmatprep.mubr.bf16.mxu0 0
      %2349 = vmatmul.mubr.bf16.gmra.mxu0 %v1024
      %v2350 = vpop.f32.mrf.mxu0
      %v2351 = vadd.f32 0.0, %v2350
      %v2352 = vpop.f32.mrf.mxu0
      %v2353 = vpop.f32.mrf.mxu0
      %v2354 = vadd.f32 0.0, %v2353
      %v2355 = vpop.f32.mrf.mxu0
      %2356 = vmatprep.mubr.bf16.mxu0 0
      %2357 = vmatmul.mubr.bf16.gmra.mxu0 %v1027
      %v2358 = vpop.f32.mrf.mxu0
      %v2359 = vadd.f32 0.0, %v2358
      %v2360 = vpop.f32.mrf.mxu0
      %v2361 = vpop.f32.mrf.mxu0
      %v2362 = vadd.f32 0.0, %v2361
      %v2363 = vpop.f32.mrf.mxu0
      %2364 = vmatprep.mubr.bf16.mxu0 0
      %2365 = vmatmul.mubr.bf16.gmra.mxu0 %v1030
      %v2366 = vpop.f32.mrf.mxu0
      %v2367 = vadd.f32 0.0, %v2366
      %v2368 = vpop.f32.mrf.mxu0
      %v2369 = vpop.f32.mrf.mxu0
      %v2370 = vadd.f32 0.0, %v2369
      %v2371 = vpop.f32.mrf.mxu0
      %2372 = vmatprep.mubr.bf16.mxu0 0
      %2373 = vmatmul.mubr.bf16.gmra.mxu0 %v1033
      %v2374 = vpop.f32.mrf.mxu0
      %v2375 = vadd.f32 0.0, %v2374
      %v2376 = vpop.f32.mrf.mxu0
      %v2377 = vpop.f32.mrf.mxu0
      %v2378 = vadd.f32 0.0, %v2377
      %v2379 = vpop.f32.mrf.mxu0
      %2380 = vmatprep.mubr.bf16.mxu0 0
      %2381 = vmatmul.mubr.bf16.gmra.mxu0 %v1036
      %v2382 = vpop.f32.mrf.mxu0
      %v2383 = vadd.f32 0.0, %v2382
      %v2384 = vpop.f32.mrf.mxu0
      %v2385 = vpop.f32.mrf.mxu0
      %v2386 = vadd.f32 0.0, %v2385
      %v2387 = vpop.f32.mrf.mxu0
      %2388 = vmatprep.mubr.bf16.mxu0 0
      %2389 = vmatmul.mubr.bf16.gmra.mxu0 %v1039
      %v2390 = vpop.f32.mrf.mxu0
      %v2391 = vadd.f32 0.0, %v2390
      %v2392 = vpop.f32.mrf.mxu0
      %v2393 = vpop.f32.mrf.mxu0
      %v2394 = vadd.f32 0.0, %v2393
      %v2395 = vpop.f32.mrf.mxu0
      %2396 = vmatprep.mubr.bf16.mxu0 0
      %2397 = vmatmul.mubr.bf16.gmra.mxu0 %v1042
      %v2398 = vpop.f32.mrf.mxu0
      %v2399 = vadd.f32 0.0, %v2398
      %v2400 = vpop.f32.mrf.mxu0
      %v2401 = vpop.f32.mrf.mxu0
      %v2402 = vadd.f32 0.0, %v2401
      %v2403 = vpop.f32.mrf.mxu0
      %2404 = vmatprep.mubr.bf16.mxu0 0
      %2405 = vmatmul.mubr.bf16.gmra.mxu0 %v1045
      %v2406 = vpop.f32.mrf.mxu0
      %v2407 = vadd.f32 0.0, %v2406
      %v2408 = vpop.f32.mrf.mxu0
      %v2409 = vpop.f32.mrf.mxu0
      %v2410 = vadd.f32 0.0, %v2409
      %v2411 = vpop.f32.mrf.mxu0
      %2412 = vmatprep.mubr.bf16.mxu0 0
      %2413 = vmatmul.mubr.bf16.gmra.mxu0 %v1048
      %v2414 = vpop.f32.mrf.mxu0
      %v2415 = vadd.f32 0.0, %v2414
      %v2416 = vpop.f32.mrf.mxu0
      %v2417 = vpop.f32.mrf.mxu0
      %v2418 = vadd.f32 0.0, %v2417
      %v2419 = vpop.f32.mrf.mxu0
      %2420 = vmatprep.mubr.bf16.mxu0 0
      %2421 = vmatmul.mubr.bf16.gmra.mxu0 %v1051
      %v2422 = vpop.f32.mrf.mxu0
      %v2423 = vadd.f32 0.0, %v2422
      %v2424 = vpop.f32.mrf.mxu0
      %v2425 = vpop.f32.mrf.mxu0
      %v2426 = vadd.f32 0.0, %v2425
      %v2427 = vpop.f32.mrf.mxu0
      %2428 = vmatprep.mubr.bf16.mxu0 0
      %2429 = vmatmul.mubr.bf16.gmra.mxu0 %v1054
      %v2430 = vpop.f32.mrf.mxu0
      %v2431 = vadd.f32 0.0, %v2430
      %v2432 = vpop.f32.mrf.mxu0
      %v2433 = vpop.f32.mrf.mxu0
      %v2434 = vadd.f32 0.0, %v2433
      %v2435 = vpop.f32.mrf.mxu0
      %2436 = vmatprep.mubr.bf16.mxu0 0
      %2437 = vmatmul.mubr.bf16.gmra.mxu0 %v1057
      %v2438 = vpop.f32.mrf.mxu0
      %v2439 = vadd.f32 0.0, %v2438
      %v2440 = vpop.f32.mrf.mxu0
      %v2441 = vpop.f32.mrf.mxu0
      %v2442 = vadd.f32 0.0, %v2441
      %v2443 = vpop.f32.mrf.mxu0
      %2444 = vmatprep.mubr.bf16.mxu0 0
      %2445 = vmatmul.mubr.bf16.gmra.mxu0 %v1060
      %v2446 = vpop.f32.mrf.mxu0
      %v2447 = vadd.f32 0.0, %v2446
      %v2448 = vpop.f32.mrf.mxu0
      %v2449 = vpop.f32.mrf.mxu0
      %v2450 = vadd.f32 0.0, %v2449
      %v2451 = vpop.f32.mrf.mxu0
      %2452 = vmatprep.mubr.bf16.mxu0 0
      %2453 = vmatmul.mubr.bf16.gmra.mxu0 %v1063
      %v2454 = vpop.f32.mrf.mxu0
      %v2455 = vadd.f32 0.0, %v2454
      %v2456 = vpop.f32.mrf.mxu0
      %v2457 = vpop.f32.mrf.mxu0
      %v2458 = vadd.f32 0.0, %v2457
      %v2459 = vpop.f32.mrf.mxu0
      %2460 = vmatprep.mubr.bf16.mxu0 0
      %2461 = vmatmul.mubr.bf16.gmra.mxu0 %v1664
      %v2462 = vpop.f32.mrf.mxu0
      %v2463 = vadd.f32 0.0, %v2462
      %v2464 = vpop.f32.mrf.mxu0
      %v2465 = vpop.f32.mrf.mxu0
      %v2466 = vadd.f32 0.0, %v2465
      %v2467 = vpop.f32.mrf.mxu0
      %2468 = vmatprep.mubr.bf16.mxu0 0
      %2469 = vmatmul.mubr.bf16.gmra.mxu0 %v2311
      %v2470 = vpop.f32.mrf.mxu0
      %v2471 = vadd.f32 0.0, %v2470
      %v2472 = vpop.f32.mrf.mxu0
      %v2473 = vpop.f32.mrf.mxu0
      %v2474 = vadd.f32 0.0, %v2473
      %v2475 = vpop.f32.mrf.mxu0
      %2476 = vdwg.mxu0
      %v2477 = vadd.f32 %v2272, %v2351
      %v2478 = vadd.f32 %v2273, %v2354
      %v2479 = vadd.f32 %v2274, %v2359
      %v2480 = vadd.f32 %v2275, %v2362
      %v2481 = vadd.f32 %v2276, %v2367
      %v2482 = vadd.f32 %v2277, %v2370
      %v2483 = vadd.f32 %v2278, %v2375
      %v2484 = vadd.f32 %v2279, %v2378
      %v2485 = vadd.f32 %v2280, %v2383
      %v2486 = vadd.f32 %v2281, %v2386
      %v2487 = vadd.f32 %v2282, %v2391
      %v2488 = vadd.f32 %v2283, %v2394
      %v2489 = vadd.f32 %v2284, %v2399
      %v2490 = vadd.f32 %v2285, %v2402
      %v2491 = vadd.f32 %v2286, %v2407
      %v2492 = vadd.f32 %v2287, %v2410
      %v2493 = vadd.f32 %v2288, %v2415
      %v2494 = vadd.f32 %v2289, %v2418
      %v2495 = vadd.f32 %v2290, %v2423
      %v2496 = vadd.f32 %v2291, %v2426
      %v2497 = vadd.f32 %v2292, %v2431
      %v2498 = vadd.f32 %v2293, %v2434
      %v2499 = vadd.f32 %v2294, %v2439
      %v2500 = vadd.f32 %v2295, %v2442
      %v2501 = vadd.f32 %v2296, %v2447
      %v2502 = vadd.f32 %v2297, %v2450
      %v2503 = vadd.f32 %v2298, %v2455
      %v2504 = vadd.f32 %v2299, %v2458
      %v2505 = vadd.f32 %v2300, %v2463
      %v2506 = vadd.f32 %v2301, %v2466
      %v2507 = vadd.f32 %v2302, %v2471
      %v2508 = vadd.f32 %v2303, %v2474
      %v2510 = vshrl.u32 %v279, 16
      %v2512 = vrot.slane %v2510, 4
      %v2513 = vshll.u32 %v279, 16
      %v2515 = vrot.slane %v2513, 5
      %v2516 = vor.u32 %v2512, %v2515
      %v2517 = vrot.slane %v2516, 4
      %v2519 = vshll.u32 %v280, 16
      %v2521 = vrot.slane %v2519, 5
      %v2522 = vsel %vm285, %v2517, %v2521
      %v2523 = vshrl.u32 %v280, 16
      %v2525 = vrot.slane %v2523, 4
      %v2526 = vor.u32 %v2525, %v2521
      %v2527 = vrot.slane %v2526, 4
      %v2529 = vshll.u32 %v281, 16
      %v2531 = vrot.slane %v2529, 5
      %v2532 = vsel %vm285, %v2527, %v2531
      %v2533 = vld [vmem:[%s1 + $0xc] sm:$0xc]
      %v2534 = vunpack.c.l.b16 %v2522
      %v2535 = vunpack.c.l.b16 %v2532
      %v2536 = vpack.c.b16 %v2535, %v2534
      %v2538 = vunpack.c.l.b16 %v2533
      %v2539 = vpack.c.b16 %v2538, %v2538
      %v2540 = vrot.slane %v2539, 2
      %v2542 = vsel %vm723, %v2536, 0
      %v2545 = vsel %vm772, %v2540, 0
      %2547 = vmatprep.subr.bf16.mxu0 0
      %2548 = vmatpush1.bf16.msra.mxu0 0
      %2549 = vmatprep.subr.bf16.mxu0 0
      %2550 = vmatpush1.bf16.msra.mxu0 0
      %2551 = vmatprep.subr.bf16.mxu0 0
      %2552 = vmatpush1.bf16.msra.mxu0 0
      %2553 = vmatprep.subr.bf16.mxu0 0
      %2554 = vmatpush1.bf16.msra.mxu0 0
      %2555 = vmatprep.subr.bf16.mxu0 0
      %2556 = vmatpush1.bf16.msra.mxu0 0
      %2557 = vmatprep.subr.bf16.mxu0 0
      %2558 = vmatpush1.bf16.msra.mxu0 0
      %2559 = vmatprep.subr.bf16.mxu0 0
      %2560 = vmatpush1.bf16.msra.mxu0 0
      %2561 = vmatprep.subr.bf16.mxu0 0
      %2562 = vmatpush1.bf16.msra.mxu0 %v2545
      %2563 = vmatprep.subr.bf16.mxu0 0
      %2564 = vmatpush2.bf16.msra.mxu0 0
      %2565 = vmatprep.subr.bf16.mxu0 0
      %2566 = vmatpush2.bf16.msra.mxu0 0
      %2567 = vmatprep.subr.bf16.mxu0 0
      %2568 = vmatpush2.bf16.msra.mxu0 0
      %2569 = vmatprep.subr.bf16.mxu0 0
      %2570 = vmatpush2.bf16.msra.mxu0 0
      %2571 = vmatprep.subr.bf16.mxu0 0
      %2572 = vmatpush2.bf16.msra.mxu0 0
      %2573 = vmatprep.subr.bf16.mxu0 0
      %2574 = vmatpush2.bf16.msra.mxu0 0
      %2575 = vmatprep.subr.bf16.mxu0 0
      %2576 = vmatpush2.bf16.msra.mxu0 0
      %2577 = vmatprep.subr.bf16.mxu0 0
      %2578 = vmatpush2.bf16.msra.mxu0 0
      %2579 = vmatprep.mubr.bf16.mxu0 0
      %2580 = vmatmul.mubr.bf16.gmra.mxu0 %v731
      %v2581 = vpop.f32.mrf.mxu0
      %v2582 = vadd.f32 0.0, %v2581
      %v2583 = vpop.f32.mrf.mxu0
      %v2584 = vpop.f32.mrf.mxu0
      %v2585 = vadd.f32 0.0, %v2584
      %v2586 = vpop.f32.mrf.mxu0
      %2587 = vmatprep.mubr.bf16.mxu0 0
      %2588 = vmatmul.mubr.bf16.gmra.mxu0 %v734
      %v2589 = vpop.f32.mrf.mxu0
      %v2590 = vadd.f32 0.0, %v2589
      %v2591 = vpop.f32.mrf.mxu0
      %v2592 = vpop.f32.mrf.mxu0
      %v2593 = vadd.f32 0.0, %v2592
      %v2594 = vpop.f32.mrf.mxu0
      %2595 = vmatprep.mubr.bf16.mxu0 0
      %2596 = vmatmul.mubr.bf16.gmra.mxu0 %v737
      %v2597 = vpop.f32.mrf.mxu0
      %v2598 = vadd.f32 0.0, %v2597
      %v2599 = vpop.f32.mrf.mxu0
      %v2600 = vpop.f32.mrf.mxu0
      %v2601 = vadd.f32 0.0, %v2600
      %v2602 = vpop.f32.mrf.mxu0
      %2603 = vmatprep.mubr.bf16.mxu0 0
      %2604 = vmatmul.mubr.bf16.gmra.mxu0 %v740
      %v2605 = vpop.f32.mrf.mxu0
      %v2606 = vadd.f32 0.0, %v2605
      %v2607 = vpop.f32.mrf.mxu0
      %v2608 = vpop.f32.mrf.mxu0
      %v2609 = vadd.f32 0.0, %v2608
      %v2610 = vpop.f32.mrf.mxu0
      %2611 = vmatprep.mubr.bf16.mxu0 0
      %2612 = vmatmul.mubr.bf16.gmra.mxu0 %v743
      %v2613 = vpop.f32.mrf.mxu0
      %v2614 = vadd.f32 0.0, %v2613
      %v2615 = vpop.f32.mrf.mxu0
      %v2616 = vpop.f32.mrf.mxu0
      %v2617 = vadd.f32 0.0, %v2616
      %v2618 = vpop.f32.mrf.mxu0
      %2619 = vmatprep.mubr.bf16.mxu0 0
      %2620 = vmatmul.mubr.bf16.gmra.mxu0 %v746
      %v2621 = vpop.f32.mrf.mxu0
      %v2622 = vadd.f32 0.0, %v2621
      %v2623 = vpop.f32.mrf.mxu0
      %v2624 = vpop.f32.mrf.mxu0
      %v2625 = vadd.f32 0.0, %v2624
      %v2626 = vpop.f32.mrf.mxu0
      %2627 = vmatprep.mubr.bf16.mxu0 0
      %2628 = vmatmul.mubr.bf16.gmra.mxu0 %v749
      %v2629 = vpop.f32.mrf.mxu0
      %v2630 = vadd.f32 0.0, %v2629
      %v2631 = vpop.f32.mrf.mxu0
      %v2632 = vpop.f32.mrf.mxu0
      %v2633 = vadd.f32 0.0, %v2632
      %v2634 = vpop.f32.mrf.mxu0
      %2635 = vmatprep.mubr.bf16.mxu0 0
      %2636 = vmatmul.mubr.bf16.gmra.mxu0 %v752
      %v2637 = vpop.f32.mrf.mxu0
      %v2638 = vadd.f32 0.0, %v2637
      %v2639 = vpop.f32.mrf.mxu0
      %v2640 = vpop.f32.mrf.mxu0
      %v2641 = vadd.f32 0.0, %v2640
      %v2642 = vpop.f32.mrf.mxu0
      %2643 = vmatprep.mubr.bf16.mxu0 0
      %2644 = vmatmul.mubr.bf16.gmra.mxu0 %v755
      %v2645 = vpop.f32.mrf.mxu0
      %v2646 = vadd.f32 0.0, %v2645
      %v2647 = vpop.f32.mrf.mxu0
      %v2648 = vpop.f32.mrf.mxu0
      %v2649 = vadd.f32 0.0, %v2648
      %v2650 = vpop.f32.mrf.mxu0
      %2651 = vmatprep.mubr.bf16.mxu0 0
      %2652 = vmatmul.mubr.bf16.gmra.mxu0 %v758
      %v2653 = vpop.f32.mrf.mxu0
      %v2654 = vadd.f32 0.0, %v2653
      %v2655 = vpop.f32.mrf.mxu0
      %v2656 = vpop.f32.mrf.mxu0
      %v2657 = vadd.f32 0.0, %v2656
      %v2658 = vpop.f32.mrf.mxu0
      %2659 = vmatprep.mubr.bf16.mxu0 0
      %2660 = vmatmul.mubr.bf16.gmra.mxu0 %v761
      %v2661 = vpop.f32.mrf.mxu0
      %v2662 = vadd.f32 0.0, %v2661
      %v2663 = vpop.f32.mrf.mxu0
      %v2664 = vpop.f32.mrf.mxu0
      %v2665 = vadd.f32 0.0, %v2664
      %v2666 = vpop.f32.mrf.mxu0
      %2667 = vmatprep.mubr.bf16.mxu0 0
      %2668 = vmatmul.mubr.bf16.gmra.mxu0 %v764
      %v2669 = vpop.f32.mrf.mxu0
      %v2670 = vadd.f32 0.0, %v2669
      %v2671 = vpop.f32.mrf.mxu0
      %v2672 = vpop.f32.mrf.mxu0
      %v2673 = vadd.f32 0.0, %v2672
      %v2674 = vpop.f32.mrf.mxu0
      %2675 = vmatprep.mubr.bf16.mxu0 0
      %2676 = vmatmul.mubr.bf16.gmra.mxu0 %v767
      %v2677 = vpop.f32.mrf.mxu0
      %v2678 = vadd.f32 0.0, %v2677
      %v2679 = vpop.f32.mrf.mxu0
      %v2680 = vpop.f32.mrf.mxu0
      %v2681 = vadd.f32 0.0, %v2680
      %v2682 = vpop.f32.mrf.mxu0
      %2683 = vmatprep.mubr.bf16.mxu0 0
      %2684 = vmatmul.mubr.bf16.gmra.mxu0 %v770
      %v2685 = vpop.f32.mrf.mxu0
      %v2686 = vadd.f32 0.0, %v2685
      %v2687 = vpop.f32.mrf.mxu0
      %v2688 = vpop.f32.mrf.mxu0
      %v2689 = vadd.f32 0.0, %v2688
      %v2690 = vpop.f32.mrf.mxu0
      %2691 = vmatprep.mubr.bf16.mxu0 0
      %2692 = vmatmul.mubr.bf16.gmra.mxu0 %v1891
      %v2693 = vpop.f32.mrf.mxu0
      %v2694 = vadd.f32 0.0, %v2693
      %v2695 = vpop.f32.mrf.mxu0
      %v2696 = vpop.f32.mrf.mxu0
      %v2697 = vadd.f32 0.0, %v2696
      %v2698 = vpop.f32.mrf.mxu0
      %2699 = vmatprep.mubr.bf16.mxu0 0
      %2700 = vmatmul.mubr.bf16.gmra.mxu0 %v2542
      %v2701 = vpop.f32.mrf.mxu0
      %v2702 = vadd.f32 0.0, %v2701
      %v2703 = vpop.f32.mrf.mxu0
      %v2704 = vpop.f32.mrf.mxu0
      %v2705 = vadd.f32 0.0, %v2704
      %v2706 = vpop.f32.mrf.mxu0
      %2707 = vdwg.mxu0
      %v2708 = vadd.f32 %v2477, %v2582
      %v2709 = vadd.f32 %v2478, %v2585
      %v2710 = vadd.f32 %v2479, %v2590
      %v2711 = vadd.f32 %v2480, %v2593
      %v2712 = vadd.f32 %v2481, %v2598
      %v2713 = vadd.f32 %v2482, %v2601
      %v2714 = vadd.f32 %v2483, %v2606
      %v2715 = vadd.f32 %v2484, %v2609
      %v2716 = vadd.f32 %v2485, %v2614
      %v2717 = vadd.f32 %v2486, %v2617
      %v2718 = vadd.f32 %v2487, %v2622
      %v2719 = vadd.f32 %v2488, %v2625
      %v2720 = vadd.f32 %v2489, %v2630
      %v2721 = vadd.f32 %v2490, %v2633
      %v2722 = vadd.f32 %v2491, %v2638
      %v2723 = vadd.f32 %v2492, %v2641
      %v2724 = vadd.f32 %v2493, %v2646
      %v2725 = vadd.f32 %v2494, %v2649
      %v2726 = vadd.f32 %v2495, %v2654
      %v2727 = vadd.f32 %v2496, %v2657
      %v2728 = vadd.f32 %v2497, %v2662
      %v2729 = vadd.f32 %v2498, %v2665
      %v2730 = vadd.f32 %v2499, %v2670
      %v2731 = vadd.f32 %v2500, %v2673
      %v2732 = vadd.f32 %v2501, %v2678
      %v2733 = vadd.f32 %v2502, %v2681
      %v2734 = vadd.f32 %v2503, %v2686
      %v2735 = vadd.f32 %v2504, %v2689
      %v2736 = vadd.f32 %v2505, %v2694
      %v2737 = vadd.f32 %v2506, %v2697
      %v2738 = vadd.f32 %v2507, %v2702
      %v2739 = vadd.f32 %v2508, %v2705
      %v2741 = vrot.slane %v279, 5
      %v2742 = vrot.slane %v2741, 4
      %v2743 = vrot.slane %v280, 5
      %v2744 = vsel %vm1247, %v2742, %v2743
      %v2745 = vrot.slane %v2743, 4
      %v2746 = vrot.slane %v281, 5
      %v2747 = vsel %vm1247, %v2745, %v2746
      %v2748 = vld [vmem:[%s1 + $0x10] sm:$0x3]
      %v2749 = vunpack.c.l.b16 %v2744
      %v2750 = vunpack.c.l.b16 %v2747
      %v2751 = vpack.c.b16 %v2750, %v2749
      %v2753 = vsel %vm723, %v2751, 0
      %v2756 = vsel %vm772, %v2748, 0
      %2758 = vmatprep.subr.bf16.mxu0 0
      %2759 = vmatpush1.bf16.msra.mxu0 0
      %2760 = vmatprep.subr.bf16.mxu0 0
      %2761 = vmatpush1.bf16.msra.mxu0 0
      %2762 = vmatprep.subr.bf16.mxu0 0
      %2763 = vmatpush1.bf16.msra.mxu0 0
      %2764 = vmatprep.subr.bf16.mxu0 0
      %2765 = vmatpush1.bf16.msra.mxu0 0
      %2766 = vmatprep.subr.bf16.mxu0 0
      %2767 = vmatpush1.bf16.msra.mxu0 0
      %2768 = vmatprep.subr.bf16.mxu0 0
      %2769 = vmatpush1.bf16.msra.mxu0 0
      %2770 = vmatprep.subr.bf16.mxu0 0
      %2771 = vmatpush1.bf16.msra.mxu0 0
      %2772 = vmatprep.subr.bf16.mxu0 0
      %2773 = vmatpush1.bf16.msra.mxu0 %v2756
      %2774 = vmatprep.subr.bf16.mxu0 0
      %2775 = vmatpush2.bf16.msra.mxu0 0
      %2776 = vmatprep.subr.bf16.mxu0 0
      %2777 = vmatpush2.bf16.msra.mxu0 0
      %2778 = vmatprep.subr.bf16.mxu0 0
      %2779 = vmatpush2.bf16.msra.mxu0 0
      %2780 = vmatprep.subr.bf16.mxu0 0
      %2781 = vmatpush2.bf16.msra.mxu0 0
      %2782 = vmatprep.subr.bf16.mxu0 0
      %2783 = vmatpush2.bf16.msra.mxu0 0
      %2784 = vmatprep.subr.bf16.mxu0 0
      %2785 = vmatpush2.bf16.msra.mxu0 0
      %2786 = vmatprep.subr.bf16.mxu0 0
      %2787 = vmatpush2.bf16.msra.mxu0 0
      %2788 = vmatprep.subr.bf16.mxu0 0
      %2789 = vmatpush2.bf16.msra.mxu0 0
      %2790 = vmatprep.mubr.bf16.mxu0 0
      %2791 = vmatmul.mubr.bf16.gmra.mxu0 %v1416
      %v2792 = vpop.f32.mrf.mxu0
      %v2793 = vadd.f32 0.0, %v2792
      %v2794 = vpop.f32.mrf.mxu0
      %v2795 = vpop.f32.mrf.mxu0
      %v2796 = vadd.f32 0.0, %v2795
      %v2797 = vpop.f32.mrf.mxu0
      %2798 = vmatprep.mubr.bf16.mxu0 0
      %2799 = vmatmul.mubr.bf16.gmra.mxu0 %v1419
      %v2800 = vpop.f32.mrf.mxu0
      %v2801 = vadd.f32 0.0, %v2800
      %v2802 = vpop.f32.mrf.mxu0
      %v2803 = vpop.f32.mrf.mxu0
      %v2804 = vadd.f32 0.0, %v2803
      %v2805 = vpop.f32.mrf.mxu0
      %2806 = vmatprep.mubr.bf16.mxu0 0
      %2807 = vmatmul.mubr.bf16.gmra.mxu0 %v1422
      %v2808 = vpop.f32.mrf.mxu0
      %v2809 = vadd.f32 0.0, %v2808
      %v2810 = vpop.f32.mrf.mxu0
      %v2811 = vpop.f32.mrf.mxu0
      %v2812 = vadd.f32 0.0, %v2811
      %v2813 = vpop.f32.mrf.mxu0
      %2814 = vmatprep.mubr.bf16.mxu0 0
      %2815 = vmatmul.mubr.bf16.gmra.mxu0 %v1425
      %v2816 = vpop.f32.mrf.mxu0
      %v2817 = vadd.f32 0.0, %v2816
      %v2818 = vpop.f32.mrf.mxu0
      %v2819 = vpop.f32.mrf.mxu0
      %v2820 = vadd.f32 0.0, %v2819
      %v2821 = vpop.f32.mrf.mxu0
      %2822 = vmatprep.mubr.bf16.mxu0 0
      %2823 = vmatmul.mubr.bf16.gmra.mxu0 %v1428
      %v2824 = vpop.f32.mrf.mxu0
      %v2825 = vadd.f32 0.0, %v2824
      %v2826 = vpop.f32.mrf.mxu0
      %v2827 = vpop.f32.mrf.mxu0
      %v2828 = vadd.f32 0.0, %v2827
      %v2829 = vpop.f32.mrf.mxu0
      %2830 = vmatprep.mubr.bf16.mxu0 0
      %2831 = vmatmul.mubr.bf16.gmra.mxu0 %v1431
      %v2832 = vpop.f32.mrf.mxu0
      %v2833 = vadd.f32 0.0, %v2832
      %v2834 = vpop.f32.mrf.mxu0
      %v2835 = vpop.f32.mrf.mxu0
      %v2836 = vadd.f32 0.0, %v2835
      %v2837 = vpop.f32.mrf.mxu0
      %2838 = vmatprep.mubr.bf16.mxu0 0
      %2839 = vmatmul.mubr.bf16.gmra.mxu0 %v1434
      %v2840 = vpop.f32.mrf.mxu0
      %v2841 = vadd.f32 0.0, %v2840
      %v2842 = vpop.f32.mrf.mxu0
      %v2843 = vpop.f32.mrf.mxu0
      %v2844 = vadd.f32 0.0, %v2843
      %v2845 = vpop.f32.mrf.mxu0
      %2846 = vmatprep.mubr.bf16.mxu0 0
      %2847 = vmatmul.mubr.bf16.gmra.mxu0 %v1437
      %v2848 = vpop.f32.mrf.mxu0
      %v2849 = vadd.f32 0.0, %v2848
      %v2850 = vpop.f32.mrf.mxu0
      %v2851 = vpop.f32.mrf.mxu0
      %v2852 = vadd.f32 0.0, %v2851
      %v2853 = vpop.f32.mrf.mxu0
      %2854 = vmatprep.mubr.bf16.mxu0 0
      %2855 = vmatmul.mubr.bf16.gmra.mxu0 %v1440
      %v2856 = vpop.f32.mrf.mxu0
      %v2857 = vadd.f32 0.0, %v2856
      %v2858 = vpop.f32.mrf.mxu0
      %v2859 = vpop.f32.mrf.mxu0
      %v2860 = vadd.f32 0.0, %v2859
      %v2861 = vpop.f32.mrf.mxu0
      %2862 = vmatprep.mubr.bf16.mxu0 0
      %2863 = vmatmul.mubr.bf16.gmra.mxu0 %v1443
      %v2864 = vpop.f32.mrf.mxu0
      %v2865 = vadd.f32 0.0, %v2864
      %v2866 = vpop.f32.mrf.mxu0
      %v2867 = vpop.f32.mrf.mxu0
      %v2868 = vadd.f32 0.0, %v2867
      %v2869 = vpop.f32.mrf.mxu0
      %2870 = vmatprep.mubr.bf16.mxu0 0
      %2871 = vmatmul.mubr.bf16.gmra.mxu0 %v1446
      %v2872 = vpop.f32.mrf.mxu0
      %v2873 = vadd.f32 0.0, %v2872
      %v2874 = vpop.f32.mrf.mxu0
      %v2875 = vpop.f32.mrf.mxu0
      %v2876 = vadd.f32 0.0, %v2875
      %v2877 = vpop.f32.mrf.mxu0
      %2878 = vmatprep.mubr.bf16.mxu0 0
      %2879 = vmatmul.mubr.bf16.gmra.mxu0 %v1449
      %v2880 = vpop.f32.mrf.mxu0
      %v2881 = vadd.f32 0.0, %v2880
      %v2882 = vpop.f32.mrf.mxu0
      %v2883 = vpop.f32.mrf.mxu0
      %v2884 = vadd.f32 0.0, %v2883
      %v2885 = vpop.f32.mrf.mxu0
      %2886 = vmatprep.mubr.bf16.mxu0 0
      %2887 = vmatmul.mubr.bf16.gmra.mxu0 %v1452
      %v2888 = vpop.f32.mrf.mxu0
      %v2889 = vadd.f32 0.0, %v2888
      %v2890 = vpop.f32.mrf.mxu0
      %v2891 = vpop.f32.mrf.mxu0
      %v2892 = vadd.f32 0.0, %v2891
      %v2893 = vpop.f32.mrf.mxu0
      %2894 = vmatprep.mubr.bf16.mxu0 0
      %2895 = vmatmul.mubr.bf16.gmra.mxu0 %v1455
      %v2896 = vpop.f32.mrf.mxu0
      %v2897 = vadd.f32 0.0, %v2896
      %v2898 = vpop.f32.mrf.mxu0
      %v2899 = vpop.f32.mrf.mxu0
      %v2900 = vadd.f32 0.0, %v2899
      %v2901 = vpop.f32.mrf.mxu0
      %2902 = vmatprep.mubr.bf16.mxu0 0
      %2903 = vmatmul.mubr.bf16.gmra.mxu0 %v2106
      %v2904 = vpop.f32.mrf.mxu0
      %v2905 = vadd.f32 0.0, %v2904
      %v2906 = vpop.f32.mrf.mxu0
      %v2907 = vpop.f32.mrf.mxu0
      %v2908 = vadd.f32 0.0, %v2907
      %v2909 = vpop.f32.mrf.mxu0
      %2910 = vmatprep.mubr.bf16.mxu0 0
      %2911 = vmatmul.mubr.bf16.gmra.mxu0 %v2753
      %v2912 = vpop.f32.mrf.mxu0
      %v2913 = vadd.f32 0.0, %v2912
      %v2914 = vpop.f32.mrf.mxu0
      %v2915 = vpop.f32.mrf.mxu0
      %v2916 = vadd.f32 0.0, %v2915
      %v2917 = vpop.f32.mrf.mxu0
      %2918 = vdwg.mxu0
      %v2919 = vadd.f32 %v2708, %v2793
      %v2920 = vadd.f32 %v2709, %v2796
      %v2921 = vadd.f32 %v2710, %v2801
      %v2922 = vadd.f32 %v2711, %v2804
      %v2923 = vadd.f32 %v2712, %v2809
      %v2924 = vadd.f32 %v2713, %v2812
      %v2925 = vadd.f32 %v2714, %v2817
      %v2926 = vadd.f32 %v2715, %v2820
      %v2927 = vadd.f32 %v2716, %v2825
      %v2928 = vadd.f32 %v2717, %v2828
      %v2929 = vadd.f32 %v2718, %v2833
      %v2930 = vadd.f32 %v2719, %v2836
      %v2931 = vadd.f32 %v2720, %v2841
      %v2932 = vadd.f32 %v2721, %v2844
      %v2933 = vadd.f32 %v2722, %v2849
      %v2934 = vadd.f32 %v2723, %v2852
      %v2935 = vadd.f32 %v2724, %v2857
      %v2936 = vadd.f32 %v2725, %v2860
      %v2937 = vadd.f32 %v2726, %v2865
      %v2938 = vadd.f32 %v2727, %v2868
      %v2939 = vadd.f32 %v2728, %v2873
      %v2940 = vadd.f32 %v2729, %v2876
      %v2941 = vadd.f32 %v2730, %v2881
      %v2942 = vadd.f32 %v2731, %v2884
      %v2943 = vadd.f32 %v2732, %v2889
      %v2944 = vadd.f32 %v2733, %v2892
      %v2945 = vadd.f32 %v2734, %v2897
      %v2946 = vadd.f32 %v2735, %v2900
      %v2947 = vadd.f32 %v2736, %v2905
      %v2948 = vadd.f32 %v2737, %v2908
      %v2949 = vadd.f32 %v2738, %v2913
      %v2950 = vadd.f32 %v2739, %v2916
      %v2951 = vld [vmem:[%s2] sm:$0x1]
      %v2953 = vlaneseq
      %v2954 = vshrl.u32 %v2953, 7
      %v2955 = vsub.s32 0, %v2954
      %v2956 = vrot.slane %v2951, %v2955
      %v2958 = vmul.f32 %v2919, %v2956
      %v2959 = vmul.f32 %v2920, %v2956
      %v2960 = vmul.f32 %v2921, %v2956
      %v2961 = vmul.f32 %v2922, %v2956
      %v2962 = vmul.f32 %v2923, %v2956
      %v2963 = vmul.f32 %v2924, %v2956
      %v2964 = vmul.f32 %v2925, %v2956
      %v2965 = vmul.f32 %v2926, %v2956
      %v2966 = vmul.f32 %v2927, %v2956
      %v2967 = vmul.f32 %v2928, %v2956
      %v2968 = vmul.f32 %v2929, %v2956
      %v2969 = vmul.f32 %v2930, %v2956
      %v2970 = vmul.f32 %v2931, %v2956
      %v2971 = vmul.f32 %v2932, %v2956
      %v2972 = vmul.f32 %v2933, %v2956
      %v2973 = vmul.f32 %v2934, %v2956
      %v2974 = vmul.f32 %v2935, %v2956
      %v2975 = vmul.f32 %v2936, %v2956
      %v2976 = vmul.f32 %v2937, %v2956
      %v2977 = vmul.f32 %v2938, %v2956
      %v2978 = vmul.f32 %v2939, %v2956
      %v2979 = vmul.f32 %v2940, %v2956
      %v2980 = vmul.f32 %v2941, %v2956
      %v2981 = vmul.f32 %v2942, %v2956
      %v2982 = vmul.f32 %v2943, %v2956
      %v2983 = vmul.f32 %v2944, %v2956
      %v2984 = vmul.f32 %v2945, %v2956
      %v2985 = vmul.f32 %v2946, %v2956
      %v2986 = vmul.f32 %v2947, %v2956
      %v2987 = vmul.f32 %v2948, %v2956
      %v2988 = vmul.f32 %v2949, %v2956
      %v2989 = vmul.f32 %v2950, %v2956
      %v2990 = vld [vmem:[%s3] sm:$0x1]
      %v2992 = vlaneseq
      %v2993 = vshrl.u32 %v2992, 7
      %v2994 = vsub.s32 0, %v2993
      %v2995 = vrot.slane %v2990, %v2994
      %v2997 = vadd.f32 %v2958, %v2995
      %v2998 = vadd.f32 %v2959, %v2995
      %v2999 = vadd.f32 %v2960, %v2995
      %v3000 = vadd.f32 %v2961, %v2995
      %v3001 = vadd.f32 %v2962, %v2995
      %v3002 = vadd.f32 %v2963, %v2995
      %v3003 = vadd.f32 %v2964, %v2995
      %v3004 = vadd.f32 %v2965, %v2995
      %v3005 = vadd.f32 %v2966, %v2995
      %v3006 = vadd.f32 %v2967, %v2995
      %v3007 = vadd.f32 %v2968, %v2995
      %v3008 = vadd.f32 %v2969, %v2995
      %v3009 = vadd.f32 %v2970, %v2995
      %v3010 = vadd.f32 %v2971, %v2995
      %v3011 = vadd.f32 %v2972, %v2995
      %v3012 = vadd.f32 %v2973, %v2995
      %v3013 = vadd.f32 %v2974, %v2995
      %v3014 = vadd.f32 %v2975, %v2995
      %v3015 = vadd.f32 %v2976, %v2995
      %v3016 = vadd.f32 %v2977, %v2995
      %v3017 = vadd.f32 %v2978, %v2995
      %v3018 = vadd.f32 %v2979, %v2995
      %v3019 = vadd.f32 %v2980, %v2995
      %v3020 = vadd.f32 %v2981, %v2995
      %v3021 = vadd.f32 %v2982, %v2995
      %v3022 = vadd.f32 %v2983, %v2995
      %v3023 = vadd.f32 %v2984, %v2995
      %v3024 = vadd.f32 %v2985, %v2995
      %v3025 = vadd.f32 %v2986, %v2995
      %v3026 = vadd.f32 %v2987, %v2995
      %v3027 = vadd.f32 %v2988, %v2995
      %v3028 = vadd.f32 %v2989, %v2995
      %vm3029 = vcmask 64512
      %3030 = vst.msk [vmem:[%s221] sm:$0xff] %vm3029, %v2997
      %3031 = vst.msk [vmem:[%s221 + $0x8] sm:$0xff] %vm3029, %v2998
      %3032 = vst.msk [vmem:[%s221 + $0x10] sm:$0xff] %vm3029, %v2999
      %3033 = vst.msk [vmem:[%s221 + $0x18] sm:$0xff] %vm3029, %v3000
      %3034 = vst.msk [vmem:[%s221 + $0x20] sm:$0xff] %vm3029, %v3001
      %3035 = vst.msk [vmem:[%s221 + $0x28] sm:$0xff] %vm3029, %v3002
      %3036 = vst.msk [vmem:[%s221 + $0x30] sm:$0xff] %vm3029, %v3003
      %3037 = vst.msk [vmem:[%s221 + $0x38] sm:$0xff] %vm3029, %v3004
      %3038 = vst.msk [vmem:[%s221 + $0x40] sm:$0xff] %vm3029, %v3005
      %3039 = vst.msk [vmem:[%s221 + $0x48] sm:$0xff] %vm3029, %v3006
      %3040 = vst.msk [vmem:[%s221 + $0x50] sm:$0xff] %vm3029, %v3007
      %3041 = vst.msk [vmem:[%s221 + $0x58] sm:$0xff] %vm3029, %v3008
      %3042 = vst.msk [vmem:[%s221 + $0x60] sm:$0xff] %vm3029, %v3009
      %3043 = vst.msk [vmem:[%s221 + $0x68] sm:$0xff] %vm3029, %v3010
      %3044 = vst.msk [vmem:[%s221 + $0x70] sm:$0xff] %vm3029, %v3011
      %3045 = vst.msk [vmem:[%s221 + $0x78] sm:$0xff] %vm3029, %v3012
      %3046 = vst.msk [vmem:[%s221 + $0x80] sm:$0xff] %vm3029, %v3013
      %3047 = vst.msk [vmem:[%s221 + $0x88] sm:$0xff] %vm3029, %v3014
      %3048 = vst.msk [vmem:[%s221 + $0x90] sm:$0xff] %vm3029, %v3015
      %3049 = vst.msk [vmem:[%s221 + $0x98] sm:$0xff] %vm3029, %v3016
      %3050 = vst.msk [vmem:[%s221 + $0xa0] sm:$0xff] %vm3029, %v3017
      %3051 = vst.msk [vmem:[%s221 + $0xa8] sm:$0xff] %vm3029, %v3018
      %3052 = vst.msk [vmem:[%s221 + $0xb0] sm:$0xff] %vm3029, %v3019
      %3053 = vst.msk [vmem:[%s221 + $0xb8] sm:$0xff] %vm3029, %v3020
      %3054 = vst.msk [vmem:[%s221 + $0xc0] sm:$0xff] %vm3029, %v3021
      %3055 = vst.msk [vmem:[%s221 + $0xc8] sm:$0xff] %vm3029, %v3022
      %3056 = vst.msk [vmem:[%s221 + $0xd0] sm:$0xff] %vm3029, %v3023
      %3057 = vst.msk [vmem:[%s221 + $0xd8] sm:$0xff] %vm3029, %v3024
      %3058 = vst.msk [vmem:[%s221 + $0xe0] sm:$0xff] %vm3029, %v3025
      %3059 = vst.msk [vmem:[%s221 + $0xe8] sm:$0xff] %vm3029, %v3026
      %3060 = vst.msk [vmem:[%s221 + $0xf0] sm:$0xff] %vm3029, %v3027
      %3061 = vst.msk [vmem:[%s221 + $0xf8] sm:$0xff] %vm3029, %v3028
      %s3062 = smul.u32 16, %s20
      %p3063 = scmp.lt.s32.totalorder %s19, 1
      %s3064 = scalar_select %p3063, %s19, 1
      %p3065 = scmp.lt.s32.totalorder %s3062, 15
      %s3066 = scalar_select %p3065, %s3062, 15
      %s3067 = smul.addr %s3066, 2
      %s3068 = smul.addr %s3064, 32
      %s3069 = sadd.s32 %s3067, %s3068
      %s3070 = smul.addr %s3069, 8
      %s3071 = scalar_lea.vmem %s4, %s3070
      // Predicated region
      $region37: #{conv2d_bn.3} parent=35 // pred_check
        %p3072 = pneg %p136
      $region38: #{conv2d_bn.3} parent=35 // pred_check_branch
        %3074 = sbr.rel (%p3072) target = $region40
      $region39: #{conv2d_bn.3} parent=35 // pred_region
        %s3075 = smul.u32 16, %s20
      $region40: #{conv2d_bn.3} parent=35 // pred_fallthru
        _
    $region36: #{conv2d_bn.3} parent=5 // pred_fallthru
      _
    %p3076 = scmp.le.s32.totalorder 2, %s10
    // Predicated region
    $region41: #{conv2d_bn.3} parent=5 // pred_check
      %p3077 = pneg %p3076
    $region42: #{conv2d_bn.3} parent=5 // pred_check_branch
      %3079 = sbr.rel (%p3077) target = $region44
    $region43: #{conv2d_bn.3} parent=5 // pred_region
      %s3080 = ssub.s32 %s10, 2
      // Predicated region
      $region45: #{conv2d_bn.3} parent=43 // pred_check
        %p3081 = pneg %p142
      $region46: #{conv2d_bn.3} parent=43 // pred_check_branch
        %3083 = sbr.rel (%p3081) target = $region48
      $region47: #{conv2d_bn.3} parent=43 // pred_region
        %s3084 = smul.u32 16, %s22
        %p3085 = scmp.lt.s32.totalorder %s21, 1
        %s3086 = scalar_select %p3085, %s21, 1
        %p3087 = scmp.lt.s32.totalorder %s3084, 15
        %s3088 = scalar_select %p3087, %s3084, 15
        %s3089 = smul.addr %s3088, 2
        %s3090 = smul.addr %s3086, 32
        %s3091 = sadd.s32 %s3089, %s3090
        %s3092 = smul.addr %s3091, 8
        %s3093 = scalar_lea.vmem %s4, %s3092
      $region48: #{conv2d_bn.3} parent=43 // pred_fallthru
        _
    $region44: #{conv2d_bn.3} parent=5 // pred_fallthru
      _
  $region6: #{conv2d_bn.3} parent=0 // loop_footer
    %s14 = sadd.s32 1, %s10
  $region7: #{conv2d_bn.3} parent=0 // loop_footer_branch
    %9 = sbr.rel target = $region3
  $region8: #{conv2d_bn.3} parent=0 // loop_exit
    _

</llo_original>
